<compile_context>
chip_gen: v5e
topology: v5e:2x2
jax: 0.10.0
libtpu: 0.0.40
codegen_flags: <defaults>
</compile_context>

<pallas_src>
import jax
import jax.numpy as jnp
from jax.experimental import pallas as pl
from jax.experimental.pallas import tpu as pltpu

_PREC = jax.lax.Precision.HIGHEST  # explicit: accuracy contract, not defaults


def _sig(x):
    # sigmoid(x) == 0.5 * tanh(x / 2) + 0.5  -> single EUP op + VPU fma.
    return 0.5 * jnp.tanh(0.5 * x) + 0.5


def _round_up(x, m):
    return ((x + m - 1) // m) * m


def _cdiv(a, b):
    return (a + b - 1) // b


def net_kernel(
    acts_ref,      # (4, TB, K): [stu_emb, stu_affect, k_difficulty, kn_emb]
    e_disc_ref,    # (TB, 1)
    wa_ref,        # (2, K, 4): prednet_affect weight split [stu | k] halves
    head_ref,      # (4, 4): rows = ba, wg, ws, [bg, bs, b3, 0]
    w1_ref,        # (K, 512)
    b1_ref,        # (1, 512)
    w2_ref,        # (512, 256)
    b2w3_ref,      # (2, 256): row0 = b2, row1 = w3
    out_ref,       # (TB, 5): col0 = output, cols1..4 = affect
):
    stu_emb = _sig(acts_ref[0])
    stu_aff = _sig(acts_ref[1])
    k_diff = _sig(acts_ref[2])
    kn_emb = acts_ref[3]
    e_disc = _sig(e_disc_ref[...]) * 10.0

    # Affect head: split dot (no lane-axis concat of the two K-wide halves).
    affect = _sig(
        jnp.dot(stu_aff, wa_ref[0], precision=_PREC,
                preferred_element_type=jnp.float32)
        + jnp.dot(k_diff, wa_ref[1], precision=_PREC,
                  preferred_element_type=jnp.float32)
        + head_ref[0:1, :]
    )

    # Prediction net: the two real matmuls go to the MXU.
    x = e_disc * (stu_emb - k_diff) * kn_emb
    x = _sig(jnp.dot(x, w1_ref[...], precision=_PREC,
                     preferred_element_type=jnp.float32) + b1_ref[...])
    x = _sig(jnp.dot(x, w2_ref[...], precision=_PREC,
                     preferred_element_type=jnp.float32) + b2w3_ref[0:1, :])

    # N=1 contractions: VPU multiply + lane reduction (skip the MXU).
    o = _sig(jnp.sum(x * b2w3_ref[1:2, :], axis=-1, keepdims=True)
             + head_ref[3:4, 2:3])
    g = _sig(jnp.sum(affect * head_ref[1:2, :], axis=-1, keepdims=True)
             + head_ref[3:4, 0:1])
    s = _sig(jnp.sum(affect * head_ref[2:3, :], axis=-1, keepdims=True)
             + head_ref[3:4, 1:2])

    out_ref[:, 0:1] = (1.0 - s) * o + g * (1.0 - o)
    out_ref[:, 1:5] = affect


@jax.jit
def net_forward(stu_id, exer_id, kn_emb, params):
    """Runs the Net forward pass. Returns (output [B,1], affect [B,4])."""
    # Embedding gathers (glue, plain JAX).
    # TODO(synk): fuse the gathers via PrefetchScalarGridSpec + per-row DMA to
    # skip the HBM round-trip of the gathered rows if profiling shows the
    # kernel is HBM-bound.
    stu_emb_raw = jnp.take(params["student_emb"], stu_id, axis=0)       # [B,K]
    stu_aff_raw = jnp.take(params["student_affect"], stu_id, axis=0)    # [B,K]
    k_diff_raw = jnp.take(params["k_difficulty"], exer_id, axis=0)      # [B,K]
    e_disc_raw = jnp.take(params["e_discrimination"], exer_id, axis=0)  # [B,1]

    B, K = stu_emb_raw.shape
    L1 = params["w1"].shape[1]
    L2 = params["w2"].shape[1]

    # One (4, B, K) activation slab -> one pipelined input DMA per step
    # instead of four narrow ones.  (XLA fuses the gathers into the stack.)
    acts = jnp.stack(
        [stu_emb_raw, stu_aff_raw, k_diff_raw, kn_emb.astype(jnp.float32)],
        axis=0,
    )

    # Consolidated resident weights (done once per trace).
    wa_pack = jnp.stack([params["wa"][:K, :], params["wa"][K:, :]], axis=0)
    head = jnp.concatenate(
        [
            params["ba"],                                 # row 0: ba   (1,4)
            params["wg"].reshape(1, 4),                   # row 1: wg
            params["ws"].reshape(1, 4),                   # row 2: ws
            jnp.concatenate(
                [params["bg"], params["bs"], params["b3"],
                 jnp.zeros((1, 1), jnp.float32)], axis=1),  # row 3: bg,bs,b3,0
        ],
        axis=0,
    )                                                     # (4, 4)
    b2w3 = jnp.concatenate(
        [params["b2"], params["w3"].reshape(1, L2)], axis=0)  # (2, L2)

    # Batch tile: large enough to amortize grid-step overhead, >= 2 tiles for
    # medium batches so v7x's two TensorCores both get work, <= 1024 so the
    # per-tile working set (~10 MiB) fits the raised VMEM limit everywhere.
    TB = max(8, min(1024, _round_up(_cdiv(B, 2), 8)))
    grid = (_cdiv(B, TB),)   # ragged last block: no wrapper-side padding copy

    packed = pl.pallas_call(
        net_kernel,
        grid=grid,
        out_shape=jax.ShapeDtypeStruct((B, 5), jnp.float32),
        in_specs=[
            pl.BlockSpec((4, TB, K), lambda i: (0, i, 0)),   # activations
            pl.BlockSpec((TB, 1), lambda i: (i, 0)),         # e_discrimination
            pl.BlockSpec((2, K, 4), lambda i: (0, 0, 0)),    # wa (split)
            pl.BlockSpec((4, 4), lambda i: (0, 0)),          # head params
            pl.BlockSpec((K, L1), lambda i: (0, 0)),         # w1
            pl.BlockSpec((1, L1), lambda i: (0, 0)),         # b1
            pl.BlockSpec((L1, L2), lambda i: (0, 0)),        # w2
            pl.BlockSpec((2, L2), lambda i: (0, 0)),         # b2 | w3
        ],
        out_specs=pl.BlockSpec((TB, 5), lambda i: (i, 0)),
        compiler_params=pltpu.CompilerParams(
            dimension_semantics=("parallel",),
            vmem_limit_bytes=32 * 1024 * 1024,
        ),
    )(acts, e_disc_raw, wa_pack, head,
      params["w1"], params["b1"], params["w2"], b2w3)

    return packed[:, 0:1], packed[:, 1:5]


def xavier_normal(key, fan_in, fan_out, shape):
    std = jnp.sqrt(2.0 / (fan_in + fan_out))
    return std * jax.random.normal(key, shape, dtype=jnp.float32)


def init_params(key, student_n, exer_n, knowledge_n):
    K = knowledge_n
    len1, len2 = 512, 256
    keys = jax.random.split(key, 10)
    params = {
        # Embedding tables (PyTorch names them `.weight`, so they also get
        # xavier_normal_ in the reference module).
        "student_emb": xavier_normal(keys[0], K, student_n, (student_n, K)),
        "student_affect": xavier_normal(keys[1], K, student_n, (student_n, K)),
        "k_difficulty": xavier_normal(keys[2], K, exer_n, (exer_n, K)),
        "e_discrimination": xavier_normal(keys[3], 1, exer_n, (exer_n, 1)),
        # Linear layers, stored as [in, out] (transposed vs PyTorch [out, in]).
        "wa": xavier_normal(keys[4], 2 * K, 4, (2 * K, 4)),
        "ba": jnp.zeros((1, 4), jnp.float32),
        "wg": xavier_normal(keys[5], 4, 1, (4, 1)),
        "bg": jnp.zeros((1, 1), jnp.float32),
        "ws": xavier_normal(keys[6], 4, 1, (4, 1)),
        "bs": jnp.zeros((1, 1), jnp.float32),
        "w1": xavier_normal(keys[7], K, len1, (K, len1)),
        "b1": jnp.zeros((1, len1), jnp.float32),
        "w2": xavier_normal(keys[8], len1, len2, (len1, len2)),
        "b2": jnp.zeros((1, len2), jnp.float32),
        "w3": xavier_normal(keys[9], len2, 1, (len2, 1)),
        "b3": jnp.zeros((1, 1), jnp.float32),
    }
    return params


def reference_forward(stu_id, exer_id, kn_emb, p):
    """Pure-JAX reference mirroring the PyTorch forward exactly."""
    hp = jax.lax.Precision.HIGHEST
    stu_emb = jax.nn.sigmoid(jnp.take(p["student_emb"], stu_id, axis=0))
    stu_aff = jax.nn.sigmoid(jnp.take(p["student_affect"], stu_id, axis=0))
    k_diff = jax.nn.sigmoid(jnp.take(p["k_difficulty"], exer_id, axis=0))
    affect = jax.nn.sigmoid(
        jnp.dot(jnp.concatenate([stu_aff, k_diff], axis=1), p["wa"],
                precision=hp) + p["ba"])
    e_disc = jax.nn.sigmoid(jnp.take(p["e_discrimination"], exer_id, axis=0)) * 10.0
    x = e_disc * (stu_emb - k_diff) * kn_emb
    x = jax.nn.sigmoid(jnp.dot(x, p["w1"], precision=hp) + p["b1"])
    x = jax.nn.sigmoid(jnp.dot(x, p["w2"], precision=hp) + p["b2"])
    o = jax.nn.sigmoid(jnp.dot(x, p["w3"], precision=hp) + p["b3"])
    g = jax.nn.sigmoid(jnp.dot(affect, p["wg"], precision=hp) + p["bg"])
    s = jax.nn.sigmoid(jnp.dot(affect, p["ws"], precision=hp) + p["bs"])
    return (1.0 - s) * o + g * (1.0 - o), affect


def _check(batch, params, student_n, exer_n, knowledge_n, seed):
    key = jax.random.PRNGKey(seed)
    k_stu, k_exer, k_kn = jax.random.split(key, 3)
    stu_id = jax.random.randint(k_stu, (batch,), 0, student_n, dtype=jnp.int32)
    exer_id = jax.random.randint(k_exer, (batch,), 0, exer_n, dtype=jnp.int32)
    kn_emb = jax.random.bernoulli(k_kn, 0.5, (batch, knowledge_n)).astype(jnp.float32)

    out, affect = net_forward(stu_id, exer_id, kn_emb, params)
    jax.block_until_ready((out, affect))

    out_ref, affect_ref = reference_forward(stu_id, exer_id, kn_emb, params)
    assert out.shape == (batch, 1) and affect.shape == (batch, 4)
    assert jnp.allclose(out, out_ref, atol=1e-5, rtol=1e-5)
    assert jnp.allclose(affect, affect_ref, atol=1e-5, rtol=1e-5)


if __name__ == "__main__":
    student_n, exer_n, knowledge_n = 20, 15, 32

    params = init_params(jax.random.PRNGKey(0), student_n, exer_n, knowledge_n)

    # Small batch (TB=8, single tile).
    _check(8, params, student_n, exer_n, knowledge_n, seed=1)
    # Medium batch: 2 parallel tiles (TB=152), ragged last block (no padding).
    _check(300, params, student_n, exer_n, knowledge_n, seed=2)
    # Larger batch: TB=504, 2 tiles, ragged last block.
    _check(1000, params, student_n, exer_n, knowledge_n, seed=3)

    print("KERNEL_OK")
</pallas_src>

<mosaic_0001>
module attributes {stable_mosaic.version = 11 : i64} {
  func.func @net_kernel(%arg0: i32, %arg1: memref<4x8x32xf32, #tpu.memory_space<vmem>>, %arg2: memref<8x1xf32, #tpu.memory_space<vmem>>, %arg3: memref<2x32x4xf32, #tpu.memory_space<vmem>>, %arg4: memref<4x4xf32, #tpu.memory_space<vmem>>, %arg5: memref<32x512xf32, #tpu.memory_space<vmem>>, %arg6: memref<1x512xf32, #tpu.memory_space<vmem>>, %arg7: memref<512x256xf32, #tpu.memory_space<vmem>>, %arg8: memref<2x256xf32, #tpu.memory_space<vmem>>, %arg9: memref<8x5xf32, #tpu.memory_space<vmem>>) attributes {dimension_semantics = [#tpu.dimension_semantics<parallel>], iteration_bounds = array<i64: 1>, scalar_prefetch = 0 : i64, scratch_operands = 0 : i64, tpu.core_type = #tpu.core_type<tc>, window_params = [{transform_indices = @transform_0, window_bounds = array<i64: 4, 8, 32>}, {transform_indices = @transform_1, window_bounds = array<i64: 8, 1>}, {pipeline_mode = #tpu.pipeline_mode<synchronous>, transform_indices = @transform_2, window_bounds = array<i64: 2, 32, 4>}, {pipeline_mode = #tpu.pipeline_mode<synchronous>, transform_indices = @transform_3, window_bounds = array<i64: 4, 4>}, {pipeline_mode = #tpu.pipeline_mode<synchronous>, transform_indices = @transform_4, window_bounds = array<i64: 32, 512>}, {pipeline_mode = #tpu.pipeline_mode<synchronous>, transform_indices = @transform_5, window_bounds = array<i64: 1, 512>}, {pipeline_mode = #tpu.pipeline_mode<synchronous>, transform_indices = @transform_6, window_bounds = array<i64: 512, 256>}, {pipeline_mode = #tpu.pipeline_mode<synchronous>, transform_indices = @transform_7, window_bounds = array<i64: 2, 256>}, {transform_indices = @transform_8, window_bounds = array<i64: 8, 5>}]} {
    %c0 = arith.constant 0 : index
    %c0_0 = arith.constant 0 : index
    %c0_1 = arith.constant 0 : index
    %0 = vector.load %arg1[%c0, %c0_0, %c0_1] : memref<4x8x32xf32, #tpu.memory_space<vmem>>, vector<1x8x32xf32>
    %1 = vector.shape_cast %0 : vector<1x8x32xf32> to vector<8x32xf32>
    %cst = arith.constant 5.000000e-01 : f32
    %2 = vector.broadcast %cst : f32 to vector<8x32xf32>
    %3 = arith.mulf %2, %1 : vector<8x32xf32>
    %4 = math.tanh %3 : vector<8x32xf32>
    %cst_2 = arith.constant 5.000000e-01 : f32
    %5 = vector.broadcast %cst_2 : f32 to vector<8x32xf32>
    %6 = arith.mulf %5, %4 : vector<8x32xf32>
    %cst_3 = arith.constant 5.000000e-01 : f32
    %7 = vector.broadcast %cst_3 : f32 to vector<8x32xf32>
    %8 = arith.addf %6, %7 : vector<8x32xf32>
    %c1 = arith.constant 1 : index
    %c0_4 = arith.constant 0 : index
    %c0_5 = arith.constant 0 : index
    %9 = vector.load %arg1[%c1, %c0_4, %c0_5] : memref<4x8x32xf32, #tpu.memory_space<vmem>>, vector<1x8x32xf32>
    %10 = vector.shape_cast %9 : vector<1x8x32xf32> to vector<8x32xf32>
    %cst_6 = arith.constant 5.000000e-01 : f32
    %11 = vector.broadcast %cst_6 : f32 to vector<8x32xf32>
    %12 = arith.mulf %11, %10 : vector<8x32xf32>
    %13 = math.tanh %12 : vector<8x32xf32>
    %cst_7 = arith.constant 5.000000e-01 : f32
    %14 = vector.broadcast %cst_7 : f32 to vector<8x32xf32>
    %15 = arith.mulf %14, %13 : vector<8x32xf32>
    %cst_8 = arith.constant 5.000000e-01 : f32
    %16 = vector.broadcast %cst_8 : f32 to vector<8x32xf32>
    %17 = arith.addf %15, %16 : vector<8x32xf32>
    %c2 = arith.constant 2 : index
    %c0_9 = arith.constant 0 : index
    %c0_10 = arith.constant 0 : index
    %18 = vector.load %arg1[%c2, %c0_9, %c0_10] : memref<4x8x32xf32, #tpu.memory_space<vmem>>, vector<1x8x32xf32>
    %19 = vector.shape_cast %18 : vector<1x8x32xf32> to vector<8x32xf32>
    %cst_11 = arith.constant 5.000000e-01 : f32
    %20 = vector.broadcast %cst_11 : f32 to vector<8x32xf32>
    %21 = arith.mulf %20, %19 : vector<8x32xf32>
    %22 = math.tanh %21 : vector<8x32xf32>
    %cst_12 = arith.constant 5.000000e-01 : f32
    %23 = vector.broadcast %cst_12 : f32 to vector<8x32xf32>
    %24 = arith.mulf %23, %22 : vector<8x32xf32>
    %cst_13 = arith.constant 5.000000e-01 : f32
    %25 = vector.broadcast %cst_13 : f32 to vector<8x32xf32>
    %26 = arith.addf %24, %25 : vector<8x32xf32>
    %c3 = arith.constant 3 : index
    %c0_14 = arith.constant 0 : index
    %c0_15 = arith.constant 0 : index
    %27 = vector.load %arg1[%c3, %c0_14, %c0_15] : memref<4x8x32xf32, #tpu.memory_space<vmem>>, vector<1x8x32xf32>
    %28 = vector.shape_cast %27 : vector<1x8x32xf32> to vector<8x32xf32>
    %c0_16 = arith.constant 0 : index
    %c0_17 = arith.constant 0 : index
    %29 = vector.load %arg2[%c0_16, %c0_17] : memref<8x1xf32, #tpu.memory_space<vmem>>, vector<8x1xf32>
    %cst_18 = arith.constant 5.000000e-01 : f32
    %30 = vector.broadcast %cst_18 : f32 to vector<8x1xf32>
    %31 = arith.mulf %30, %29 : vector<8x1xf32>
    %32 = math.tanh %31 : vector<8x1xf32>
    %cst_19 = arith.constant 5.000000e-01 : f32
    %33 = vector.broadcast %cst_19 : f32 to vector<8x1xf32>
    %34 = arith.mulf %33, %32 : vector<8x1xf32>
    %cst_20 = arith.constant 5.000000e-01 : f32
    %35 = vector.broadcast %cst_20 : f32 to vector<8x1xf32>
    %36 = arith.addf %34, %35 : vector<8x1xf32>
    %cst_21 = arith.constant 1.000000e+01 : f32
    %37 = vector.broadcast %cst_21 : f32 to vector<8x1xf32>
    %38 = arith.mulf %36, %37 : vector<8x1xf32>
    %c0_22 = arith.constant 0 : index
    %c0_23 = arith.constant 0 : index
    %c0_24 = arith.constant 0 : index
    %39 = vector.load %arg3[%c0_22, %c0_23, %c0_24] : memref<2x32x4xf32, #tpu.memory_space<vmem>>, vector<1x32x4xf32>
    %40 = vector.shape_cast %39 : vector<1x32x4xf32> to vector<32x4xf32>
    %cst_25 = arith.constant dense<0.000000e+00> : vector<8x4xf32>
    %41 = tpu.matmul %17, %40, %cst_25 {dimension_numbers = #tpu.dot_dimension_numbers<[1], [0], [0], [1], [0, 0, 1, 1], [], []>, precision = #tpu.contract_precision<fp32>} : vector<8x32xf32>, vector<32x4xf32>, vector<8x4xf32> -> vector<8x4xf32>
    %c1_26 = arith.constant 1 : index
    %c0_27 = arith.constant 0 : index
    %c0_28 = arith.constant 0 : index
    %42 = vector.load %arg3[%c1_26, %c0_27, %c0_28] : memref<2x32x4xf32, #tpu.memory_space<vmem>>, vector<1x32x4xf32>
    %43 = vector.shape_cast %42 : vector<1x32x4xf32> to vector<32x4xf32>
    %cst_29 = arith.constant dense<0.000000e+00> : vector<8x4xf32>
    %44 = tpu.matmul %26, %43, %cst_29 {dimension_numbers = #tpu.dot_dimension_numbers<[1], [0], [0], [1], [0, 0, 1, 1], [], []>, precision = #tpu.contract_precision<fp32>} : vector<8x32xf32>, vector<32x4xf32>, vector<8x4xf32> -> vector<8x4xf32>
    %45 = arith.addf %41, %44 : vector<8x4xf32>
    %c0_30 = arith.constant 0 : index
    %c0_31 = arith.constant 0 : index
    %46 = vector.load %arg4[%c0_30, %c0_31] : memref<4x4xf32, #tpu.memory_space<vmem>>, vector<1x4xf32>
    %47 = vector.broadcast %46 : vector<1x4xf32> to vector<8x4xf32>
    %48 = arith.addf %45, %47 : vector<8x4xf32>
    %cst_32 = arith.constant 5.000000e-01 : f32
    %49 = vector.broadcast %cst_32 : f32 to vector<8x4xf32>
    %50 = arith.mulf %49, %48 : vector<8x4xf32>
    %51 = math.tanh %50 : vector<8x4xf32>
    %cst_33 = arith.constant 5.000000e-01 : f32
    %52 = vector.broadcast %cst_33 : f32 to vector<8x4xf32>
    %53 = arith.mulf %52, %51 : vector<8x4xf32>
    %cst_34 = arith.constant 5.000000e-01 : f32
    %54 = vector.broadcast %cst_34 : f32 to vector<8x4xf32>
    %55 = arith.addf %53, %54 : vector<8x4xf32>
    %56 = arith.subf %8, %26 : vector<8x32xf32>
    %57 = vector.broadcast %38 : vector<8x1xf32> to vector<8x32xf32>
    %58 = arith.mulf %57, %56 : vector<8x32xf32>
    %59 = arith.mulf %58, %28 : vector<8x32xf32>
    %c0_35 = arith.constant 0 : index
    %c0_36 = arith.constant 0 : index
    %60 = vector.load %arg5[%c0_35, %c0_36] : memref<32x512xf32, #tpu.memory_space<vmem>>, vector<32x512xf32>
    %cst_37 = arith.constant dense<0.000000e+00> : vector<8x512xf32>
    %61 = tpu.matmul %59, %60, %cst_37 {dimension_numbers = #tpu.dot_dimension_numbers<[1], [0], [0], [1], [0, 0, 1, 1], [], []>, precision = #tpu.contract_precision<fp32>} : vector<8x32xf32>, vector<32x512xf32>, vector<8x512xf32> -> vector<8x512xf32>
    %c0_38 = arith.constant 0 : index
    %c0_39 = arith.constant 0 : index
    %62 = vector.load %arg6[%c0_38, %c0_39] : memref<1x512xf32, #tpu.memory_space<vmem>>, vector<1x512xf32>
    %63 = vector.broadcast %62 : vector<1x512xf32> to vector<8x512xf32>
    %64 = arith.addf %61, %63 : vector<8x512xf32>
    %cst_40 = arith.constant 5.000000e-01 : f32
    %65 = vector.broadcast %cst_40 : f32 to vector<8x512xf32>
    %66 = arith.mulf %65, %64 : vector<8x512xf32>
    %67 = math.tanh %66 : vector<8x512xf32>
    %cst_41 = arith.constant 5.000000e-01 : f32
    %68 = vector.broadcast %cst_41 : f32 to vector<8x512xf32>
    %69 = arith.mulf %68, %67 : vector<8x512xf32>
    %cst_42 = arith.constant 5.000000e-01 : f32
    %70 = vector.broadcast %cst_42 : f32 to vector<8x512xf32>
    %71 = arith.addf %69, %70 : vector<8x512xf32>
    %c0_43 = arith.constant 0 : index
    %c0_44 = arith.constant 0 : index
    %72 = vector.load %arg7[%c0_43, %c0_44] : memref<512x256xf32, #tpu.memory_space<vmem>>, vector<512x256xf32>
    %cst_45 = arith.constant dense<0.000000e+00> : vector<8x256xf32>
    %73 = tpu.matmul %71, %72, %cst_45 {dimension_numbers = #tpu.dot_dimension_numbers<[1], [0], [0], [1], [0, 0, 1, 1], [], []>, precision = #tpu.contract_precision<fp32>} : vector<8x512xf32>, vector<512x256xf32>, vector<8x256xf32> -> vector<8x256xf32>
    %c0_46 = arith.constant 0 : index
    %c0_47 = arith.constant 0 : index
    %74 = vector.load %arg8[%c0_46, %c0_47] : memref<2x256xf32, #tpu.memory_space<vmem>>, vector<1x256xf32>
    %75 = vector.broadcast %74 : vector<1x256xf32> to vector<8x256xf32>
    %76 = arith.addf %73, %75 : vector<8x256xf32>
    %cst_48 = arith.constant 5.000000e-01 : f32
    %77 = vector.broadcast %cst_48 : f32 to vector<8x256xf32>
    %78 = arith.mulf %77, %76 : vector<8x256xf32>
    %79 = math.tanh %78 : vector<8x256xf32>
    %cst_49 = arith.constant 5.000000e-01 : f32
    %80 = vector.broadcast %cst_49 : f32 to vector<8x256xf32>
    %81 = arith.mulf %80, %79 : vector<8x256xf32>
    %cst_50 = arith.constant 5.000000e-01 : f32
    %82 = vector.broadcast %cst_50 : f32 to vector<8x256xf32>
    %83 = arith.addf %81, %82 : vector<8x256xf32>
    %c1_51 = arith.constant 1 : index
    %c0_52 = arith.constant 0 : index
    %84 = vector.load %arg8[%c1_51, %c0_52] : memref<2x256xf32, #tpu.memory_space<vmem>>, vector<1x256xf32>
    %85 = vector.broadcast %84 : vector<1x256xf32> to vector<8x256xf32>
    %86 = arith.mulf %83, %85 : vector<8x256xf32>
    %cst_53 = arith.constant dense<0.000000e+00> : vector<8xf32>
    %87 = vector.multi_reduction <add>, %86, %cst_53 [1] : vector<8x256xf32> to vector<8xf32>
    %88 = vector.shape_cast %87 : vector<8xf32> to vector<8x1xf32>
    %c3_54 = arith.constant 3 : index
    %c2_55 = arith.constant 2 : index
    %89 = vector.load %arg4[%c3_54, %c2_55] : memref<4x4xf32, #tpu.memory_space<vmem>>, vector<1x1xf32>
    %90 = vector.broadcast %89 : vector<1x1xf32> to vector<8x1xf32>
    %91 = arith.addf %88, %90 : vector<8x1xf32>
    %cst_56 = arith.constant 5.000000e-01 : f32
    %92 = vector.broadcast %cst_56 : f32 to vector<8x1xf32>
    %93 = arith.mulf %92, %91 : vector<8x1xf32>
    %94 = math.tanh %93 : vector<8x1xf32>
    %cst_57 = arith.constant 5.000000e-01 : f32
    %95 = vector.broadcast %cst_57 : f32 to vector<8x1xf32>
    %96 = arith.mulf %95, %94 : vector<8x1xf32>
    %cst_58 = arith.constant 5.000000e-01 : f32
    %97 = vector.broadcast %cst_58 : f32 to vector<8x1xf32>
    %98 = arith.addf %96, %97 : vector<8x1xf32>
    %c1_59 = arith.constant 1 : index
    %c0_60 = arith.constant 0 : index
    %99 = vector.load %arg4[%c1_59, %c0_60] : memref<4x4xf32, #tpu.memory_space<vmem>>, vector<1x4xf32>
    %100 = vector.broadcast %99 : vector<1x4xf32> to vector<8x4xf32>
    %101 = arith.mulf %55, %100 : vector<8x4xf32>
    %cst_61 = arith.constant dense<0.000000e+00> : vector<8xf32>
    %102 = vector.multi_reduction <add>, %101, %cst_61 [1] : vector<8x4xf32> to vector<8xf32>
    %103 = vector.shape_cast %102 : vector<8xf32> to vector<8x1xf32>
    %c3_62 = arith.constant 3 : index
    %c0_63 = arith.constant 0 : index
    %104 = vector.load %arg4[%c3_62, %c0_63] : memref<4x4xf32, #tpu.memory_space<vmem>>, vector<1x1xf32>
    %105 = vector.broadcast %104 : vector<1x1xf32> to vector<8x1xf32>
    %106 = arith.addf %103, %105 : vector<8x1xf32>
    %cst_64 = arith.constant 5.000000e-01 : f32
    %107 = vector.broadcast %cst_64 : f32 to vector<8x1xf32>
    %108 = arith.mulf %107, %106 : vector<8x1xf32>
    %109 = math.tanh %108 : vector<8x1xf32>
    %cst_65 = arith.constant 5.000000e-01 : f32
    %110 = vector.broadcast %cst_65 : f32 to vector<8x1xf32>
    %111 = arith.mulf %110, %109 : vector<8x1xf32>
    %cst_66 = arith.constant 5.000000e-01 : f32
    %112 = vector.broadcast %cst_66 : f32 to vector<8x1xf32>
    %113 = arith.addf %111, %112 : vector<8x1xf32>
    %c2_67 = arith.constant 2 : index
    %c0_68 = arith.constant 0 : index
    %114 = vector.load %arg4[%c2_67, %c0_68] : memref<4x4xf32, #tpu.memory_space<vmem>>, vector<1x4xf32>
    %115 = vector.broadcast %114 : vector<1x4xf32> to vector<8x4xf32>
    %116 = arith.mulf %55, %115 : vector<8x4xf32>
    %cst_69 = arith.constant dense<0.000000e+00> : vector<8xf32>
    %117 = vector.multi_reduction <add>, %116, %cst_69 [1] : vector<8x4xf32> to vector<8xf32>
    %118 = vector.shape_cast %117 : vector<8xf32> to vector<8x1xf32>
    %c3_70 = arith.constant 3 : index
    %c1_71 = arith.constant 1 : index
    %119 = vector.load %arg4[%c3_70, %c1_71] : memref<4x4xf32, #tpu.memory_space<vmem>>, vector<1x1xf32>
    %120 = vector.broadcast %119 : vector<1x1xf32> to vector<8x1xf32>
    %121 = arith.addf %118, %120 : vector<8x1xf32>
    %cst_72 = arith.constant 5.000000e-01 : f32
    %122 = vector.broadcast %cst_72 : f32 to vector<8x1xf32>
    %123 = arith.mulf %122, %121 : vector<8x1xf32>
    %124 = math.tanh %123 : vector<8x1xf32>
    %cst_73 = arith.constant 5.000000e-01 : f32
    %125 = vector.broadcast %cst_73 : f32 to vector<8x1xf32>
    %126 = arith.mulf %125, %124 : vector<8x1xf32>
    %cst_74 = arith.constant 5.000000e-01 : f32
    %127 = vector.broadcast %cst_74 : f32 to vector<8x1xf32>
    %128 = arith.addf %126, %127 : vector<8x1xf32>
    %cst_75 = arith.constant 1.000000e+00 : f32
    %129 = vector.broadcast %cst_75 : f32 to vector<8x1xf32>
    %130 = arith.subf %129, %128 : vector<8x1xf32>
    %131 = arith.mulf %130, %98 : vector<8x1xf32>
    %cst_76 = arith.constant 1.000000e+00 : f32
    %132 = vector.broadcast %cst_76 : f32 to vector<8x1xf32>
    %133 = arith.subf %132, %98 : vector<8x1xf32>
    %134 = arith.mulf %113, %133 : vector<8x1xf32>
    %135 = arith.addf %131, %134 : vector<8x1xf32>
    %c0_77 = arith.constant 0 : index
    %c0_78 = arith.constant 0 : index
    %136 = vector.load %arg9[%c0_77, %c0_78] : memref<8x5xf32, #tpu.memory_space<vmem>>, vector<8x1xf32>
    tpu.vector_store %arg9[%c0_77, %c0_78], %135 {strides = array<i32>} : memref<8x5xf32, #tpu.memory_space<vmem>>, vector<8x1xf32>,
    %c0_79 = arith.constant 0 : index
    %c1_80 = arith.constant 1 : index
    %137 = vector.load %arg9[%c0_79, %c1_80] : memref<8x5xf32, #tpu.memory_space<vmem>>, vector<8x4xf32>
    tpu.vector_store %arg9[%c0_79, %c1_80], %55 {strides = array<i32>} : memref<8x5xf32, #tpu.memory_space<vmem>>, vector<8x4xf32>,
    return
  }
  func.func @transform_0(%arg0: i32) -> (i32, i32, i32) {
    %c0_i32 = arith.constant 0 : i32
    %c0_i32_0 = arith.constant 0 : i32
    %c0_i32_1 = arith.constant 0 : i32
    return %c0_i32, %arg0, %c0_i32_0 : i32, i32, i32
  }
  func.func @transform_1(%arg0: i32) -> (i32, i32) {
    %c0_i32 = arith.constant 0 : i32
    %c0_i32_0 = arith.constant 0 : i32
    return %arg0, %c0_i32 : i32, i32
  }
  func.func @transform_2(%arg0: i32) -> (i32, i32, i32) {
    %c0_i32 = arith.constant 0 : i32
    %c0_i32_0 = arith.constant 0 : i32
    %c0_i32_1 = arith.constant 0 : i32
    %c0_i32_2 = arith.constant 0 : i32
    return %c0_i32, %c0_i32_0, %c0_i32_1 : i32, i32, i32
  }
  func.func @transform_3(%arg0: i32) -> (i32, i32) {
    %c0_i32 = arith.constant 0 : i32
    %c0_i32_0 = arith.constant 0 : i32
    %c0_i32_1 = arith.constant 0 : i32
    return %c0_i32, %c0_i32_0 : i32, i32
  }
  func.func @transform_4(%arg0: i32) -> (i32, i32) {
    %c0_i32 = arith.constant 0 : i32
    %c0_i32_0 = arith.constant 0 : i32
    %c0_i32_1 = arith.constant 0 : i32
    return %c0_i32, %c0_i32_0 : i32, i32
  }
  func.func @transform_5(%arg0: i32) -> (i32, i32) {
    %c0_i32 = arith.constant 0 : i32
    %c0_i32_0 = arith.constant 0 : i32
    %c0_i32_1 = arith.constant 0 : i32
    return %c0_i32, %c0_i32_0 : i32, i32
  }
  func.func @transform_6(%arg0: i32) -> (i32, i32) {
    %c0_i32 = arith.constant 0 : i32
    %c0_i32_0 = arith.constant 0 : i32
    %c0_i32_1 = arith.constant 0 : i32
    return %c0_i32, %c0_i32_0 : i32, i32
  }
  func.func @transform_7(%arg0: i32) -> (i32, i32) {
    %c0_i32 = arith.constant 0 : i32
    %c0_i32_0 = arith.constant 0 : i32
    %c0_i32_1 = arith.constant 0 : i32
    return %c0_i32, %c0_i32_0 : i32, i32
  }
  func.func @transform_8(%arg0: i32) -> (i32, i32) {
    %c0_i32 = arith.constant 0 : i32
    %c0_i32_0 = arith.constant 0 : i32
    return %arg0, %c0_i32 : i32, i32
  }
}

</mosaic_0001>

<llo_original>
// kernel: net_forward.1
$region0: #{net_forward.1}
  #allocation0 [shape = 'u32[]', space=smem, size = 0x4, offset = 0x4, fixed_abs, tag = 'smem constant byte address 0x4 - core index']
  #allocation1 [shape = 'u32[72,128]{1,0:T(1,128)}', space=vmem, size = 0x9000, scoped, tag = 'internal scratch']
  %s0 = inlined_call_operand.vmem [shape: f32[4,8,32], index: 0, kind: input, shape index: {}]
  %s1 = inlined_call_operand.vmem [shape: f32[8,1], index: 1, kind: input, shape index: {}]
  %s2 = inlined_call_operand.vmem [shape: f32[2,32,4], index: 2, kind: input, shape index: {}]
  %s3 = inlined_call_operand.vmem [shape: f32[4,4], index: 3, kind: input, shape index: {}]
  %s4 = inlined_call_operand.vmem [shape: f32[32,512], index: 4, kind: input, shape index: {}]
  %s5 = inlined_call_operand.vmem [shape: f32[1,512], index: 5, kind: input, shape index: {}]
  %s6 = inlined_call_operand.vmem [shape: f32[512,256], index: 6, kind: input, shape index: {}]
  %s7 = inlined_call_operand.vmem [shape: f32[2,256], index: 7, kind: input, shape index: {}]
  %s8 = inlined_call_operand.vmem [shape: f32[8,5], index: 8, kind: output, shape index: {}]
  %s9 = sld [smem:[#allocation0]]
  $region42: #{net_forward.1} parent=0
    _
  %s11 = ssub.s32 1, %s9
  %s12 = scalar_select 0, %s11, %s9
  // Predicated region
  $region2: #{net_forward.1} parent=0 // pred_check
    _
  $region3: #{net_forward.1} parent=0 // pred_check_branch
    %14 = sbr.rel (0) target = $region5
  $region4: #{net_forward.1} parent=0 // pred_region
    _
  $region5: #{net_forward.1} parent=0 // pred_fallthru
    _
  // Predicated region
  $region6: #{net_forward.1} parent=0 // pred_check
    _
  $region7: #{net_forward.1} parent=0 // pred_check_branch
    %16 = sbr.rel (0) target = $region9
  $region8: #{net_forward.1} parent=0 // pred_region
    _
  $region9: #{net_forward.1} parent=0 // pred_fallthru
    _
  // Predicated region
  $region10: #{net_forward.1} parent=0 // pred_check
    _
  $region11: #{net_forward.1} parent=0 // pred_check_branch
    %18 = sbr.rel (0) target = $region13
  $region12: #{net_forward.1} parent=0 // pred_region
    _
  $region13: #{net_forward.1} parent=0 // pred_fallthru
    _
  // Predicated region
  $region14: #{net_forward.1} parent=0 // pred_check
    _
  $region15: #{net_forward.1} parent=0 // pred_check_branch
    %20 = sbr.rel (0) target = $region17
  $region16: #{net_forward.1} parent=0 // pred_region
    _
  $region17: #{net_forward.1} parent=0 // pred_fallthru
    _
  // Predicated region
  $region18: #{net_forward.1} parent=0 // pred_check
    _
  $region19: #{net_forward.1} parent=0 // pred_check_branch
    %22 = sbr.rel (0) target = $region21
  $region20: #{net_forward.1} parent=0 // pred_region
    _
  $region21: #{net_forward.1} parent=0 // pred_fallthru
    _
  // Predicated region
  $region22: #{net_forward.1} parent=0 // pred_check
    _
  $region23: #{net_forward.1} parent=0 // pred_check_branch
    %24 = sbr.rel (0) target = $region25
  $region24: #{net_forward.1} parent=0 // pred_region
    _
  $region25: #{net_forward.1} parent=0 // pred_fallthru
    _
  // Predicated region
  $region26: #{net_forward.1} parent=0 // pred_check
    _
  $region27: #{net_forward.1} parent=0 // pred_check_branch
    %26 = sbr.rel (0) target = $region29
  $region28: #{net_forward.1} parent=0 // pred_region
    _
  $region29: #{net_forward.1} parent=0 // pred_fallthru
    _
  // Predicated region
  $region30: #{net_forward.1} parent=0 // pred_check
    _
  $region31: #{net_forward.1} parent=0 // pred_check_branch
    %28 = sbr.rel (0) target = $region33
  $region32: #{net_forward.1} parent=0 // pred_region
    _
  $region33: #{net_forward.1} parent=0 // pred_fallthru
    _
  %v29 = vld [vmem:[%s0] sm:$0xff]
  %v30 = vmul.f32 %v29, 0.5
  %v31 = vtanh.pop %v30
  %v32 = vmul.f32 %v31, 0.5
  %v33 = vadd.f32 %v32, 0.5
  %s34 = scalar_lea.vmem %s0, 8
  %v35 = vld [vmem:[%s34] sm:$0xff]
  %v36 = vmul.f32 %v35, 0.5
  %v37 = vtanh.pop %v36
  %v38 = vmul.f32 %v37, 0.5
  %v39 = vadd.f32 %v38, 0.5
  %s40 = scalar_lea.vmem %s0, 16
  %v41 = vld [vmem:[%s40] sm:$0xff]
  %v42 = vmul.f32 %v41, 0.5
  %v43 = vtanh.pop %v42
  %v44 = vmul.f32 %v43, 0.5
  %v45 = vadd.f32 %v44, 0.5
  %s46 = scalar_lea.vmem %s0, 24
  %v47 = vld [vmem:[%s46] sm:$0xff]
  %v48 = vld [vmem:[%s1] sm:$0xff]
  %v49 = vmul.f32 %v48, 0.5
  %v50 = vtanh.pop %v49
  %v51 = vmul.f32 %v50, 0.5
  %v52 = vadd.f32 %v51, 0.5
  %v53 = vmul.f32 %v52, 10.0
  %v54 = vld [vmem:[%s2] sm:$0xff]
  %v55 = vld [vmem:[%s2 + $0x8] sm:$0xff]
  %v56 = vld [vmem:[%s2 + $0x10] sm:$0xff]
  %v57 = vld [vmem:[%s2 + $0x18] sm:$0xff]
  %s58 = scalar_lea.vmem %s2, 32
  %v59 = vld [vmem:[%s58] sm:$0xff]
  %v60 = vld [vmem:[%s58 + $0x8] sm:$0xff]
  %v61 = vld [vmem:[%s58 + $0x10] sm:$0xff]
  %v62 = vld [vmem:[%s58 + $0x18] sm:$0xff]
  %vm63 = vcmask 261120
  %v65 = vsel %vm63, %v45, 0
  %67 = vmatpush.msra.mxu0 0.0
  %68 = vmatpush.msra.mxu0 0.0
  %69 = vmatpush.msra.mxu0 0.0
  %70 = vmatpush.msra.mxu0 0.0
  %71 = vmatpush.msra.mxu0 0.0
  %72 = vmatpush.msra.mxu0 0.0
  %73 = vmatpush.msra.mxu0 0.0
  %74 = vmatpush.msra.mxu0 0.0
  %75 = vmatpush.msra.mxu0 0.0
  %76 = vmatpush.msra.mxu0 0.0
  %77 = vmatpush.msra.mxu0 0.0
  %78 = vmatpush.msra.mxu0 0.0
  %v79 = vand.u32 %v62, 4294901760
  %80 = vmatpush.msra.mxu0 %v79
  %v81 = vand.u32 %v61, 4294901760
  %82 = vmatpush.msra.mxu0 %v81
  %v83 = vand.u32 %v60, 4294901760
  %84 = vmatpush.msra.mxu0 %v83
  %v85 = vand.u32 %v59, 4294901760
  %86 = vmatpush.msra.mxu0 %v85
  %v87 = vand.u32 %v65, 4294901760
  %v88 = vsub.f32 %v65, %v87
  %v89 = vand.u32 %v88, 4294901760
  %v90 = vsub.f32 %v88, %v89
  %v91 = vand.u32 %v90, 4294901760
  %92 = vmatmul.f32.gmra.mxu0 %v91
  %v93 = vpop.f32.mrf.mxu0
  %v94 = vadd.f32 0.0, %v93
  %95 = vdwg.mxu0
  %96 = vmatpush.msra.mxu0 0.0
  %97 = vmatpush.msra.mxu0 0.0
  %98 = vmatpush.msra.mxu0 0.0
  %99 = vmatpush.msra.mxu0 0.0
  %100 = vmatpush.msra.mxu0 0.0
  %101 = vmatpush.msra.mxu0 0.0
  %102 = vmatpush.msra.mxu0 0.0
  %103 = vmatpush.msra.mxu0 0.0
  %104 = vmatpush.msra.mxu0 0.0
  %105 = vmatpush.msra.mxu0 0.0
  %106 = vmatpush.msra.mxu0 0.0
  %107 = vmatpush.msra.mxu0 0.0
  %v108 = vand.u32 %v62, 4294901760
  %v109 = vsub.f32 %v62, %v108
  %v110 = vand.u32 %v109, 4294901760
  %v111 = vsub.f32 %v109, %v110
  %v112 = vand.u32 %v111, 4294901760
  %113 = vmatpush.msra.mxu0 %v112
  %v114 = vand.u32 %v61, 4294901760
  %v115 = vsub.f32 %v61, %v114
  %v116 = vand.u32 %v115, 4294901760
  %v117 = vsub.f32 %v115, %v116
  %v118 = vand.u32 %v117, 4294901760
  %119 = vmatpush.msra.mxu0 %v118
  %v120 = vand.u32 %v60, 4294901760
  %v121 = vsub.f32 %v60, %v120
  %v122 = vand.u32 %v121, 4294901760
  %v123 = vsub.f32 %v121, %v122
  %v124 = vand.u32 %v123, 4294901760
  %125 = vmatpush.msra.mxu0 %v124
  %v126 = vand.u32 %v59, 4294901760
  %v127 = vsub.f32 %v59, %v126
  %v128 = vand.u32 %v127, 4294901760
  %v129 = vsub.f32 %v127, %v128
  %v130 = vand.u32 %v129, 4294901760
  %131 = vmatpush.msra.mxu0 %v130
  %v132 = vand.u32 %v65, 4294901760
  %133 = vmatmul.f32.gmra.mxu0 %v132
  %v134 = vpop.f32.mrf.mxu0
  %v135 = vadd.f32 %v94, %v134
  %136 = vdwg.mxu0
  %137 = vmatpush.msra.mxu0 0.0
  %138 = vmatpush.msra.mxu0 0.0
  %139 = vmatpush.msra.mxu0 0.0
  %140 = vmatpush.msra.mxu0 0.0
  %141 = vmatpush.msra.mxu0 0.0
  %142 = vmatpush.msra.mxu0 0.0
  %143 = vmatpush.msra.mxu0 0.0
  %144 = vmatpush.msra.mxu0 0.0
  %145 = vmatpush.msra.mxu0 0.0
  %146 = vmatpush.msra.mxu0 0.0
  %147 = vmatpush.msra.mxu0 0.0
  %148 = vmatpush.msra.mxu0 0.0
  %v149 = vand.u32 %v62, 4294901760
  %v150 = vsub.f32 %v62, %v149
  %151 = vmatpush.msra.mxu0 %v150
  %v152 = vand.u32 %v61, 4294901760
  %v153 = vsub.f32 %v61, %v152
  %154 = vmatpush.msra.mxu0 %v153
  %v155 = vand.u32 %v60, 4294901760
  %v156 = vsub.f32 %v60, %v155
  %157 = vmatpush.msra.mxu0 %v156
  %v158 = vand.u32 %v59, 4294901760
  %v159 = vsub.f32 %v59, %v158
  %160 = vmatpush.msra.mxu0 %v159
  %v161 = vand.u32 %v65, 4294901760
  %v162 = vsub.f32 %v65, %v161
  %163 = vmatmul.f32.gmra.mxu0 %v162
  %v164 = vpop.f32.mrf.mxu0
  %v165 = vadd.f32 %v135, %v164
  %166 = vdwg.mxu0
  %167 = vmatpush.msra.mxu0 0.0
  %168 = vmatpush.msra.mxu0 0.0
  %169 = vmatpush.msra.mxu0 0.0
  %170 = vmatpush.msra.mxu0 0.0
  %171 = vmatpush.msra.mxu0 0.0
  %172 = vmatpush.msra.mxu0 0.0
  %173 = vmatpush.msra.mxu0 0.0
  %174 = vmatpush.msra.mxu0 0.0
  %175 = vmatpush.msra.mxu0 0.0
  %176 = vmatpush.msra.mxu0 0.0
  %177 = vmatpush.msra.mxu0 0.0
  %178 = vmatpush.msra.mxu0 0.0
  %v179 = vand.u32 %v62, 4294901760
  %180 = vmatpush.msra.mxu0 %v179
  %v181 = vand.u32 %v61, 4294901760
  %182 = vmatpush.msra.mxu0 %v181
  %v183 = vand.u32 %v60, 4294901760
  %184 = vmatpush.msra.mxu0 %v183
  %v185 = vand.u32 %v59, 4294901760
  %186 = vmatpush.msra.mxu0 %v185
  %v187 = vand.u32 %v65, 4294901760
  %v188 = vsub.f32 %v65, %v187
  %v189 = vand.u32 %v188, 4294901760
  %190 = vmatmul.f32.gmra.mxu0 %v189
  %v191 = vpop.f32.mrf.mxu0
  %v192 = vadd.f32 %v165, %v191
  %193 = vdwg.mxu0
  %194 = vmatpush.msra.mxu0 0.0
  %195 = vmatpush.msra.mxu0 0.0
  %196 = vmatpush.msra.mxu0 0.0
  %197 = vmatpush.msra.mxu0 0.0
  %198 = vmatpush.msra.mxu0 0.0
  %199 = vmatpush.msra.mxu0 0.0
  %200 = vmatpush.msra.mxu0 0.0
  %201 = vmatpush.msra.mxu0 0.0
  %202 = vmatpush.msra.mxu0 0.0
  %203 = vmatpush.msra.mxu0 0.0
  %204 = vmatpush.msra.mxu0 0.0
  %205 = vmatpush.msra.mxu0 0.0
  %v206 = vand.u32 %v62, 4294901760
  %v207 = vsub.f32 %v62, %v206
  %v208 = vand.u32 %v207, 4294901760
  %209 = vmatpush.msra.mxu0 %v208
  %v210 = vand.u32 %v61, 4294901760
  %v211 = vsub.f32 %v61, %v210
  %v212 = vand.u32 %v211, 4294901760
  %213 = vmatpush.msra.mxu0 %v212
  %v214 = vand.u32 %v60, 4294901760
  %v215 = vsub.f32 %v60, %v214
  %v216 = vand.u32 %v215, 4294901760
  %217 = vmatpush.msra.mxu0 %v216
  %v218 = vand.u32 %v59, 4294901760
  %v219 = vsub.f32 %v59, %v218
  %v220 = vand.u32 %v219, 4294901760
  %221 = vmatpush.msra.mxu0 %v220
  %v222 = vand.u32 %v65, 4294901760
  %223 = vmatmul.f32.gmra.mxu0 %v222
  %v224 = vpop.f32.mrf.mxu0
  %v225 = vadd.f32 %v192, %v224
  %226 = vdwg.mxu0
  %227 = vmatpush.msra.mxu0 0.0
  %228 = vmatpush.msra.mxu0 0.0
  %229 = vmatpush.msra.mxu0 0.0
  %230 = vmatpush.msra.mxu0 0.0
  %231 = vmatpush.msra.mxu0 0.0
  %232 = vmatpush.msra.mxu0 0.0
  %233 = vmatpush.msra.mxu0 0.0
  %234 = vmatpush.msra.mxu0 0.0
  %235 = vmatpush.msra.mxu0 0.0
  %236 = vmatpush.msra.mxu0 0.0
  %237 = vmatpush.msra.mxu0 0.0
  %238 = vmatpush.msra.mxu0 0.0
  %v239 = vand.u32 %v62, 4294901760
  %240 = vmatpush.msra.mxu0 %v239
  %v241 = vand.u32 %v61, 4294901760
  %242 = vmatpush.msra.mxu0 %v241
  %v243 = vand.u32 %v60, 4294901760
  %244 = vmatpush.msra.mxu0 %v243
  %v245 = vand.u32 %v59, 4294901760
  %246 = vmatpush.msra.mxu0 %v245
  %v247 = vand.u32 %v65, 4294901760
  %248 = vmatmul.f32.gmra.mxu0 %v247
  %v249 = vpop.f32.mrf.mxu0
  %v250 = vadd.f32 %v225, %v249
  %251 = vdwg.mxu0
  %v253 = vsel %vm63, %v39, 0
  %255 = vmatpush.msra.mxu0 0.0
  %256 = vmatpush.msra.mxu0 0.0
  %257 = vmatpush.msra.mxu0 0.0
  %258 = vmatpush.msra.mxu0 0.0
  %259 = vmatpush.msra.mxu0 0.0
  %260 = vmatpush.msra.mxu0 0.0
  %261 = vmatpush.msra.mxu0 0.0
  %262 = vmatpush.msra.mxu0 0.0
  %263 = vmatpush.msra.mxu0 0.0
  %264 = vmatpush.msra.mxu0 0.0
  %265 = vmatpush.msra.mxu0 0.0
  %266 = vmatpush.msra.mxu0 0.0
  %v267 = vand.u32 %v57, 4294901760
  %268 = vmatpush.msra.mxu0 %v267
  %v269 = vand.u32 %v56, 4294901760
  %270 = vmatpush.msra.mxu0 %v269
  %v271 = vand.u32 %v55, 4294901760
  %272 = vmatpush.msra.mxu0 %v271
  %v273 = vand.u32 %v54, 4294901760
  %274 = vmatpush.msra.mxu0 %v273
  %v275 = vand.u32 %v253, 4294901760
  %v276 = vsub.f32 %v253, %v275
  %v277 = vand.u32 %v276, 4294901760
  %v278 = vsub.f32 %v276, %v277
  %v279 = vand.u32 %v278, 4294901760
  %280 = vmatmul.f32.gmra.mxu0 %v279
  %v281 = vpop.f32.mrf.mxu0
  %v282 = vadd.f32 %v250, %v281
  %283 = vdwg.mxu0
  %284 = vmatpush.msra.mxu0 0.0
  %285 = vmatpush.msra.mxu0 0.0
  %286 = vmatpush.msra.mxu0 0.0
  %287 = vmatpush.msra.mxu0 0.0
  %288 = vmatpush.msra.mxu0 0.0
  %289 = vmatpush.msra.mxu0 0.0
  %290 = vmatpush.msra.mxu0 0.0
  %291 = vmatpush.msra.mxu0 0.0
  %292 = vmatpush.msra.mxu0 0.0
  %293 = vmatpush.msra.mxu0 0.0
  %294 = vmatpush.msra.mxu0 0.0
  %295 = vmatpush.msra.mxu0 0.0
  %v296 = vand.u32 %v57, 4294901760
  %v297 = vsub.f32 %v57, %v296
  %v298 = vand.u32 %v297, 4294901760
  %v299 = vsub.f32 %v297, %v298
  %v300 = vand.u32 %v299, 4294901760
  %301 = vmatpush.msra.mxu0 %v300
  %v302 = vand.u32 %v56, 4294901760
  %v303 = vsub.f32 %v56, %v302
  %v304 = vand.u32 %v303, 4294901760
  %v305 = vsub.f32 %v303, %v304
  %v306 = vand.u32 %v305, 4294901760
  %307 = vmatpush.msra.mxu0 %v306
  %v308 = vand.u32 %v55, 4294901760
  %v309 = vsub.f32 %v55, %v308
  %v310 = vand.u32 %v309, 4294901760
  %v311 = vsub.f32 %v309, %v310
  %v312 = vand.u32 %v311, 4294901760
  %313 = vmatpush.msra.mxu0 %v312
  %v314 = vand.u32 %v54, 4294901760
  %v315 = vsub.f32 %v54, %v314
  %v316 = vand.u32 %v315, 4294901760
  %v317 = vsub.f32 %v315, %v316
  %v318 = vand.u32 %v317, 4294901760
  %319 = vmatpush.msra.mxu0 %v318
  %v320 = vand.u32 %v253, 4294901760
  %321 = vmatmul.f32.gmra.mxu0 %v320
  %v322 = vpop.f32.mrf.mxu0
  %v323 = vadd.f32 %v282, %v322
  %324 = vdwg.mxu0
  %325 = vmatpush.msra.mxu0 0.0
  %326 = vmatpush.msra.mxu0 0.0
  %327 = vmatpush.msra.mxu0 0.0
  %328 = vmatpush.msra.mxu0 0.0
  %329 = vmatpush.msra.mxu0 0.0
  %330 = vmatpush.msra.mxu0 0.0
  %331 = vmatpush.msra.mxu0 0.0
  %332 = vmatpush.msra.mxu0 0.0
  %333 = vmatpush.msra.mxu0 0.0
  %334 = vmatpush.msra.mxu0 0.0
  %335 = vmatpush.msra.mxu0 0.0
  %336 = vmatpush.msra.mxu0 0.0
  %v337 = vand.u32 %v57, 4294901760
  %v338 = vsub.f32 %v57, %v337
  %339 = vmatpush.msra.mxu0 %v338
  %v340 = vand.u32 %v56, 4294901760
  %v341 = vsub.f32 %v56, %v340
  %342 = vmatpush.msra.mxu0 %v341
  %v343 = vand.u32 %v55, 4294901760
  %v344 = vsub.f32 %v55, %v343
  %345 = vmatpush.msra.mxu0 %v344
  %v346 = vand.u32 %v54, 4294901760
  %v347 = vsub.f32 %v54, %v346
  %348 = vmatpush.msra.mxu0 %v347
  %v349 = vand.u32 %v253, 4294901760
  %v350 = vsub.f32 %v253, %v349
  %351 = vmatmul.f32.gmra.mxu0 %v350
  %v352 = vpop.f32.mrf.mxu0
  %v353 = vadd.f32 %v323, %v352
  %354 = vdwg.mxu0
  %355 = vmatpush.msra.mxu0 0.0
  %356 = vmatpush.msra.mxu0 0.0
  %357 = vmatpush.msra.mxu0 0.0
  %358 = vmatpush.msra.mxu0 0.0
  %359 = vmatpush.msra.mxu0 0.0
  %360 = vmatpush.msra.mxu0 0.0
  %361 = vmatpush.msra.mxu0 0.0
  %362 = vmatpush.msra.mxu0 0.0
  %363 = vmatpush.msra.mxu0 0.0
  %364 = vmatpush.msra.mxu0 0.0
  %365 = vmatpush.msra.mxu0 0.0
  %366 = vmatpush.msra.mxu0 0.0
  %v367 = vand.u32 %v57, 4294901760
  %368 = vmatpush.msra.mxu0 %v367
  %v369 = vand.u32 %v56, 4294901760
  %370 = vmatpush.msra.mxu0 %v369
  %v371 = vand.u32 %v55, 4294901760
  %372 = vmatpush.msra.mxu0 %v371
  %v373 = vand.u32 %v54, 4294901760
  %374 = vmatpush.msra.mxu0 %v373
  %v375 = vand.u32 %v253, 4294901760
  %v376 = vsub.f32 %v253, %v375
  %v377 = vand.u32 %v376, 4294901760
  %378 = vmatmul.f32.gmra.mxu0 %v377
  %v379 = vpop.f32.mrf.mxu0
  %v380 = vadd.f32 %v353, %v379
  %381 = vdwg.mxu0
  %382 = vmatpush.msra.mxu0 0.0
  %383 = vmatpush.msra.mxu0 0.0
  %384 = vmatpush.msra.mxu0 0.0
  %385 = vmatpush.msra.mxu0 0.0
  %386 = vmatpush.msra.mxu0 0.0
  %387 = vmatpush.msra.mxu0 0.0
  %388 = vmatpush.msra.mxu0 0.0
  %389 = vmatpush.msra.mxu0 0.0
  %390 = vmatpush.msra.mxu0 0.0
  %391 = vmatpush.msra.mxu0 0.0
  %392 = vmatpush.msra.mxu0 0.0
  %393 = vmatpush.msra.mxu0 0.0
  %v394 = vand.u32 %v57, 4294901760
  %v395 = vsub.f32 %v57, %v394
  %v396 = vand.u32 %v395, 4294901760
  %397 = vmatpush.msra.mxu0 %v396
  %v398 = vand.u32 %v56, 4294901760
  %v399 = vsub.f32 %v56, %v398
  %v400 = vand.u32 %v399, 4294901760
  %401 = vmatpush.msra.mxu0 %v400
  %v402 = vand.u32 %v55, 4294901760
  %v403 = vsub.f32 %v55, %v402
  %v404 = vand.u32 %v403, 4294901760
  %405 = vmatpush.msra.mxu0 %v404
  %v406 = vand.u32 %v54, 4294901760
  %v407 = vsub.f32 %v54, %v406
  %v408 = vand.u32 %v407, 4294901760
  %409 = vmatpush.msra.mxu0 %v408
  %v410 = vand.u32 %v253, 4294901760
  %411 = vmatmul.f32.gmra.mxu0 %v410
  %v412 = vpop.f32.mrf.mxu0
  %v413 = vadd.f32 %v380, %v412
  %414 = vdwg.mxu0
  %415 = vmatpush.msra.mxu0 0.0
  %416 = vmatpush.msra.mxu0 0.0
  %417 = vmatpush.msra.mxu0 0.0
  %418 = vmatpush.msra.mxu0 0.0
  %419 = vmatpush.msra.mxu0 0.0
  %420 = vmatpush.msra.mxu0 0.0
  %421 = vmatpush.msra.mxu0 0.0
  %422 = vmatpush.msra.mxu0 0.0
  %423 = vmatpush.msra.mxu0 0.0
  %424 = vmatpush.msra.mxu0 0.0
  %425 = vmatpush.msra.mxu0 0.0
  %426 = vmatpush.msra.mxu0 0.0
  %v427 = vand.u32 %v57, 4294901760
  %428 = vmatpush.msra.mxu0 %v427
  %v429 = vand.u32 %v56, 4294901760
  %430 = vmatpush.msra.mxu0 %v429
  %v431 = vand.u32 %v55, 4294901760
  %432 = vmatpush.msra.mxu0 %v431
  %v433 = vand.u32 %v54, 4294901760
  %434 = vmatpush.msra.mxu0 %v433
  %v435 = vand.u32 %v253, 4294901760
  %436 = vmatmul.f32.gmra.mxu0 %v435
  %v437 = vpop.f32.mrf.mxu0
  %v438 = vadd.f32 %v413, %v437
  %439 = vdwg.mxu0
  %v440 = vld [vmem:[%s3] sm:$0x1]
  %v441 = vperm.slane %v440, 0
  %v442 = vadd.f32 %v438, %v441
  %v443 = vmul.f32 %v442, 0.5
  %v444 = vtanh.pop %v443
  %v445 = vmul.f32 %v444, 0.5
  %v446 = vadd.f32 %v445, 0.5
  %v447 = vsub.f32 %v33, %v45
  %449 = vset.pattern.permute.xlu0 0
  %450 = vperm.xlu0 %449, %v53
  %v451 = vpop.permute.xlu0 %450
  %v453 = vmul.f32 %v451, %v447
  %v454 = vmul.f32 %v453, %v47
  %v455 = vld [vmem:[%s4] sm:$0xff]
  %v456 = vld [vmem:[%s4 + $0x8] sm:$0xff]
  %v457 = vld [vmem:[%s4 + $0x10] sm:$0xff]
  %v458 = vld [vmem:[%s4 + $0x18] sm:$0xff]
  %v459 = vld [vmem:[%s4 + $0x20] sm:$0xff]
  %v460 = vld [vmem:[%s4 + $0x28] sm:$0xff]
  %v461 = vld [vmem:[%s4 + $0x30] sm:$0xff]
  %v462 = vld [vmem:[%s4 + $0x38] sm:$0xff]
  %v463 = vld [vmem:[%s4 + $0x40] sm:$0xff]
  %v464 = vld [vmem:[%s4 + $0x48] sm:$0xff]
  %v465 = vld [vmem:[%s4 + $0x50] sm:$0xff]
  %v466 = vld [vmem:[%s4 + $0x58] sm:$0xff]
  %v467 = vld [vmem:[%s4 + $0x60] sm:$0xff]
  %v468 = vld [vmem:[%s4 + $0x68] sm:$0xff]
  %v469 = vld [vmem:[%s4 + $0x70] sm:$0xff]
  %v470 = vld [vmem:[%s4 + $0x78] sm:$0xff]
  %v471 = vld [vmem:[%s5] sm:$0xf]
  %v473 = vperm.slane %v471, 0
  %v474 = vperm.slane %v471, 1
  %v475 = vperm.slane %v471, 2
  %v476 = vperm.slane %v471, 3
  %v482 = vsel %vm63, %v454, 0
  %484 = vmatpush.msra.mxu0 0.0
  %485 = vmatpush.msra.mxu0 0.0
  %486 = vmatpush.msra.mxu0 0.0
  %487 = vmatpush.msra.mxu0 0.0
  %488 = vmatpush.msra.mxu0 0.0
  %489 = vmatpush.msra.mxu0 0.0
  %490 = vmatpush.msra.mxu0 0.0
  %491 = vmatpush.msra.mxu0 0.0
  %492 = vmatpush.msra.mxu0 0.0
  %493 = vmatpush.msra.mxu0 0.0
  %494 = vmatpush.msra.mxu0 0.0
  %495 = vmatpush.msra.mxu0 0.0
  %v496 = vand.u32 %v467, 4294901760
  %497 = vmatpush.msra.mxu0 %v496
  %v498 = vand.u32 %v463, 4294901760
  %499 = vmatpush.msra.mxu0 %v498
  %v500 = vand.u32 %v459, 4294901760
  %501 = vmatpush.msra.mxu0 %v500
  %v502 = vand.u32 %v455, 4294901760
  %503 = vmatpush.msra.mxu0 %v502
  %v504 = vand.u32 %v482, 4294901760
  %v505 = vsub.f32 %v482, %v504
  %v506 = vand.u32 %v505, 4294901760
  %v507 = vsub.f32 %v505, %v506
  %v508 = vand.u32 %v507, 4294901760
  %509 = vmatmul.f32.gmra.mxu0 %v508
  %v510 = vpop.f32.mrf.mxu0
  %v511 = vadd.f32 %v473, %v510
  %512 = vdwg.mxu0
  %513 = vmatpush.msra.mxu0 0.0
  %514 = vmatpush.msra.mxu0 0.0
  %515 = vmatpush.msra.mxu0 0.0
  %516 = vmatpush.msra.mxu0 0.0
  %517 = vmatpush.msra.mxu0 0.0
  %518 = vmatpush.msra.mxu0 0.0
  %519 = vmatpush.msra.mxu0 0.0
  %520 = vmatpush.msra.mxu0 0.0
  %521 = vmatpush.msra.mxu0 0.0
  %522 = vmatpush.msra.mxu0 0.0
  %523 = vmatpush.msra.mxu0 0.0
  %524 = vmatpush.msra.mxu0 0.0
  %v525 = vand.u32 %v467, 4294901760
  %v526 = vsub.f32 %v467, %v525
  %v527 = vand.u32 %v526, 4294901760
  %v528 = vsub.f32 %v526, %v527
  %v529 = vand.u32 %v528, 4294901760
  %530 = vmatpush.msra.mxu0 %v529
  %v531 = vand.u32 %v463, 4294901760
  %v532 = vsub.f32 %v463, %v531
  %v533 = vand.u32 %v532, 4294901760
  %v534 = vsub.f32 %v532, %v533
  %v535 = vand.u32 %v534, 4294901760
  %536 = vmatpush.msra.mxu0 %v535
  %v537 = vand.u32 %v459, 4294901760
  %v538 = vsub.f32 %v459, %v537
  %v539 = vand.u32 %v538, 4294901760
  %v540 = vsub.f32 %v538, %v539
  %v541 = vand.u32 %v540, 4294901760
  %542 = vmatpush.msra.mxu0 %v541
  %v543 = vand.u32 %v455, 4294901760
  %v544 = vsub.f32 %v455, %v543
  %v545 = vand.u32 %v544, 4294901760
  %v546 = vsub.f32 %v544, %v545
  %v547 = vand.u32 %v546, 4294901760
  %548 = vmatpush.msra.mxu0 %v547
  %v549 = vand.u32 %v482, 4294901760
  %550 = vmatmul.f32.gmra.mxu0 %v549
  %v551 = vpop.f32.mrf.mxu0
  %v552 = vadd.f32 %v511, %v551
  %553 = vdwg.mxu0
  %554 = vmatpush.msra.mxu0 0.0
  %555 = vmatpush.msra.mxu0 0.0
  %556 = vmatpush.msra.mxu0 0.0
  %557 = vmatpush.msra.mxu0 0.0
  %558 = vmatpush.msra.mxu0 0.0
  %559 = vmatpush.msra.mxu0 0.0
  %560 = vmatpush.msra.mxu0 0.0
  %561 = vmatpush.msra.mxu0 0.0
  %562 = vmatpush.msra.mxu0 0.0
  %563 = vmatpush.msra.mxu0 0.0
  %564 = vmatpush.msra.mxu0 0.0
  %565 = vmatpush.msra.mxu0 0.0
  %v566 = vand.u32 %v467, 4294901760
  %v567 = vsub.f32 %v467, %v566
  %568 = vmatpush.msra.mxu0 %v567
  %v569 = vand.u32 %v463, 4294901760
  %v570 = vsub.f32 %v463, %v569
  %571 = vmatpush.msra.mxu0 %v570
  %v572 = vand.u32 %v459, 4294901760
  %v573 = vsub.f32 %v459, %v572
  %574 = vmatpush.msra.mxu0 %v573
  %v575 = vand.u32 %v455, 4294901760
  %v576 = vsub.f32 %v455, %v575
  %577 = vmatpush.msra.mxu0 %v576
  %v578 = vand.u32 %v482, 4294901760
  %v579 = vsub.f32 %v482, %v578
  %580 = vmatmul.f32.gmra.mxu0 %v579
  %v581 = vpop.f32.mrf.mxu0
  %v582 = vadd.f32 %v552, %v581
  %583 = vdwg.mxu0
  %584 = vmatpush.msra.mxu0 0.0
  %585 = vmatpush.msra.mxu0 0.0
  %586 = vmatpush.msra.mxu0 0.0
  %587 = vmatpush.msra.mxu0 0.0
  %588 = vmatpush.msra.mxu0 0.0
  %589 = vmatpush.msra.mxu0 0.0
  %590 = vmatpush.msra.mxu0 0.0
  %591 = vmatpush.msra.mxu0 0.0
  %592 = vmatpush.msra.mxu0 0.0
  %593 = vmatpush.msra.mxu0 0.0
  %594 = vmatpush.msra.mxu0 0.0
  %595 = vmatpush.msra.mxu0 0.0
  %v596 = vand.u32 %v467, 4294901760
  %597 = vmatpush.msra.mxu0 %v596
  %v598 = vand.u32 %v463, 4294901760
  %599 = vmatpush.msra.mxu0 %v598
  %v600 = vand.u32 %v459, 4294901760
  %601 = vmatpush.msra.mxu0 %v600
  %v602 = vand.u32 %v455, 4294901760
  %603 = vmatpush.msra.mxu0 %v602
  %v604 = vand.u32 %v482, 4294901760
  %v605 = vsub.f32 %v482, %v604
  %v606 = vand.u32 %v605, 4294901760
  %607 = vmatmul.f32.gmra.mxu0 %v606
  %v608 = vpop.f32.mrf.mxu0
  %v609 = vadd.f32 %v582, %v608
  %610 = vdwg.mxu0
  %611 = vmatpush.msra.mxu0 0.0
  %612 = vmatpush.msra.mxu0 0.0
  %613 = vmatpush.msra.mxu0 0.0
  %614 = vmatpush.msra.mxu0 0.0
  %615 = vmatpush.msra.mxu0 0.0
  %616 = vmatpush.msra.mxu0 0.0
  %617 = vmatpush.msra.mxu0 0.0
  %618 = vmatpush.msra.mxu0 0.0
  %619 = vmatpush.msra.mxu0 0.0
  %620 = vmatpush.msra.mxu0 0.0
  %621 = vmatpush.msra.mxu0 0.0
  %622 = vmatpush.msra.mxu0 0.0
  %v623 = vand.u32 %v467, 4294901760
  %v624 = vsub.f32 %v467, %v623
  %v625 = vand.u32 %v624, 4294901760
  %626 = vmatpush.msra.mxu0 %v625
  %v627 = vand.u32 %v463, 4294901760
  %v628 = vsub.f32 %v463, %v627
  %v629 = vand.u32 %v628, 4294901760
  %630 = vmatpush.msra.mxu0 %v629
  %v631 = vand.u32 %v459, 4294901760
  %v632 = vsub.f32 %v459, %v631
  %v633 = vand.u32 %v632, 4294901760
  %634 = vmatpush.msra.mxu0 %v633
  %v635 = vand.u32 %v455, 4294901760
  %v636 = vsub.f32 %v455, %v635
  %v637 = vand.u32 %v636, 4294901760
  %638 = vmatpush.msra.mxu0 %v637
  %v639 = vand.u32 %v482, 4294901760
  %640 = vmatmul.f32.gmra.mxu0 %v639
  %v641 = vpop.f32.mrf.mxu0
  %v642 = vadd.f32 %v609, %v641
  %643 = vdwg.mxu0
  %644 = vmatpush.msra.mxu0 0.0
  %645 = vmatpush.msra.mxu0 0.0
  %646 = vmatpush.msra.mxu0 0.0
  %647 = vmatpush.msra.mxu0 0.0
  %648 = vmatpush.msra.mxu0 0.0
  %649 = vmatpush.msra.mxu0 0.0
  %650 = vmatpush.msra.mxu0 0.0
  %651 = vmatpush.msra.mxu0 0.0
  %652 = vmatpush.msra.mxu0 0.0
  %653 = vmatpush.msra.mxu0 0.0
  %654 = vmatpush.msra.mxu0 0.0
  %655 = vmatpush.msra.mxu0 0.0
  %v656 = vand.u32 %v467, 4294901760
  %657 = vmatpush.msra.mxu0 %v656
  %v658 = vand.u32 %v463, 4294901760
  %659 = vmatpush.msra.mxu0 %v658
  %v660 = vand.u32 %v459, 4294901760
  %661 = vmatpush.msra.mxu0 %v660
  %v662 = vand.u32 %v455, 4294901760
  %663 = vmatpush.msra.mxu0 %v662
  %v664 = vand.u32 %v482, 4294901760
  %665 = vmatmul.f32.gmra.mxu0 %v664
  %v666 = vpop.f32.mrf.mxu0
  %v667 = vadd.f32 %v642, %v666
  %668 = vdwg.mxu0
  %669 = vmatpush.msra.mxu0 0.0
  %670 = vmatpush.msra.mxu0 0.0
  %671 = vmatpush.msra.mxu0 0.0
  %672 = vmatpush.msra.mxu0 0.0
  %673 = vmatpush.msra.mxu0 0.0
  %674 = vmatpush.msra.mxu0 0.0
  %675 = vmatpush.msra.mxu0 0.0
  %676 = vmatpush.msra.mxu0 0.0
  %677 = vmatpush.msra.mxu0 0.0
  %678 = vmatpush.msra.mxu0 0.0
  %679 = vmatpush.msra.mxu0 0.0
  %680 = vmatpush.msra.mxu0 0.0
  %v681 = vand.u32 %v468, 4294901760
  %682 = vmatpush.msra.mxu0 %v681
  %v683 = vand.u32 %v464, 4294901760
  %684 = vmatpush.msra.mxu0 %v683
  %v685 = vand.u32 %v460, 4294901760
  %686 = vmatpush.msra.mxu0 %v685
  %v687 = vand.u32 %v456, 4294901760
  %688 = vmatpush.msra.mxu0 %v687
  %v689 = vand.u32 %v482, 4294901760
  %v690 = vsub.f32 %v482, %v689
  %v691 = vand.u32 %v690, 4294901760
  %v692 = vsub.f32 %v690, %v691
  %v693 = vand.u32 %v692, 4294901760
  %694 = vmatmul.f32.gmra.mxu0 %v693
  %v695 = vpop.f32.mrf.mxu0
  %v696 = vadd.f32 %v474, %v695
  %697 = vdwg.mxu0
  %698 = vmatpush.msra.mxu0 0.0
  %699 = vmatpush.msra.mxu0 0.0
  %700 = vmatpush.msra.mxu0 0.0
  %701 = vmatpush.msra.mxu0 0.0
  %702 = vmatpush.msra.mxu0 0.0
  %703 = vmatpush.msra.mxu0 0.0
  %704 = vmatpush.msra.mxu0 0.0
  %705 = vmatpush.msra.mxu0 0.0
  %706 = vmatpush.msra.mxu0 0.0
  %707 = vmatpush.msra.mxu0 0.0
  %708 = vmatpush.msra.mxu0 0.0
  %709 = vmatpush.msra.mxu0 0.0
  %v710 = vand.u32 %v468, 4294901760
  %v711 = vsub.f32 %v468, %v710
  %v712 = vand.u32 %v711, 4294901760
  %v713 = vsub.f32 %v711, %v712
  %v714 = vand.u32 %v713, 4294901760
  %715 = vmatpush.msra.mxu0 %v714
  %v716 = vand.u32 %v464, 4294901760
  %v717 = vsub.f32 %v464, %v716
  %v718 = vand.u32 %v717, 4294901760
  %v719 = vsub.f32 %v717, %v718
  %v720 = vand.u32 %v719, 4294901760
  %721 = vmatpush.msra.mxu0 %v720
  %v722 = vand.u32 %v460, 4294901760
  %v723 = vsub.f32 %v460, %v722
  %v724 = vand.u32 %v723, 4294901760
  %v725 = vsub.f32 %v723, %v724
  %v726 = vand.u32 %v725, 4294901760
  %727 = vmatpush.msra.mxu0 %v726
  %v728 = vand.u32 %v456, 4294901760
  %v729 = vsub.f32 %v456, %v728
  %v730 = vand.u32 %v729, 4294901760
  %v731 = vsub.f32 %v729, %v730
  %v732 = vand.u32 %v731, 4294901760
  %733 = vmatpush.msra.mxu0 %v732
  %v734 = vand.u32 %v482, 4294901760
  %735 = vmatmul.f32.gmra.mxu0 %v734
  %v736 = vpop.f32.mrf.mxu0
  %v737 = vadd.f32 %v696, %v736
  %738 = vdwg.mxu0
  %739 = vmatpush.msra.mxu0 0.0
  %740 = vmatpush.msra.mxu0 0.0
  %741 = vmatpush.msra.mxu0 0.0
  %742 = vmatpush.msra.mxu0 0.0
  %743 = vmatpush.msra.mxu0 0.0
  %744 = vmatpush.msra.mxu0 0.0
  %745 = vmatpush.msra.mxu0 0.0
  %746 = vmatpush.msra.mxu0 0.0
  %747 = vmatpush.msra.mxu0 0.0
  %748 = vmatpush.msra.mxu0 0.0
  %749 = vmatpush.msra.mxu0 0.0
  %750 = vmatpush.msra.mxu0 0.0
  %v751 = vand.u32 %v468, 4294901760
  %v752 = vsub.f32 %v468, %v751
  %753 = vmatpush.msra.mxu0 %v752
  %v754 = vand.u32 %v464, 4294901760
  %v755 = vsub.f32 %v464, %v754
  %756 = vmatpush.msra.mxu0 %v755
  %v757 = vand.u32 %v460, 4294901760
  %v758 = vsub.f32 %v460, %v757
  %759 = vmatpush.msra.mxu0 %v758
  %v760 = vand.u32 %v456, 4294901760
  %v761 = vsub.f32 %v456, %v760
  %762 = vmatpush.msra.mxu0 %v761
  %v763 = vand.u32 %v482, 4294901760
  %v764 = vsub.f32 %v482, %v763
  %765 = vmatmul.f32.gmra.mxu0 %v764
  %v766 = vpop.f32.mrf.mxu0
  %v767 = vadd.f32 %v737, %v766
  %768 = vdwg.mxu0
  %769 = vmatpush.msra.mxu0 0.0
  %770 = vmatpush.msra.mxu0 0.0
  %771 = vmatpush.msra.mxu0 0.0
  %772 = vmatpush.msra.mxu0 0.0
  %773 = vmatpush.msra.mxu0 0.0
  %774 = vmatpush.msra.mxu0 0.0
  %775 = vmatpush.msra.mxu0 0.0
  %776 = vmatpush.msra.mxu0 0.0
  %777 = vmatpush.msra.mxu0 0.0
  %778 = vmatpush.msra.mxu0 0.0
  %779 = vmatpush.msra.mxu0 0.0
  %780 = vmatpush.msra.mxu0 0.0
  %v781 = vand.u32 %v468, 4294901760
  %782 = vmatpush.msra.mxu0 %v781
  %v783 = vand.u32 %v464, 4294901760
  %784 = vmatpush.msra.mxu0 %v783
  %v785 = vand.u32 %v460, 4294901760
  %786 = vmatpush.msra.mxu0 %v785
  %v787 = vand.u32 %v456, 4294901760
  %788 = vmatpush.msra.mxu0 %v787
  %v789 = vand.u32 %v482, 4294901760
  %v790 = vsub.f32 %v482, %v789
  %v791 = vand.u32 %v790, 4294901760
  %792 = vmatmul.f32.gmra.mxu0 %v791
  %v793 = vpop.f32.mrf.mxu0
  %v794 = vadd.f32 %v767, %v793
  %795 = vdwg.mxu0
  %796 = vmatpush.msra.mxu0 0.0
  %797 = vmatpush.msra.mxu0 0.0
  %798 = vmatpush.msra.mxu0 0.0
  %799 = vmatpush.msra.mxu0 0.0
  %800 = vmatpush.msra.mxu0 0.0
  %801 = vmatpush.msra.mxu0 0.0
  %802 = vmatpush.msra.mxu0 0.0
  %803 = vmatpush.msra.mxu0 0.0
  %804 = vmatpush.msra.mxu0 0.0
  %805 = vmatpush.msra.mxu0 0.0
  %806 = vmatpush.msra.mxu0 0.0
  %807 = vmatpush.msra.mxu0 0.0
  %v808 = vand.u32 %v468, 4294901760
  %v809 = vsub.f32 %v468, %v808
  %v810 = vand.u32 %v809, 4294901760
  %811 = vmatpush.msra.mxu0 %v810
  %v812 = vand.u32 %v464, 4294901760
  %v813 = vsub.f32 %v464, %v812
  %v814 = vand.u32 %v813, 4294901760
  %815 = vmatpush.msra.mxu0 %v814
  %v816 = vand.u32 %v460, 4294901760
  %v817 = vsub.f32 %v460, %v816
  %v818 = vand.u32 %v817, 4294901760
  %819 = vmatpush.msra.mxu0 %v818
  %v820 = vand.u32 %v456, 4294901760
  %v821 = vsub.f32 %v456, %v820
  %v822 = vand.u32 %v821, 4294901760
  %823 = vmatpush.msra.mxu0 %v822
  %v824 = vand.u32 %v482, 4294901760
  %825 = vmatmul.f32.gmra.mxu0 %v824
  %v826 = vpop.f32.mrf.mxu0
  %v827 = vadd.f32 %v794, %v826
  %828 = vdwg.mxu0
  %829 = vmatpush.msra.mxu0 0.0
  %830 = vmatpush.msra.mxu0 0.0
  %831 = vmatpush.msra.mxu0 0.0
  %832 = vmatpush.msra.mxu0 0.0
  %833 = vmatpush.msra.mxu0 0.0
  %834 = vmatpush.msra.mxu0 0.0
  %835 = vmatpush.msra.mxu0 0.0
  %836 = vmatpush.msra.mxu0 0.0
  %837 = vmatpush.msra.mxu0 0.0
  %838 = vmatpush.msra.mxu0 0.0
  %839 = vmatpush.msra.mxu0 0.0
  %840 = vmatpush.msra.mxu0 0.0
  %v841 = vand.u32 %v468, 4294901760
  %842 = vmatpush.msra.mxu0 %v841
  %v843 = vand.u32 %v464, 4294901760
  %844 = vmatpush.msra.mxu0 %v843
  %v845 = vand.u32 %v460, 4294901760
  %846 = vmatpush.msra.mxu0 %v845
  %v847 = vand.u32 %v456, 4294901760
  %848 = vmatpush.msra.mxu0 %v847
  %v849 = vand.u32 %v482, 4294901760
  %850 = vmatmul.f32.gmra.mxu0 %v849
  %v851 = vpop.f32.mrf.mxu0
  %v852 = vadd.f32 %v827, %v851
  %853 = vdwg.mxu0
  %854 = vmatpush.msra.mxu0 0.0
  %855 = vmatpush.msra.mxu0 0.0
  %856 = vmatpush.msra.mxu0 0.0
  %857 = vmatpush.msra.mxu0 0.0
  %858 = vmatpush.msra.mxu0 0.0
  %859 = vmatpush.msra.mxu0 0.0
  %860 = vmatpush.msra.mxu0 0.0
  %861 = vmatpush.msra.mxu0 0.0
  %862 = vmatpush.msra.mxu0 0.0
  %863 = vmatpush.msra.mxu0 0.0
  %864 = vmatpush.msra.mxu0 0.0
  %865 = vmatpush.msra.mxu0 0.0
  %v866 = vand.u32 %v469, 4294901760
  %867 = vmatpush.msra.mxu0 %v866
  %v868 = vand.u32 %v465, 4294901760
  %869 = vmatpush.msra.mxu0 %v868
  %v870 = vand.u32 %v461, 4294901760
  %871 = vmatpush.msra.mxu0 %v870
  %v872 = vand.u32 %v457, 4294901760
  %873 = vmatpush.msra.mxu0 %v872
  %v874 = vand.u32 %v482, 4294901760
  %v875 = vsub.f32 %v482, %v874
  %v876 = vand.u32 %v875, 4294901760
  %v877 = vsub.f32 %v875, %v876
  %v878 = vand.u32 %v877, 4294901760
  %879 = vmatmul.f32.gmra.mxu0 %v878
  %v880 = vpop.f32.mrf.mxu0
  %v881 = vadd.f32 %v475, %v880
  %882 = vdwg.mxu0
  %883 = vmatpush.msra.mxu0 0.0
  %884 = vmatpush.msra.mxu0 0.0
  %885 = vmatpush.msra.mxu0 0.0
  %886 = vmatpush.msra.mxu0 0.0
  %887 = vmatpush.msra.mxu0 0.0
  %888 = vmatpush.msra.mxu0 0.0
  %889 = vmatpush.msra.mxu0 0.0
  %890 = vmatpush.msra.mxu0 0.0
  %891 = vmatpush.msra.mxu0 0.0
  %892 = vmatpush.msra.mxu0 0.0
  %893 = vmatpush.msra.mxu0 0.0
  %894 = vmatpush.msra.mxu0 0.0
  %v895 = vand.u32 %v469, 4294901760
  %v896 = vsub.f32 %v469, %v895
  %v897 = vand.u32 %v896, 4294901760
  %v898 = vsub.f32 %v896, %v897
  %v899 = vand.u32 %v898, 4294901760
  %900 = vmatpush.msra.mxu0 %v899
  %v901 = vand.u32 %v465, 4294901760
  %v902 = vsub.f32 %v465, %v901
  %v903 = vand.u32 %v902, 4294901760
  %v904 = vsub.f32 %v902, %v903
  %v905 = vand.u32 %v904, 4294901760
  %906 = vmatpush.msra.mxu0 %v905
  %v907 = vand.u32 %v461, 4294901760
  %v908 = vsub.f32 %v461, %v907
  %v909 = vand.u32 %v908, 4294901760
  %v910 = vsub.f32 %v908, %v909
  %v911 = vand.u32 %v910, 4294901760
  %912 = vmatpush.msra.mxu0 %v911
  %v913 = vand.u32 %v457, 4294901760
  %v914 = vsub.f32 %v457, %v913
  %v915 = vand.u32 %v914, 4294901760
  %v916 = vsub.f32 %v914, %v915
  %v917 = vand.u32 %v916, 4294901760
  %918 = vmatpush.msra.mxu0 %v917
  %v919 = vand.u32 %v482, 4294901760
  %920 = vmatmul.f32.gmra.mxu0 %v919
  %v921 = vpop.f32.mrf.mxu0
  %v922 = vadd.f32 %v881, %v921
  %923 = vdwg.mxu0
  %924 = vmatpush.msra.mxu0 0.0
  %925 = vmatpush.msra.mxu0 0.0
  %926 = vmatpush.msra.mxu0 0.0
  %927 = vmatpush.msra.mxu0 0.0
  %928 = vmatpush.msra.mxu0 0.0
  %929 = vmatpush.msra.mxu0 0.0
  %930 = vmatpush.msra.mxu0 0.0
  %931 = vmatpush.msra.mxu0 0.0
  %932 = vmatpush.msra.mxu0 0.0
  %933 = vmatpush.msra.mxu0 0.0
  %934 = vmatpush.msra.mxu0 0.0
  %935 = vmatpush.msra.mxu0 0.0
  %v936 = vand.u32 %v469, 4294901760
  %v937 = vsub.f32 %v469, %v936
  %938 = vmatpush.msra.mxu0 %v937
  %v939 = vand.u32 %v465, 4294901760
  %v940 = vsub.f32 %v465, %v939
  %941 = vmatpush.msra.mxu0 %v940
  %v942 = vand.u32 %v461, 4294901760
  %v943 = vsub.f32 %v461, %v942
  %944 = vmatpush.msra.mxu0 %v943
  %v945 = vand.u32 %v457, 4294901760
  %v946 = vsub.f32 %v457, %v945
  %947 = vmatpush.msra.mxu0 %v946
  %v948 = vand.u32 %v482, 4294901760
  %v949 = vsub.f32 %v482, %v948
  %950 = vmatmul.f32.gmra.mxu0 %v949
  %v951 = vpop.f32.mrf.mxu0
  %v952 = vadd.f32 %v922, %v951
  %953 = vdwg.mxu0
  %954 = vmatpush.msra.mxu0 0.0
  %955 = vmatpush.msra.mxu0 0.0
  %956 = vmatpush.msra.mxu0 0.0
  %957 = vmatpush.msra.mxu0 0.0
  %958 = vmatpush.msra.mxu0 0.0
  %959 = vmatpush.msra.mxu0 0.0
  %960 = vmatpush.msra.mxu0 0.0
  %961 = vmatpush.msra.mxu0 0.0
  %962 = vmatpush.msra.mxu0 0.0
  %963 = vmatpush.msra.mxu0 0.0
  %964 = vmatpush.msra.mxu0 0.0
  %965 = vmatpush.msra.mxu0 0.0
  %v966 = vand.u32 %v469, 4294901760
  %967 = vmatpush.msra.mxu0 %v966
  %v968 = vand.u32 %v465, 4294901760
  %969 = vmatpush.msra.mxu0 %v968
  %v970 = vand.u32 %v461, 4294901760
  %971 = vmatpush.msra.mxu0 %v970
  %v972 = vand.u32 %v457, 4294901760
  %973 = vmatpush.msra.mxu0 %v972
  %v974 = vand.u32 %v482, 4294901760
  %v975 = vsub.f32 %v482, %v974
  %v976 = vand.u32 %v975, 4294901760
  %977 = vmatmul.f32.gmra.mxu0 %v976
  %v978 = vpop.f32.mrf.mxu0
  %v979 = vadd.f32 %v952, %v978
  %980 = vdwg.mxu0
  %981 = vmatpush.msra.mxu0 0.0
  %982 = vmatpush.msra.mxu0 0.0
  %983 = vmatpush.msra.mxu0 0.0
  %984 = vmatpush.msra.mxu0 0.0
  %985 = vmatpush.msra.mxu0 0.0
  %986 = vmatpush.msra.mxu0 0.0
  %987 = vmatpush.msra.mxu0 0.0
  %988 = vmatpush.msra.mxu0 0.0
  %989 = vmatpush.msra.mxu0 0.0
  %990 = vmatpush.msra.mxu0 0.0
  %991 = vmatpush.msra.mxu0 0.0
  %992 = vmatpush.msra.mxu0 0.0
  %v993 = vand.u32 %v469, 4294901760
  %v994 = vsub.f32 %v469, %v993
  %v995 = vand.u32 %v994, 4294901760
  %996 = vmatpush.msra.mxu0 %v995
  %v997 = vand.u32 %v465, 4294901760
  %v998 = vsub.f32 %v465, %v997
  %v999 = vand.u32 %v998, 4294901760
  %1000 = vmatpush.msra.mxu0 %v999
  %v1001 = vand.u32 %v461, 4294901760
  %v1002 = vsub.f32 %v461, %v1001
  %v1003 = vand.u32 %v1002, 4294901760
  %1004 = vmatpush.msra.mxu0 %v1003
  %v1005 = vand.u32 %v457, 4294901760
  %v1006 = vsub.f32 %v457, %v1005
  %v1007 = vand.u32 %v1006, 4294901760
  %1008 = vmatpush.msra.mxu0 %v1007
  %v1009 = vand.u32 %v482, 4294901760
  %1010 = vmatmul.f32.gmra.mxu0 %v1009
  %v1011 = vpop.f32.mrf.mxu0
  %v1012 = vadd.f32 %v979, %v1011
  %1013 = vdwg.mxu0
  %1014 = vmatpush.msra.mxu0 0.0
  %1015 = vmatpush.msra.mxu0 0.0
  %1016 = vmatpush.msra.mxu0 0.0
  %1017 = vmatpush.msra.mxu0 0.0
  %1018 = vmatpush.msra.mxu0 0.0
  %1019 = vmatpush.msra.mxu0 0.0
  %1020 = vmatpush.msra.mxu0 0.0
  %1021 = vmatpush.msra.mxu0 0.0
  %1022 = vmatpush.msra.mxu0 0.0
  %1023 = vmatpush.msra.mxu0 0.0
  %1024 = vmatpush.msra.mxu0 0.0
  %1025 = vmatpush.msra.mxu0 0.0
  %v1026 = vand.u32 %v469, 4294901760
  %1027 = vmatpush.msra.mxu0 %v1026
  %v1028 = vand.u32 %v465, 4294901760
  %1029 = vmatpush.msra.mxu0 %v1028
  %v1030 = vand.u32 %v461, 4294901760
  %1031 = vmatpush.msra.mxu0 %v1030
  %v1032 = vand.u32 %v457, 4294901760
  %1033 = vmatpush.msra.mxu0 %v1032
  %v1034 = vand.u32 %v482, 4294901760
  %1035 = vmatmul.f32.gmra.mxu0 %v1034
  %v1036 = vpop.f32.mrf.mxu0
  %v1037 = vadd.f32 %v1012, %v1036
  %1038 = vdwg.mxu0
  %1039 = vmatpush.msra.mxu0 0.0
  %1040 = vmatpush.msra.mxu0 0.0
  %1041 = vmatpush.msra.mxu0 0.0
  %1042 = vmatpush.msra.mxu0 0.0
  %1043 = vmatpush.msra.mxu0 0.0
  %1044 = vmatpush.msra.mxu0 0.0
  %1045 = vmatpush.msra.mxu0 0.0
  %1046 = vmatpush.msra.mxu0 0.0
  %1047 = vmatpush.msra.mxu0 0.0
  %1048 = vmatpush.msra.mxu0 0.0
  %1049 = vmatpush.msra.mxu0 0.0
  %1050 = vmatpush.msra.mxu0 0.0
  %v1051 = vand.u32 %v470, 4294901760
  %1052 = vmatpush.msra.mxu0 %v1051
  %v1053 = vand.u32 %v466, 4294901760
  %1054 = vmatpush.msra.mxu0 %v1053
  %v1055 = vand.u32 %v462, 4294901760
  %1056 = vmatpush.msra.mxu0 %v1055
  %v1057 = vand.u32 %v458, 4294901760
  %1058 = vmatpush.msra.mxu0 %v1057
  %v1059 = vand.u32 %v482, 4294901760
  %v1060 = vsub.f32 %v482, %v1059
  %v1061 = vand.u32 %v1060, 4294901760
  %v1062 = vsub.f32 %v1060, %v1061
  %v1063 = vand.u32 %v1062, 4294901760
  %1064 = vmatmul.f32.gmra.mxu0 %v1063
  %v1065 = vpop.f32.mrf.mxu0
  %v1066 = vadd.f32 %v476, %v1065
  %1067 = vdwg.mxu0
  %1068 = vmatpush.msra.mxu0 0.0
  %1069 = vmatpush.msra.mxu0 0.0
  %1070 = vmatpush.msra.mxu0 0.0
  %1071 = vmatpush.msra.mxu0 0.0
  %1072 = vmatpush.msra.mxu0 0.0
  %1073 = vmatpush.msra.mxu0 0.0
  %1074 = vmatpush.msra.mxu0 0.0
  %1075 = vmatpush.msra.mxu0 0.0
  %1076 = vmatpush.msra.mxu0 0.0
  %1077 = vmatpush.msra.mxu0 0.0
  %1078 = vmatpush.msra.mxu0 0.0
  %1079 = vmatpush.msra.mxu0 0.0
  %v1080 = vand.u32 %v470, 4294901760
  %v1081 = vsub.f32 %v470, %v1080
  %v1082 = vand.u32 %v1081, 4294901760
  %v1083 = vsub.f32 %v1081, %v1082
  %v1084 = vand.u32 %v1083, 4294901760
  %1085 = vmatpush.msra.mxu0 %v1084
  %v1086 = vand.u32 %v466, 4294901760
  %v1087 = vsub.f32 %v466, %v1086
  %v1088 = vand.u32 %v1087, 4294901760
  %v1089 = vsub.f32 %v1087, %v1088
  %v1090 = vand.u32 %v1089, 4294901760
  %1091 = vmatpush.msra.mxu0 %v1090
  %v1092 = vand.u32 %v462, 4294901760
  %v1093 = vsub.f32 %v462, %v1092
  %v1094 = vand.u32 %v1093, 4294901760
  %v1095 = vsub.f32 %v1093, %v1094
  %v1096 = vand.u32 %v1095, 4294901760
  %1097 = vmatpush.msra.mxu0 %v1096
  %v1098 = vand.u32 %v458, 4294901760
  %v1099 = vsub.f32 %v458, %v1098
  %v1100 = vand.u32 %v1099, 4294901760
  %v1101 = vsub.f32 %v1099, %v1100
  %v1102 = vand.u32 %v1101, 4294901760
  %1103 = vmatpush.msra.mxu0 %v1102
  %v1104 = vand.u32 %v482, 4294901760
  %1105 = vmatmul.f32.gmra.mxu0 %v1104
  %v1106 = vpop.f32.mrf.mxu0
  %v1107 = vadd.f32 %v1066, %v1106
  %1108 = vdwg.mxu0
  %1109 = vmatpush.msra.mxu0 0.0
  %1110 = vmatpush.msra.mxu0 0.0
  %1111 = vmatpush.msra.mxu0 0.0
  %1112 = vmatpush.msra.mxu0 0.0
  %1113 = vmatpush.msra.mxu0 0.0
  %1114 = vmatpush.msra.mxu0 0.0
  %1115 = vmatpush.msra.mxu0 0.0
  %1116 = vmatpush.msra.mxu0 0.0
  %1117 = vmatpush.msra.mxu0 0.0
  %1118 = vmatpush.msra.mxu0 0.0
  %1119 = vmatpush.msra.mxu0 0.0
  %1120 = vmatpush.msra.mxu0 0.0
  %v1121 = vand.u32 %v470, 4294901760
  %v1122 = vsub.f32 %v470, %v1121
  %1123 = vmatpush.msra.mxu0 %v1122
  %v1124 = vand.u32 %v466, 4294901760
  %v1125 = vsub.f32 %v466, %v1124
  %1126 = vmatpush.msra.mxu0 %v1125
  %v1127 = vand.u32 %v462, 4294901760
  %v1128 = vsub.f32 %v462, %v1127
  %1129 = vmatpush.msra.mxu0 %v1128
  %v1130 = vand.u32 %v458, 4294901760
  %v1131 = vsub.f32 %v458, %v1130
  %1132 = vmatpush.msra.mxu0 %v1131
  %v1133 = vand.u32 %v482, 4294901760
  %v1134 = vsub.f32 %v482, %v1133
  %1135 = vmatmul.f32.gmra.mxu0 %v1134
  %v1136 = vpop.f32.mrf.mxu0
  %v1137 = vadd.f32 %v1107, %v1136
  %1138 = vdwg.mxu0
  %1139 = vmatpush.msra.mxu0 0.0
  %1140 = vmatpush.msra.mxu0 0.0
  %1141 = vmatpush.msra.mxu0 0.0
  %1142 = vmatpush.msra.mxu0 0.0
  %1143 = vmatpush.msra.mxu0 0.0
  %1144 = vmatpush.msra.mxu0 0.0
  %1145 = vmatpush.msra.mxu0 0.0
  %1146 = vmatpush.msra.mxu0 0.0
  %1147 = vmatpush.msra.mxu0 0.0
  %1148 = vmatpush.msra.mxu0 0.0
  %1149 = vmatpush.msra.mxu0 0.0
  %1150 = vmatpush.msra.mxu0 0.0
  %v1151 = vand.u32 %v470, 4294901760
  %1152 = vmatpush.msra.mxu0 %v1151
  %v1153 = vand.u32 %v466, 4294901760
  %1154 = vmatpush.msra.mxu0 %v1153
  %v1155 = vand.u32 %v462, 4294901760
  %1156 = vmatpush.msra.mxu0 %v1155
  %v1157 = vand.u32 %v458, 4294901760
  %1158 = vmatpush.msra.mxu0 %v1157
  %v1159 = vand.u32 %v482, 4294901760
  %v1160 = vsub.f32 %v482, %v1159
  %v1161 = vand.u32 %v1160, 4294901760
  %1162 = vmatmul.f32.gmra.mxu0 %v1161
  %v1163 = vpop.f32.mrf.mxu0
  %v1164 = vadd.f32 %v1137, %v1163
  %1165 = vdwg.mxu0
  %1166 = vmatpush.msra.mxu0 0.0
  %1167 = vmatpush.msra.mxu0 0.0
  %1168 = vmatpush.msra.mxu0 0.0
  %1169 = vmatpush.msra.mxu0 0.0
  %1170 = vmatpush.msra.mxu0 0.0
  %1171 = vmatpush.msra.mxu0 0.0
  %1172 = vmatpush.msra.mxu0 0.0
  %1173 = vmatpush.msra.mxu0 0.0
  %1174 = vmatpush.msra.mxu0 0.0
  %1175 = vmatpush.msra.mxu0 0.0
  %1176 = vmatpush.msra.mxu0 0.0
  %1177 = vmatpush.msra.mxu0 0.0
  %v1178 = vand.u32 %v470, 4294901760
  %v1179 = vsub.f32 %v470, %v1178
  %v1180 = vand.u32 %v1179, 4294901760
  %1181 = vmatpush.msra.mxu0 %v1180
  %v1182 = vand.u32 %v466, 4294901760
  %v1183 = vsub.f32 %v466, %v1182
  %v1184 = vand.u32 %v1183, 4294901760
  %1185 = vmatpush.msra.mxu0 %v1184
  %v1186 = vand.u32 %v462, 4294901760
  %v1187 = vsub.f32 %v462, %v1186
  %v1188 = vand.u32 %v1187, 4294901760
  %1189 = vmatpush.msra.mxu0 %v1188
  %v1190 = vand.u32 %v458, 4294901760
  %v1191 = vsub.f32 %v458, %v1190
  %v1192 = vand.u32 %v1191, 4294901760
  %1193 = vmatpush.msra.mxu0 %v1192
  %v1194 = vand.u32 %v482, 4294901760
  %1195 = vmatmul.f32.gmra.mxu0 %v1194
  %v1196 = vpop.f32.mrf.mxu0
  %v1197 = vadd.f32 %v1164, %v1196
  %1198 = vdwg.mxu0
  %1199 = vmatpush.msra.mxu0 0.0
  %1200 = vmatpush.msra.mxu0 0.0
  %1201 = vmatpush.msra.mxu0 0.0
  %1202 = vmatpush.msra.mxu0 0.0
  %1203 = vmatpush.msra.mxu0 0.0
  %1204 = vmatpush.msra.mxu0 0.0
  %1205 = vmatpush.msra.mxu0 0.0
  %1206 = vmatpush.msra.mxu0 0.0
  %1207 = vmatpush.msra.mxu0 0.0
  %1208 = vmatpush.msra.mxu0 0.0
  %1209 = vmatpush.msra.mxu0 0.0
  %1210 = vmatpush.msra.mxu0 0.0
  %v1211 = vand.u32 %v470, 4294901760
  %1212 = vmatpush.msra.mxu0 %v1211
  %v1213 = vand.u32 %v466, 4294901760
  %1214 = vmatpush.msra.mxu0 %v1213
  %v1215 = vand.u32 %v462, 4294901760
  %1216 = vmatpush.msra.mxu0 %v1215
  %v1217 = vand.u32 %v458, 4294901760
  %1218 = vmatpush.msra.mxu0 %v1217
  %v1219 = vand.u32 %v482, 4294901760
  %1220 = vmatmul.f32.gmra.mxu0 %v1219
  %v1221 = vpop.f32.mrf.mxu0
  %v1222 = vadd.f32 %v1197, %v1221
  %1223 = vdwg.mxu0
  %v1224 = vmul.f32 %v667, 0.5
  %v1225 = vmul.f32 %v852, 0.5
  %v1226 = vmul.f32 %v1037, 0.5
  %v1227 = vmul.f32 %v1222, 0.5
  %v1228 = vtanh.pop %v1224
  %v1229 = vtanh.pop %v1225
  %v1230 = vtanh.pop %v1226
  %v1231 = vtanh.pop %v1227
  %v1232 = vmul.f32 %v1228, 0.5
  %v1233 = vmul.f32 %v1229, 0.5
  %v1234 = vmul.f32 %v1230, 0.5
  %v1235 = vmul.f32 %v1231, 0.5
  %v1236 = vadd.f32 %v1232, 0.5
  %v1237 = vadd.f32 %v1233, 0.5
  %v1238 = vadd.f32 %v1234, 0.5
  %v1239 = vadd.f32 %v1235, 0.5
  %v1240 = vld [vmem:[%s6] sm:$0xff]
  %v1241 = vld [vmem:[%s6 + $0x8] sm:$0xff]
  %v1242 = vld [vmem:[%s6 + $0x10] sm:$0xff]
  %v1243 = vld [vmem:[%s6 + $0x18] sm:$0xff]
  %v1244 = vld [vmem:[%s6 + $0x20] sm:$0xff]
  %v1245 = vld [vmem:[%s6 + $0x28] sm:$0xff]
  %v1246 = vld [vmem:[%s6 + $0x30] sm:$0xff]
  %v1247 = vld [vmem:[%s6 + $0x38] sm:$0xff]
  %v1248 = vld [vmem:[%s6 + $0x40] sm:$0xff]
  %v1249 = vld [vmem:[%s6 + $0x48] sm:$0xff]
  %v1250 = vld [vmem:[%s6 + $0x50] sm:$0xff]
  %v1251 = vld [vmem:[%s6 + $0x58] sm:$0xff]
  %v1252 = vld [vmem:[%s6 + $0x60] sm:$0xff]
  %v1253 = vld [vmem:[%s6 + $0x68] sm:$0xff]
  %v1254 = vld [vmem:[%s6 + $0x70] sm:$0xff]
  %v1255 = vld [vmem:[%s6 + $0x78] sm:$0xff]
  %v1256 = vld [vmem:[%s6 + $0x80] sm:$0xff]
  %v1257 = vld [vmem:[%s6 + $0x88] sm:$0xff]
  %v1258 = vld [vmem:[%s6 + $0x90] sm:$0xff]
  %v1259 = vld [vmem:[%s6 + $0x98] sm:$0xff]
  %v1260 = vld [vmem:[%s6 + $0xa0] sm:$0xff]
  %v1261 = vld [vmem:[%s6 + $0xa8] sm:$0xff]
  %v1262 = vld [vmem:[%s6 + $0xb0] sm:$0xff]
  %v1263 = vld [vmem:[%s6 + $0xb8] sm:$0xff]
  %v1264 = vld [vmem:[%s6 + $0xc0] sm:$0xff]
  %v1265 = vld [vmem:[%s6 + $0xc8] sm:$0xff]
  %v1266 = vld [vmem:[%s6 + $0xd0] sm:$0xff]
  %v1267 = vld [vmem:[%s6 + $0xd8] sm:$0xff]
  %v1268 = vld [vmem:[%s6 + $0xe0] sm:$0xff]
  %v1269 = vld [vmem:[%s6 + $0xe8] sm:$0xff]
  %v1270 = vld [vmem:[%s6 + $0xf0] sm:$0xff]
  %v1271 = vld [vmem:[%s6 + $0xf8] sm:$0xff]
  %v1272 = vld [vmem:[%s6 + $0x100] sm:$0xff]
  %v1273 = vld [vmem:[%s6 + $0x108] sm:$0xff]
  %v1274 = vld [vmem:[%s6 + $0x110] sm:$0xff]
  %v1275 = vld [vmem:[%s6 + $0x118] sm:$0xff]
  %v1276 = vld [vmem:[%s6 + $0x120] sm:$0xff]
  %v1277 = vld [vmem:[%s6 + $0x128] sm:$0xff]
  %v1278 = vld [vmem:[%s6 + $0x130] sm:$0xff]
  %v1279 = vld [vmem:[%s6 + $0x138] sm:$0xff]
  %v1280 = vld [vmem:[%s6 + $0x140] sm:$0xff]
  %v1281 = vld [vmem:[%s6 + $0x148] sm:$0xff]
  %v1282 = vld [vmem:[%s6 + $0x150] sm:$0xff]
  %v1283 = vld [vmem:[%s6 + $0x158] sm:$0xff]
  %v1284 = vld [vmem:[%s6 + $0x160] sm:$0xff]
  %v1285 = vld [vmem:[%s6 + $0x168] sm:$0xff]
  %v1286 = vld [vmem:[%s6 + $0x170] sm:$0xff]
  %v1287 = vld [vmem:[%s6 + $0x178] sm:$0xff]
  %v1288 = vld [vmem:[%s6 + $0x180] sm:$0xff]
  %v1289 = vld [vmem:[%s6 + $0x188] sm:$0xff]
  %v1290 = vld [vmem:[%s6 + $0x190] sm:$0xff]
  %v1291 = vld [vmem:[%s6 + $0x198] sm:$0xff]
  %v1292 = vld [vmem:[%s6 + $0x1a0] sm:$0xff]
  %v1293 = vld [vmem:[%s6 + $0x1a8] sm:$0xff]
  %v1294 = vld [vmem:[%s6 + $0x1b0] sm:$0xff]
  %v1295 = vld [vmem:[%s6 + $0x1b8] sm:$0xff]
  %v1296 = vld [vmem:[%s6 + $0x1c0] sm:$0xff]
  %v1297 = vld [vmem:[%s6 + $0x1c8] sm:$0xff]
  %v1298 = vld [vmem:[%s6 + $0x1d0] sm:$0xff]
  %v1299 = vld [vmem:[%s6 + $0x1d8] sm:$0xff]
  %v1300 = vld [vmem:[%s6 + $0x1e0] sm:$0xff]
  %v1301 = vld [vmem:[%s6 + $0x1e8] sm:$0xff]
  %v1302 = vld [vmem:[%s6 + $0x1f0] sm:$0xff]
  %v1303 = vld [vmem:[%s6 + $0x1f8] sm:$0xff]
  %v1304 = vld [vmem:[%s6 + $0x200] sm:$0xff]
  %v1305 = vld [vmem:[%s6 + $0x208] sm:$0xff]
  %v1306 = vld [vmem:[%s6 + $0x210] sm:$0xff]
  %v1307 = vld [vmem:[%s6 + $0x218] sm:$0xff]
  %v1308 = vld [vmem:[%s6 + $0x220] sm:$0xff]
  %v1309 = vld [vmem:[%s6 + $0x228] sm:$0xff]
  %v1310 = vld [vmem:[%s6 + $0x230] sm:$0xff]
  %v1311 = vld [vmem:[%s6 + $0x238] sm:$0xff]
  %v1312 = vld [vmem:[%s6 + $0x240] sm:$0xff]
  %v1313 = vld [vmem:[%s6 + $0x248] sm:$0xff]
  %v1314 = vld [vmem:[%s6 + $0x250] sm:$0xff]
  %v1315 = vld [vmem:[%s6 + $0x258] sm:$0xff]
  %v1316 = vld [vmem:[%s6 + $0x260] sm:$0xff]
  %v1317 = vld [vmem:[%s6 + $0x268] sm:$0xff]
  %v1318 = vld [vmem:[%s6 + $0x270] sm:$0xff]
  %v1319 = vld [vmem:[%s6 + $0x278] sm:$0xff]
  %v1320 = vld [vmem:[%s6 + $0x280] sm:$0xff]
  %v1321 = vld [vmem:[%s6 + $0x288] sm:$0xff]
  %v1322 = vld [vmem:[%s6 + $0x290] sm:$0xff]
  %v1323 = vld [vmem:[%s6 + $0x298] sm:$0xff]
  %v1324 = vld [vmem:[%s6 + $0x2a0] sm:$0xff]
  %v1325 = vld [vmem:[%s6 + $0x2a8] sm:$0xff]
  %v1326 = vld [vmem:[%s6 + $0x2b0] sm:$0xff]
  %v1327 = vld [vmem:[%s6 + $0x2b8] sm:$0xff]
  %v1328 = vld [vmem:[%s6 + $0x2c0] sm:$0xff]
  %v1329 = vld [vmem:[%s6 + $0x2c8] sm:$0xff]
  %v1330 = vld [vmem:[%s6 + $0x2d0] sm:$0xff]
  %v1331 = vld [vmem:[%s6 + $0x2d8] sm:$0xff]
  %v1332 = vld [vmem:[%s6 + $0x2e0] sm:$0xff]
  %v1333 = vld [vmem:[%s6 + $0x2e8] sm:$0xff]
  %v1334 = vld [vmem:[%s6 + $0x2f0] sm:$0xff]
  %v1335 = vld [vmem:[%s6 + $0x2f8] sm:$0xff]
  %v1336 = vld [vmem:[%s6 + $0x300] sm:$0xff]
  %v1337 = vld [vmem:[%s6 + $0x308] sm:$0xff]
  %v1338 = vld [vmem:[%s6 + $0x310] sm:$0xff]
  %v1339 = vld [vmem:[%s6 + $0x318] sm:$0xff]
  %v1340 = vld [vmem:[%s6 + $0x320] sm:$0xff]
  %v1341 = vld [vmem:[%s6 + $0x328] sm:$0xff]
  %v1342 = vld [vmem:[%s6 + $0x330] sm:$0xff]
  %v1343 = vld [vmem:[%s6 + $0x338] sm:$0xff]
  %v1344 = vld [vmem:[%s6 + $0x340] sm:$0xff]
  %v1345 = vld [vmem:[%s6 + $0x348] sm:$0xff]
  %v1346 = vld [vmem:[%s6 + $0x350] sm:$0xff]
  %v1347 = vld [vmem:[%s6 + $0x358] sm:$0xff]
  %v1348 = vld [vmem:[%s6 + $0x360] sm:$0xff]
  %v1349 = vld [vmem:[%s6 + $0x368] sm:$0xff]
  %v1350 = vld [vmem:[%s6 + $0x370] sm:$0xff]
  %v1351 = vld [vmem:[%s6 + $0x378] sm:$0xff]
  %v1352 = vld [vmem:[%s6 + $0x380] sm:$0xff]
  %v1353 = vld [vmem:[%s6 + $0x388] sm:$0xff]
  %v1354 = vld [vmem:[%s6 + $0x390] sm:$0xff]
  %v1355 = vld [vmem:[%s6 + $0x398] sm:$0xff]
  %v1356 = vld [vmem:[%s6 + $0x3a0] sm:$0xff]
  %v1357 = vld [vmem:[%s6 + $0x3a8] sm:$0xff]
  %v1358 = vld [vmem:[%s6 + $0x3b0] sm:$0xff]
  %v1359 = vld [vmem:[%s6 + $0x3b8] sm:$0xff]
  %v1360 = vld [vmem:[%s6 + $0x3c0] sm:$0xff]
  %v1361 = vld [vmem:[%s6 + $0x3c8] sm:$0xff]
  %v1362 = vld [vmem:[%s6 + $0x3d0] sm:$0xff]
  %v1363 = vld [vmem:[%s6 + $0x3d8] sm:$0xff]
  %v1364 = vld [vmem:[%s6 + $0x3e0] sm:$0xff]
  %v1365 = vld [vmem:[%s6 + $0x3e8] sm:$0xff]
  %v1366 = vld [vmem:[%s6 + $0x3f0] sm:$0xff]
  %v1367 = vld [vmem:[%s6 + $0x3f8] sm:$0xff]
  %v1368 = vld [vmem:[%s7] ss:$2 sm:$0x3]
  %v1370 = vperm.slane %v1368, 0
  %v1371 = vperm.slane %v1368, 1
  %v1374 = vand.u32 %v1270, 4294901760
  %1375 = vmatpush.msra.mxu0 %v1374
  %v1376 = vand.u32 %v1268, 4294901760
  %1377 = vmatpush.msra.mxu0 %v1376
  %v1378 = vand.u32 %v1266, 4294901760
  %1379 = vmatpush.msra.mxu0 %v1378
  %v1380 = vand.u32 %v1264, 4294901760
  %1381 = vmatpush.msra.mxu0 %v1380
  %v1382 = vand.u32 %v1262, 4294901760
  %1383 = vmatpush.msra.mxu0 %v1382
  %v1384 = vand.u32 %v1260, 4294901760
  %1385 = vmatpush.msra.mxu0 %v1384
  %v1386 = vand.u32 %v1258, 4294901760
  %1387 = vmatpush.msra.mxu0 %v1386
  %v1388 = vand.u32 %v1256, 4294901760
  %1389 = vmatpush.msra.mxu0 %v1388
  %v1390 = vand.u32 %v1254, 4294901760
  %1391 = vmatpush.msra.mxu0 %v1390
  %v1392 = vand.u32 %v1252, 4294901760
  %1393 = vmatpush.msra.mxu0 %v1392
  %v1394 = vand.u32 %v1250, 4294901760
  %1395 = vmatpush.msra.mxu0 %v1394
  %v1396 = vand.u32 %v1248, 4294901760
  %1397 = vmatpush.msra.mxu0 %v1396
  %v1398 = vand.u32 %v1246, 4294901760
  %1399 = vmatpush.msra.mxu0 %v1398
  %v1400 = vand.u32 %v1244, 4294901760
  %1401 = vmatpush.msra.mxu0 %v1400
  %v1402 = vand.u32 %v1242, 4294901760
  %1403 = vmatpush.msra.mxu0 %v1402
  %v1404 = vand.u32 %v1240, 4294901760
  %1405 = vmatpush.msra.mxu0 %v1404
  %v1406 = vand.u32 %v1236, 4294901760
  %v1407 = vsub.f32 %v1236, %v1406
  %v1408 = vand.u32 %v1407, 4294901760
  %v1409 = vsub.f32 %v1407, %v1408
  %v1410 = vand.u32 %v1409, 4294901760
  %1411 = vmatmul.f32.gmra.mxu0 %v1410
  %v1412 = vpop.f32.mrf.mxu0
  %v1413 = vadd.f32 %v1370, %v1412
  %1414 = vdwg.mxu0
  %v1415 = vand.u32 %v1270, 4294901760
  %v1416 = vsub.f32 %v1270, %v1415
  %v1417 = vand.u32 %v1416, 4294901760
  %v1418 = vsub.f32 %v1416, %v1417
  %v1419 = vand.u32 %v1418, 4294901760
  %1420 = vmatpush.msra.mxu0 %v1419
  %v1421 = vand.u32 %v1268, 4294901760
  %v1422 = vsub.f32 %v1268, %v1421
  %v1423 = vand.u32 %v1422, 4294901760
  %v1424 = vsub.f32 %v1422, %v1423
  %v1425 = vand.u32 %v1424, 4294901760
  %1426 = vmatpush.msra.mxu0 %v1425
  %v1427 = vand.u32 %v1266, 4294901760
  %v1428 = vsub.f32 %v1266, %v1427
  %v1429 = vand.u32 %v1428, 4294901760
  %v1430 = vsub.f32 %v1428, %v1429
  %v1431 = vand.u32 %v1430, 4294901760
  %1432 = vmatpush.msra.mxu0 %v1431
  %v1433 = vand.u32 %v1264, 4294901760
  %v1434 = vsub.f32 %v1264, %v1433
  %v1435 = vand.u32 %v1434, 4294901760
  %v1436 = vsub.f32 %v1434, %v1435
  %v1437 = vand.u32 %v1436, 4294901760
  %1438 = vmatpush.msra.mxu0 %v1437
  %v1439 = vand.u32 %v1262, 4294901760
  %v1440 = vsub.f32 %v1262, %v1439
  %v1441 = vand.u32 %v1440, 4294901760
  %v1442 = vsub.f32 %v1440, %v1441
  %v1443 = vand.u32 %v1442, 4294901760
  %1444 = vmatpush.msra.mxu0 %v1443
  %v1445 = vand.u32 %v1260, 4294901760
  %v1446 = vsub.f32 %v1260, %v1445
  %v1447 = vand.u32 %v1446, 4294901760
  %v1448 = vsub.f32 %v1446, %v1447
  %v1449 = vand.u32 %v1448, 4294901760
  %1450 = vmatpush.msra.mxu0 %v1449
  %v1451 = vand.u32 %v1258, 4294901760
  %v1452 = vsub.f32 %v1258, %v1451
  %v1453 = vand.u32 %v1452, 4294901760
  %v1454 = vsub.f32 %v1452, %v1453
  %v1455 = vand.u32 %v1454, 4294901760
  %1456 = vmatpush.msra.mxu0 %v1455
  %v1457 = vand.u32 %v1256, 4294901760
  %v1458 = vsub.f32 %v1256, %v1457
  %v1459 = vand.u32 %v1458, 4294901760
  %v1460 = vsub.f32 %v1458, %v1459
  %v1461 = vand.u32 %v1460, 4294901760
  %1462 = vmatpush.msra.mxu0 %v1461
  %v1463 = vand.u32 %v1254, 4294901760
  %v1464 = vsub.f32 %v1254, %v1463
  %v1465 = vand.u32 %v1464, 4294901760
  %v1466 = vsub.f32 %v1464, %v1465
  %v1467 = vand.u32 %v1466, 4294901760
  %1468 = vmatpush.msra.mxu0 %v1467
  %v1469 = vand.u32 %v1252, 4294901760
  %v1470 = vsub.f32 %v1252, %v1469
  %v1471 = vand.u32 %v1470, 4294901760
  %v1472 = vsub.f32 %v1470, %v1471
  %v1473 = vand.u32 %v1472, 4294901760
  %1474 = vmatpush.msra.mxu0 %v1473
  %v1475 = vand.u32 %v1250, 4294901760
  %v1476 = vsub.f32 %v1250, %v1475
  %v1477 = vand.u32 %v1476, 4294901760
  %v1478 = vsub.f32 %v1476, %v1477
  %v1479 = vand.u32 %v1478, 4294901760
  %1480 = vmatpush.msra.mxu0 %v1479
  %v1481 = vand.u32 %v1248, 4294901760
  %v1482 = vsub.f32 %v1248, %v1481
  %v1483 = vand.u32 %v1482, 4294901760
  %v1484 = vsub.f32 %v1482, %v1483
  %v1485 = vand.u32 %v1484, 4294901760
  %1486 = vmatpush.msra.mxu0 %v1485
  %v1487 = vand.u32 %v1246, 4294901760
  %v1488 = vsub.f32 %v1246, %v1487
  %v1489 = vand.u32 %v1488, 4294901760
  %v1490 = vsub.f32 %v1488, %v1489
  %v1491 = vand.u32 %v1490, 4294901760
  %1492 = vmatpush.msra.mxu0 %v1491
  %v1493 = vand.u32 %v1244, 4294901760
  %v1494 = vsub.f32 %v1244, %v1493
  %v1495 = vand.u32 %v1494, 4294901760
  %v1496 = vsub.f32 %v1494, %v1495
  %v1497 = vand.u32 %v1496, 4294901760
  %1498 = vmatpush.msra.mxu0 %v1497
  %v1499 = vand.u32 %v1242, 4294901760
  %v1500 = vsub.f32 %v1242, %v1499
  %v1501 = vand.u32 %v1500, 4294901760
  %v1502 = vsub.f32 %v1500, %v1501
  %v1503 = vand.u32 %v1502, 4294901760
  %1504 = vmatpush.msra.mxu0 %v1503
  %v1505 = vand.u32 %v1240, 4294901760
  %v1506 = vsub.f32 %v1240, %v1505
  %v1507 = vand.u32 %v1506, 4294901760
  %v1508 = vsub.f32 %v1506, %v1507
  %v1509 = vand.u32 %v1508, 4294901760
  %1510 = vmatpush.msra.mxu0 %v1509
  %v1511 = vand.u32 %v1236, 4294901760
  %1512 = vmatmul.f32.gmra.mxu0 %v1511
  %v1513 = vpop.f32.mrf.mxu0
  %v1514 = vadd.f32 %v1413, %v1513
  %1515 = vdwg.mxu0
  %v1516 = vand.u32 %v1270, 4294901760
  %v1517 = vsub.f32 %v1270, %v1516
  %1518 = vmatpush.msra.mxu0 %v1517
  %v1519 = vand.u32 %v1268, 4294901760
  %v1520 = vsub.f32 %v1268, %v1519
  %1521 = vmatpush.msra.mxu0 %v1520
  %v1522 = vand.u32 %v1266, 4294901760
  %v1523 = vsub.f32 %v1266, %v1522
  %1524 = vmatpush.msra.mxu0 %v1523
  %v1525 = vand.u32 %v1264, 4294901760
  %v1526 = vsub.f32 %v1264, %v1525
  %1527 = vmatpush.msra.mxu0 %v1526
  %v1528 = vand.u32 %v1262, 4294901760
  %v1529 = vsub.f32 %v1262, %v1528
  %1530 = vmatpush.msra.mxu0 %v1529
  %v1531 = vand.u32 %v1260, 4294901760
  %v1532 = vsub.f32 %v1260, %v1531
  %1533 = vmatpush.msra.mxu0 %v1532
  %v1534 = vand.u32 %v1258, 4294901760
  %v1535 = vsub.f32 %v1258, %v1534
  %1536 = vmatpush.msra.mxu0 %v1535
  %v1537 = vand.u32 %v1256, 4294901760
  %v1538 = vsub.f32 %v1256, %v1537
  %1539 = vmatpush.msra.mxu0 %v1538
  %v1540 = vand.u32 %v1254, 4294901760
  %v1541 = vsub.f32 %v1254, %v1540
  %1542 = vmatpush.msra.mxu0 %v1541
  %v1543 = vand.u32 %v1252, 4294901760
  %v1544 = vsub.f32 %v1252, %v1543
  %1545 = vmatpush.msra.mxu0 %v1544
  %v1546 = vand.u32 %v1250, 4294901760
  %v1547 = vsub.f32 %v1250, %v1546
  %1548 = vmatpush.msra.mxu0 %v1547
  %v1549 = vand.u32 %v1248, 4294901760
  %v1550 = vsub.f32 %v1248, %v1549
  %1551 = vmatpush.msra.mxu0 %v1550
  %v1552 = vand.u32 %v1246, 4294901760
  %v1553 = vsub.f32 %v1246, %v1552
  %1554 = vmatpush.msra.mxu0 %v1553
  %v1555 = vand.u32 %v1244, 4294901760
  %v1556 = vsub.f32 %v1244, %v1555
  %1557 = vmatpush.msra.mxu0 %v1556
  %v1558 = vand.u32 %v1242, 4294901760
  %v1559 = vsub.f32 %v1242, %v1558
  %1560 = vmatpush.msra.mxu0 %v1559
  %v1561 = vand.u32 %v1240, 4294901760
  %v1562 = vsub.f32 %v1240, %v1561
  %1563 = vmatpush.msra.mxu0 %v1562
  %v1564 = vand.u32 %v1236, 4294901760
  %v1565 = vsub.f32 %v1236, %v1564
  %1566 = vmatmul.f32.gmra.mxu0 %v1565
  %v1567 = vpop.f32.mrf.mxu0
  %v1568 = vadd.f32 %v1514, %v1567
  %1569 = vdwg.mxu0
  %v1570 = vand.u32 %v1270, 4294901760
  %1571 = vmatpush.msra.mxu0 %v1570
  %v1572 = vand.u32 %v1268, 4294901760
  %1573 = vmatpush.msra.mxu0 %v1572
  %v1574 = vand.u32 %v1266, 4294901760
  %1575 = vmatpush.msra.mxu0 %v1574
  %v1576 = vand.u32 %v1264, 4294901760
  %1577 = vmatpush.msra.mxu0 %v1576
  %v1578 = vand.u32 %v1262, 4294901760
  %1579 = vmatpush.msra.mxu0 %v1578
  %v1580 = vand.u32 %v1260, 4294901760
  %1581 = vmatpush.msra.mxu0 %v1580
  %v1582 = vand.u32 %v1258, 4294901760
  %1583 = vmatpush.msra.mxu0 %v1582
  %v1584 = vand.u32 %v1256, 4294901760
  %1585 = vmatpush.msra.mxu0 %v1584
  %v1586 = vand.u32 %v1254, 4294901760
  %1587 = vmatpush.msra.mxu0 %v1586
  %v1588 = vand.u32 %v1252, 4294901760
  %1589 = vmatpush.msra.mxu0 %v1588
  %v1590 = vand.u32 %v1250, 4294901760
  %1591 = vmatpush.msra.mxu0 %v1590
  %v1592 = vand.u32 %v1248, 4294901760
  %1593 = vmatpush.msra.mxu0 %v1592
  %v1594 = vand.u32 %v1246, 4294901760
  %1595 = vmatpush.msra.mxu0 %v1594
  %v1596 = vand.u32 %v1244, 4294901760
  %1597 = vmatpush.msra.mxu0 %v1596
  %v1598 = vand.u32 %v1242, 4294901760
  %1599 = vmatpush.msra.mxu0 %v1598
  %v1600 = vand.u32 %v1240, 4294901760
  %1601 = vmatpush.msra.mxu0 %v1600
  %v1602 = vand.u32 %v1236, 4294901760
  %v1603 = vsub.f32 %v1236, %v1602
  %v1604 = vand.u32 %v1603, 4294901760
  %1605 = vmatmul.f32.gmra.mxu0 %v1604
  %v1606 = vpop.f32.mrf.mxu0
  %v1607 = vadd.f32 %v1568, %v1606
  %1608 = vdwg.mxu0
  %v1609 = vand.u32 %v1270, 4294901760
  %v1610 = vsub.f32 %v1270, %v1609
  %v1611 = vand.u32 %v1610, 4294901760
  %1612 = vmatpush.msra.mxu0 %v1611
  %v1613 = vand.u32 %v1268, 4294901760
  %v1614 = vsub.f32 %v1268, %v1613
  %v1615 = vand.u32 %v1614, 4294901760
  %1616 = vmatpush.msra.mxu0 %v1615
  %v1617 = vand.u32 %v1266, 4294901760
  %v1618 = vsub.f32 %v1266, %v1617
  %v1619 = vand.u32 %v1618, 4294901760
  %1620 = vmatpush.msra.mxu0 %v1619
  %v1621 = vand.u32 %v1264, 4294901760
  %v1622 = vsub.f32 %v1264, %v1621
  %v1623 = vand.u32 %v1622, 4294901760
  %1624 = vmatpush.msra.mxu0 %v1623
  %v1625 = vand.u32 %v1262, 4294901760
  %v1626 = vsub.f32 %v1262, %v1625
  %v1627 = vand.u32 %v1626, 4294901760
  %1628 = vmatpush.msra.mxu0 %v1627
  %v1629 = vand.u32 %v1260, 4294901760
  %v1630 = vsub.f32 %v1260, %v1629
  %v1631 = vand.u32 %v1630, 4294901760
  %1632 = vmatpush.msra.mxu0 %v1631
  %v1633 = vand.u32 %v1258, 4294901760
  %v1634 = vsub.f32 %v1258, %v1633
  %v1635 = vand.u32 %v1634, 4294901760
  %1636 = vmatpush.msra.mxu0 %v1635
  %v1637 = vand.u32 %v1256, 4294901760
  %v1638 = vsub.f32 %v1256, %v1637
  %v1639 = vand.u32 %v1638, 4294901760
  %1640 = vmatpush.msra.mxu0 %v1639
  %v1641 = vand.u32 %v1254, 4294901760
  %v1642 = vsub.f32 %v1254, %v1641
  %v1643 = vand.u32 %v1642, 4294901760
  %1644 = vmatpush.msra.mxu0 %v1643
  %v1645 = vand.u32 %v1252, 4294901760
  %v1646 = vsub.f32 %v1252, %v1645
  %v1647 = vand.u32 %v1646, 4294901760
  %1648 = vmatpush.msra.mxu0 %v1647
  %v1649 = vand.u32 %v1250, 4294901760
  %v1650 = vsub.f32 %v1250, %v1649
  %v1651 = vand.u32 %v1650, 4294901760
  %1652 = vmatpush.msra.mxu0 %v1651
  %v1653 = vand.u32 %v1248, 4294901760
  %v1654 = vsub.f32 %v1248, %v1653
  %v1655 = vand.u32 %v1654, 4294901760
  %1656 = vmatpush.msra.mxu0 %v1655
  %v1657 = vand.u32 %v1246, 4294901760
  %v1658 = vsub.f32 %v1246, %v1657
  %v1659 = vand.u32 %v1658, 4294901760
  %1660 = vmatpush.msra.mxu0 %v1659
  %v1661 = vand.u32 %v1244, 4294901760
  %v1662 = vsub.f32 %v1244, %v1661
  %v1663 = vand.u32 %v1662, 4294901760
  %1664 = vmatpush.msra.mxu0 %v1663
  %v1665 = vand.u32 %v1242, 4294901760
  %v1666 = vsub.f32 %v1242, %v1665
  %v1667 = vand.u32 %v1666, 4294901760
  %1668 = vmatpush.msra.mxu0 %v1667
  %v1669 = vand.u32 %v1240, 4294901760
  %v1670 = vsub.f32 %v1240, %v1669
  %v1671 = vand.u32 %v1670, 4294901760
  %1672 = vmatpush.msra.mxu0 %v1671
  %v1673 = vand.u32 %v1236, 4294901760
  %1674 = vmatmul.f32.gmra.mxu0 %v1673
  %v1675 = vpop.f32.mrf.mxu0
  %v1676 = vadd.f32 %v1607, %v1675
  %1677 = vdwg.mxu0
  %v1678 = vand.u32 %v1270, 4294901760
  %1679 = vmatpush.msra.mxu0 %v1678
  %v1680 = vand.u32 %v1268, 4294901760
  %1681 = vmatpush.msra.mxu0 %v1680
  %v1682 = vand.u32 %v1266, 4294901760
  %1683 = vmatpush.msra.mxu0 %v1682
  %v1684 = vand.u32 %v1264, 4294901760
  %1685 = vmatpush.msra.mxu0 %v1684
  %v1686 = vand.u32 %v1262, 4294901760
  %1687 = vmatpush.msra.mxu0 %v1686
  %v1688 = vand.u32 %v1260, 4294901760
  %1689 = vmatpush.msra.mxu0 %v1688
  %v1690 = vand.u32 %v1258, 4294901760
  %1691 = vmatpush.msra.mxu0 %v1690
  %v1692 = vand.u32 %v1256, 4294901760
  %1693 = vmatpush.msra.mxu0 %v1692
  %v1694 = vand.u32 %v1254, 4294901760
  %1695 = vmatpush.msra.mxu0 %v1694
  %v1696 = vand.u32 %v1252, 4294901760
  %1697 = vmatpush.msra.mxu0 %v1696
  %v1698 = vand.u32 %v1250, 4294901760
  %1699 = vmatpush.msra.mxu0 %v1698
  %v1700 = vand.u32 %v1248, 4294901760
  %1701 = vmatpush.msra.mxu0 %v1700
  %v1702 = vand.u32 %v1246, 4294901760
  %1703 = vmatpush.msra.mxu0 %v1702
  %v1704 = vand.u32 %v1244, 4294901760
  %1705 = vmatpush.msra.mxu0 %v1704
  %v1706 = vand.u32 %v1242, 4294901760
  %1707 = vmatpush.msra.mxu0 %v1706
  %v1708 = vand.u32 %v1240, 4294901760
  %1709 = vmatpush.msra.mxu0 %v1708
  %v1710 = vand.u32 %v1236, 4294901760
  %1711 = vmatmul.f32.gmra.mxu0 %v1710
  %v1712 = vpop.f32.mrf.mxu0
  %v1713 = vadd.f32 %v1676, %v1712
  %1714 = vdwg.mxu0
  %v1715 = vand.u32 %v1302, 4294901760
  %1716 = vmatpush.msra.mxu0 %v1715
  %v1717 = vand.u32 %v1300, 4294901760
  %1718 = vmatpush.msra.mxu0 %v1717
  %v1719 = vand.u32 %v1298, 4294901760
  %1720 = vmatpush.msra.mxu0 %v1719
  %v1721 = vand.u32 %v1296, 4294901760
  %1722 = vmatpush.msra.mxu0 %v1721
  %v1723 = vand.u32 %v1294, 4294901760
  %1724 = vmatpush.msra.mxu0 %v1723
  %v1725 = vand.u32 %v1292, 4294901760
  %1726 = vmatpush.msra.mxu0 %v1725
  %v1727 = vand.u32 %v1290, 4294901760
  %1728 = vmatpush.msra.mxu0 %v1727
  %v1729 = vand.u32 %v1288, 4294901760
  %1730 = vmatpush.msra.mxu0 %v1729
  %v1731 = vand.u32 %v1286, 4294901760
  %1732 = vmatpush.msra.mxu0 %v1731
  %v1733 = vand.u32 %v1284, 4294901760
  %1734 = vmatpush.msra.mxu0 %v1733
  %v1735 = vand.u32 %v1282, 4294901760
  %1736 = vmatpush.msra.mxu0 %v1735
  %v1737 = vand.u32 %v1280, 4294901760
  %1738 = vmatpush.msra.mxu0 %v1737
  %v1739 = vand.u32 %v1278, 4294901760
  %1740 = vmatpush.msra.mxu0 %v1739
  %v1741 = vand.u32 %v1276, 4294901760
  %1742 = vmatpush.msra.mxu0 %v1741
  %v1743 = vand.u32 %v1274, 4294901760
  %1744 = vmatpush.msra.mxu0 %v1743
  %v1745 = vand.u32 %v1272, 4294901760
  %1746 = vmatpush.msra.mxu0 %v1745
  %v1747 = vand.u32 %v1237, 4294901760
  %v1748 = vsub.f32 %v1237, %v1747
  %v1749 = vand.u32 %v1748, 4294901760
  %v1750 = vsub.f32 %v1748, %v1749
  %v1751 = vand.u32 %v1750, 4294901760
  %1752 = vmatmul.f32.gmra.mxu0 %v1751
  %v1753 = vpop.f32.mrf.mxu0
  %v1754 = vadd.f32 %v1713, %v1753
  %1755 = vdwg.mxu0
  %v1756 = vand.u32 %v1302, 4294901760
  %v1757 = vsub.f32 %v1302, %v1756
  %v1758 = vand.u32 %v1757, 4294901760
  %v1759 = vsub.f32 %v1757, %v1758
  %v1760 = vand.u32 %v1759, 4294901760
  %1761 = vmatpush.msra.mxu0 %v1760
  %v1762 = vand.u32 %v1300, 4294901760
  %v1763 = vsub.f32 %v1300, %v1762
  %v1764 = vand.u32 %v1763, 4294901760
  %v1765 = vsub.f32 %v1763, %v1764
  %v1766 = vand.u32 %v1765, 4294901760
  %1767 = vmatpush.msra.mxu0 %v1766
  %v1768 = vand.u32 %v1298, 4294901760
  %v1769 = vsub.f32 %v1298, %v1768
  %v1770 = vand.u32 %v1769, 4294901760
  %v1771 = vsub.f32 %v1769, %v1770
  %v1772 = vand.u32 %v1771, 4294901760
  %1773 = vmatpush.msra.mxu0 %v1772
  %v1774 = vand.u32 %v1296, 4294901760
  %v1775 = vsub.f32 %v1296, %v1774
  %v1776 = vand.u32 %v1775, 4294901760
  %v1777 = vsub.f32 %v1775, %v1776
  %v1778 = vand.u32 %v1777, 4294901760
  %1779 = vmatpush.msra.mxu0 %v1778
  %v1780 = vand.u32 %v1294, 4294901760
  %v1781 = vsub.f32 %v1294, %v1780
  %v1782 = vand.u32 %v1781, 4294901760
  %v1783 = vsub.f32 %v1781, %v1782
  %v1784 = vand.u32 %v1783, 4294901760
  %1785 = vmatpush.msra.mxu0 %v1784
  %v1786 = vand.u32 %v1292, 4294901760
  %v1787 = vsub.f32 %v1292, %v1786
  %v1788 = vand.u32 %v1787, 4294901760
  %v1789 = vsub.f32 %v1787, %v1788
  %v1790 = vand.u32 %v1789, 4294901760
  %1791 = vmatpush.msra.mxu0 %v1790
  %v1792 = vand.u32 %v1290, 4294901760
  %v1793 = vsub.f32 %v1290, %v1792
  %v1794 = vand.u32 %v1793, 4294901760
  %v1795 = vsub.f32 %v1793, %v1794
  %v1796 = vand.u32 %v1795, 4294901760
  %1797 = vmatpush.msra.mxu0 %v1796
  %v1798 = vand.u32 %v1288, 4294901760
  %v1799 = vsub.f32 %v1288, %v1798
  %v1800 = vand.u32 %v1799, 4294901760
  %v1801 = vsub.f32 %v1799, %v1800
  %v1802 = vand.u32 %v1801, 4294901760
  %1803 = vmatpush.msra.mxu0 %v1802
  %v1804 = vand.u32 %v1286, 4294901760
  %v1805 = vsub.f32 %v1286, %v1804
  %v1806 = vand.u32 %v1805, 4294901760
  %v1807 = vsub.f32 %v1805, %v1806
  %v1808 = vand.u32 %v1807, 4294901760
  %1809 = vmatpush.msra.mxu0 %v1808
  %v1810 = vand.u32 %v1284, 4294901760
  %v1811 = vsub.f32 %v1284, %v1810
  %v1812 = vand.u32 %v1811, 4294901760
  %v1813 = vsub.f32 %v1811, %v1812
  %v1814 = vand.u32 %v1813, 4294901760
  %1815 = vmatpush.msra.mxu0 %v1814
  %v1816 = vand.u32 %v1282, 4294901760
  %v1817 = vsub.f32 %v1282, %v1816
  %v1818 = vand.u32 %v1817, 4294901760
  %v1819 = vsub.f32 %v1817, %v1818
  %v1820 = vand.u32 %v1819, 4294901760
  %1821 = vmatpush.msra.mxu0 %v1820
  %v1822 = vand.u32 %v1280, 4294901760
  %v1823 = vsub.f32 %v1280, %v1822
  %v1824 = vand.u32 %v1823, 4294901760
  %v1825 = vsub.f32 %v1823, %v1824
  %v1826 = vand.u32 %v1825, 4294901760
  %1827 = vmatpush.msra.mxu0 %v1826
  %v1828 = vand.u32 %v1278, 4294901760
  %v1829 = vsub.f32 %v1278, %v1828
  %v1830 = vand.u32 %v1829, 4294901760
  %v1831 = vsub.f32 %v1829, %v1830
  %v1832 = vand.u32 %v1831, 4294901760
  %1833 = vmatpush.msra.mxu0 %v1832
  %v1834 = vand.u32 %v1276, 4294901760
  %v1835 = vsub.f32 %v1276, %v1834
  %v1836 = vand.u32 %v1835, 4294901760
  %v1837 = vsub.f32 %v1835, %v1836
  %v1838 = vand.u32 %v1837, 4294901760
  %1839 = vmatpush.msra.mxu0 %v1838
  %v1840 = vand.u32 %v1274, 4294901760
  %v1841 = vsub.f32 %v1274, %v1840
  %v1842 = vand.u32 %v1841, 4294901760
  %v1843 = vsub.f32 %v1841, %v1842
  %v1844 = vand.u32 %v1843, 4294901760
  %1845 = vmatpush.msra.mxu0 %v1844
  %v1846 = vand.u32 %v1272, 4294901760
  %v1847 = vsub.f32 %v1272, %v1846
  %v1848 = vand.u32 %v1847, 4294901760
  %v1849 = vsub.f32 %v1847, %v1848
  %v1850 = vand.u32 %v1849, 4294901760
  %1851 = vmatpush.msra.mxu0 %v1850
  %v1852 = vand.u32 %v1237, 4294901760
  %1853 = vmatmul.f32.gmra.mxu0 %v1852
  %v1854 = vpop.f32.mrf.mxu0
  %v1855 = vadd.f32 %v1754, %v1854
  %1856 = vdwg.mxu0
  %v1857 = vand.u32 %v1302, 4294901760
  %v1858 = vsub.f32 %v1302, %v1857
  %1859 = vmatpush.msra.mxu0 %v1858
  %v1860 = vand.u32 %v1300, 4294901760
  %v1861 = vsub.f32 %v1300, %v1860
  %1862 = vmatpush.msra.mxu0 %v1861
  %v1863 = vand.u32 %v1298, 4294901760
  %v1864 = vsub.f32 %v1298, %v1863
  %1865 = vmatpush.msra.mxu0 %v1864
  %v1866 = vand.u32 %v1296, 4294901760
  %v1867 = vsub.f32 %v1296, %v1866
  %1868 = vmatpush.msra.mxu0 %v1867
  %v1869 = vand.u32 %v1294, 4294901760
  %v1870 = vsub.f32 %v1294, %v1869
  %1871 = vmatpush.msra.mxu0 %v1870
  %v1872 = vand.u32 %v1292, 4294901760
  %v1873 = vsub.f32 %v1292, %v1872
  %1874 = vmatpush.msra.mxu0 %v1873
  %v1875 = vand.u32 %v1290, 4294901760
  %v1876 = vsub.f32 %v1290, %v1875
  %1877 = vmatpush.msra.mxu0 %v1876
  %v1878 = vand.u32 %v1288, 4294901760
  %v1879 = vsub.f32 %v1288, %v1878
  %1880 = vmatpush.msra.mxu0 %v1879
  %v1881 = vand.u32 %v1286, 4294901760
  %v1882 = vsub.f32 %v1286, %v1881
  %1883 = vmatpush.msra.mxu0 %v1882
  %v1884 = vand.u32 %v1284, 4294901760
  %v1885 = vsub.f32 %v1284, %v1884
  %1886 = vmatpush.msra.mxu0 %v1885
  %v1887 = vand.u32 %v1282, 4294901760
  %v1888 = vsub.f32 %v1282, %v1887
  %1889 = vmatpush.msra.mxu0 %v1888
  %v1890 = vand.u32 %v1280, 4294901760
  %v1891 = vsub.f32 %v1280, %v1890
  %1892 = vmatpush.msra.mxu0 %v1891
  %v1893 = vand.u32 %v1278, 4294901760
  %v1894 = vsub.f32 %v1278, %v1893
  %1895 = vmatpush.msra.mxu0 %v1894
  %v1896 = vand.u32 %v1276, 4294901760
  %v1897 = vsub.f32 %v1276, %v1896
  %1898 = vmatpush.msra.mxu0 %v1897
  %v1899 = vand.u32 %v1274, 4294901760
  %v1900 = vsub.f32 %v1274, %v1899
  %1901 = vmatpush.msra.mxu0 %v1900
  %v1902 = vand.u32 %v1272, 4294901760
  %v1903 = vsub.f32 %v1272, %v1902
  %1904 = vmatpush.msra.mxu0 %v1903
  %v1905 = vand.u32 %v1237, 4294901760
  %v1906 = vsub.f32 %v1237, %v1905
  %1907 = vmatmul.f32.gmra.mxu0 %v1906
  %v1908 = vpop.f32.mrf.mxu0
  %v1909 = vadd.f32 %v1855, %v1908
  %1910 = vdwg.mxu0
  %v1911 = vand.u32 %v1302, 4294901760
  %1912 = vmatpush.msra.mxu0 %v1911
  %v1913 = vand.u32 %v1300, 4294901760
  %1914 = vmatpush.msra.mxu0 %v1913
  %v1915 = vand.u32 %v1298, 4294901760
  %1916 = vmatpush.msra.mxu0 %v1915
  %v1917 = vand.u32 %v1296, 4294901760
  %1918 = vmatpush.msra.mxu0 %v1917
  %v1919 = vand.u32 %v1294, 4294901760
  %1920 = vmatpush.msra.mxu0 %v1919
  %v1921 = vand.u32 %v1292, 4294901760
  %1922 = vmatpush.msra.mxu0 %v1921
  %v1923 = vand.u32 %v1290, 4294901760
  %1924 = vmatpush.msra.mxu0 %v1923
  %v1925 = vand.u32 %v1288, 4294901760
  %1926 = vmatpush.msra.mxu0 %v1925
  %v1927 = vand.u32 %v1286, 4294901760
  %1928 = vmatpush.msra.mxu0 %v1927
  %v1929 = vand.u32 %v1284, 4294901760
  %1930 = vmatpush.msra.mxu0 %v1929
  %v1931 = vand.u32 %v1282, 4294901760
  %1932 = vmatpush.msra.mxu0 %v1931
  %v1933 = vand.u32 %v1280, 4294901760
  %1934 = vmatpush.msra.mxu0 %v1933
  %v1935 = vand.u32 %v1278, 4294901760
  %1936 = vmatpush.msra.mxu0 %v1935
  %v1937 = vand.u32 %v1276, 4294901760
  %1938 = vmatpush.msra.mxu0 %v1937
  %v1939 = vand.u32 %v1274, 4294901760
  %1940 = vmatpush.msra.mxu0 %v1939
  %v1941 = vand.u32 %v1272, 4294901760
  %1942 = vmatpush.msra.mxu0 %v1941
  %v1943 = vand.u32 %v1237, 4294901760
  %v1944 = vsub.f32 %v1237, %v1943
  %v1945 = vand.u32 %v1944, 4294901760
  %1946 = vmatmul.f32.gmra.mxu0 %v1945
  %v1947 = vpop.f32.mrf.mxu0
  %v1948 = vadd.f32 %v1909, %v1947
  %1949 = vdwg.mxu0
  %v1950 = vand.u32 %v1302, 4294901760
  %v1951 = vsub.f32 %v1302, %v1950
  %v1952 = vand.u32 %v1951, 4294901760
  %1953 = vmatpush.msra.mxu0 %v1952
  %v1954 = vand.u32 %v1300, 4294901760
  %v1955 = vsub.f32 %v1300, %v1954
  %v1956 = vand.u32 %v1955, 4294901760
  %1957 = vmatpush.msra.mxu0 %v1956
  %v1958 = vand.u32 %v1298, 4294901760
  %v1959 = vsub.f32 %v1298, %v1958
  %v1960 = vand.u32 %v1959, 4294901760
  %1961 = vmatpush.msra.mxu0 %v1960
  %v1962 = vand.u32 %v1296, 4294901760
  %v1963 = vsub.f32 %v1296, %v1962
  %v1964 = vand.u32 %v1963, 4294901760
  %1965 = vmatpush.msra.mxu0 %v1964
  %v1966 = vand.u32 %v1294, 4294901760
  %v1967 = vsub.f32 %v1294, %v1966
  %v1968 = vand.u32 %v1967, 4294901760
  %1969 = vmatpush.msra.mxu0 %v1968
  %v1970 = vand.u32 %v1292, 4294901760
  %v1971 = vsub.f32 %v1292, %v1970
  %v1972 = vand.u32 %v1971, 4294901760
  %1973 = vmatpush.msra.mxu0 %v1972
  %v1974 = vand.u32 %v1290, 4294901760
  %v1975 = vsub.f32 %v1290, %v1974
  %v1976 = vand.u32 %v1975, 4294901760
  %1977 = vmatpush.msra.mxu0 %v1976
  %v1978 = vand.u32 %v1288, 4294901760
  %v1979 = vsub.f32 %v1288, %v1978
  %v1980 = vand.u32 %v1979, 4294901760
  %1981 = vmatpush.msra.mxu0 %v1980
  %v1982 = vand.u32 %v1286, 4294901760
  %v1983 = vsub.f32 %v1286, %v1982
  %v1984 = vand.u32 %v1983, 4294901760
  %1985 = vmatpush.msra.mxu0 %v1984
  %v1986 = vand.u32 %v1284, 4294901760
  %v1987 = vsub.f32 %v1284, %v1986
  %v1988 = vand.u32 %v1987, 4294901760
  %1989 = vmatpush.msra.mxu0 %v1988
  %v1990 = vand.u32 %v1282, 4294901760
  %v1991 = vsub.f32 %v1282, %v1990
  %v1992 = vand.u32 %v1991, 4294901760
  %1993 = vmatpush.msra.mxu0 %v1992
  %v1994 = vand.u32 %v1280, 4294901760
  %v1995 = vsub.f32 %v1280, %v1994
  %v1996 = vand.u32 %v1995, 4294901760
  %1997 = vmatpush.msra.mxu0 %v1996
  %v1998 = vand.u32 %v1278, 4294901760
  %v1999 = vsub.f32 %v1278, %v1998
  %v2000 = vand.u32 %v1999, 4294901760
  %2001 = vmatpush.msra.mxu0 %v2000
  %v2002 = vand.u32 %v1276, 4294901760
  %v2003 = vsub.f32 %v1276, %v2002
  %v2004 = vand.u32 %v2003, 4294901760
  %2005 = vmatpush.msra.mxu0 %v2004
  %v2006 = vand.u32 %v1274, 4294901760
  %v2007 = vsub.f32 %v1274, %v2006
  %v2008 = vand.u32 %v2007, 4294901760
  %2009 = vmatpush.msra.mxu0 %v2008
  %v2010 = vand.u32 %v1272, 4294901760
  %v2011 = vsub.f32 %v1272, %v2010
  %v2012 = vand.u32 %v2011, 4294901760
  %2013 = vmatpush.msra.mxu0 %v2012
  %v2014 = vand.u32 %v1237, 4294901760
  %2015 = vmatmul.f32.gmra.mxu0 %v2014
  %v2016 = vpop.f32.mrf.mxu0
  %v2017 = vadd.f32 %v1948, %v2016
  %2018 = vdwg.mxu0
  %v2019 = vand.u32 %v1302, 4294901760
  %2020 = vmatpush.msra.mxu0 %v2019
  %v2021 = vand.u32 %v1300, 4294901760
  %2022 = vmatpush.msra.mxu0 %v2021
  %v2023 = vand.u32 %v1298, 4294901760
  %2024 = vmatpush.msra.mxu0 %v2023
  %v2025 = vand.u32 %v1296, 4294901760
  %2026 = vmatpush.msra.mxu0 %v2025
  %v2027 = vand.u32 %v1294, 4294901760
  %2028 = vmatpush.msra.mxu0 %v2027
  %v2029 = vand.u32 %v1292, 4294901760
  %2030 = vmatpush.msra.mxu0 %v2029
  %v2031 = vand.u32 %v1290, 4294901760
  %2032 = vmatpush.msra.mxu0 %v2031
  %v2033 = vand.u32 %v1288, 4294901760
  %2034 = vmatpush.msra.mxu0 %v2033
  %v2035 = vand.u32 %v1286, 4294901760
  %2036 = vmatpush.msra.mxu0 %v2035
  %v2037 = vand.u32 %v1284, 4294901760
  %2038 = vmatpush.msra.mxu0 %v2037
  %v2039 = vand.u32 %v1282, 4294901760
  %2040 = vmatpush.msra.mxu0 %v2039
  %v2041 = vand.u32 %v1280, 4294901760
  %2042 = vmatpush.msra.mxu0 %v2041
  %v2043 = vand.u32 %v1278, 4294901760
  %2044 = vmatpush.msra.mxu0 %v2043
  %v2045 = vand.u32 %v1276, 4294901760
  %2046 = vmatpush.msra.mxu0 %v2045
  %v2047 = vand.u32 %v1274, 4294901760
  %2048 = vmatpush.msra.mxu0 %v2047
  %v2049 = vand.u32 %v1272, 4294901760
  %2050 = vmatpush.msra.mxu0 %v2049
  %v2051 = vand.u32 %v1237, 4294901760
  %2052 = vmatmul.f32.gmra.mxu0 %v2051
  %v2053 = vpop.f32.mrf.mxu0
  %v2054 = vadd.f32 %v2017, %v2053
  %2055 = vdwg.mxu0
  %v2056 = vand.u32 %v1334, 4294901760
  %2057 = vmatpush.msra.mxu0 %v2056
  %v2058 = vand.u32 %v1332, 4294901760
  %2059 = vmatpush.msra.mxu0 %v2058
  %v2060 = vand.u32 %v1330, 4294901760
  %2061 = vmatpush.msra.mxu0 %v2060
  %v2062 = vand.u32 %v1328, 4294901760
  %2063 = vmatpush.msra.mxu0 %v2062
  %v2064 = vand.u32 %v1326, 4294901760
  %2065 = vmatpush.msra.mxu0 %v2064
  %v2066 = vand.u32 %v1324, 4294901760
  %2067 = vmatpush.msra.mxu0 %v2066
  %v2068 = vand.u32 %v1322, 4294901760
  %2069 = vmatpush.msra.mxu0 %v2068
  %v2070 = vand.u32 %v1320, 4294901760
  %2071 = vmatpush.msra.mxu0 %v2070
  %v2072 = vand.u32 %v1318, 4294901760
  %2073 = vmatpush.msra.mxu0 %v2072
  %v2074 = vand.u32 %v1316, 4294901760
  %2075 = vmatpush.msra.mxu0 %v2074
  %v2076 = vand.u32 %v1314, 4294901760
  %2077 = vmatpush.msra.mxu0 %v2076
  %v2078 = vand.u32 %v1312, 4294901760
  %2079 = vmatpush.msra.mxu0 %v2078
  %v2080 = vand.u32 %v1310, 4294901760
  %2081 = vmatpush.msra.mxu0 %v2080
  %v2082 = vand.u32 %v1308, 4294901760
  %2083 = vmatpush.msra.mxu0 %v2082
  %v2084 = vand.u32 %v1306, 4294901760
  %2085 = vmatpush.msra.mxu0 %v2084
  %v2086 = vand.u32 %v1304, 4294901760
  %2087 = vmatpush.msra.mxu0 %v2086
  %v2088 = vand.u32 %v1238, 4294901760
  %v2089 = vsub.f32 %v1238, %v2088
  %v2090 = vand.u32 %v2089, 4294901760
  %v2091 = vsub.f32 %v2089, %v2090
  %v2092 = vand.u32 %v2091, 4294901760
  %2093 = vmatmul.f32.gmra.mxu0 %v2092
  %v2094 = vpop.f32.mrf.mxu0
  %v2095 = vadd.f32 %v2054, %v2094
  %2096 = vdwg.mxu0
  %v2097 = vand.u32 %v1334, 4294901760
  %v2098 = vsub.f32 %v1334, %v2097
  %v2099 = vand.u32 %v2098, 4294901760
  %v2100 = vsub.f32 %v2098, %v2099
  %v2101 = vand.u32 %v2100, 4294901760
  %2102 = vmatpush.msra.mxu0 %v2101
  %v2103 = vand.u32 %v1332, 4294901760
  %v2104 = vsub.f32 %v1332, %v2103
  %v2105 = vand.u32 %v2104, 4294901760
  %v2106 = vsub.f32 %v2104, %v2105
  %v2107 = vand.u32 %v2106, 4294901760
  %2108 = vmatpush.msra.mxu0 %v2107
  %v2109 = vand.u32 %v1330, 4294901760
  %v2110 = vsub.f32 %v1330, %v2109
  %v2111 = vand.u32 %v2110, 4294901760
  %v2112 = vsub.f32 %v2110, %v2111
  %v2113 = vand.u32 %v2112, 4294901760
  %2114 = vmatpush.msra.mxu0 %v2113
  %v2115 = vand.u32 %v1328, 4294901760
  %v2116 = vsub.f32 %v1328, %v2115
  %v2117 = vand.u32 %v2116, 4294901760
  %v2118 = vsub.f32 %v2116, %v2117
  %v2119 = vand.u32 %v2118, 4294901760
  %2120 = vmatpush.msra.mxu0 %v2119
  %v2121 = vand.u32 %v1326, 4294901760
  %v2122 = vsub.f32 %v1326, %v2121
  %v2123 = vand.u32 %v2122, 4294901760
  %v2124 = vsub.f32 %v2122, %v2123
  %v2125 = vand.u32 %v2124, 4294901760
  %2126 = vmatpush.msra.mxu0 %v2125
  %v2127 = vand.u32 %v1324, 4294901760
  %v2128 = vsub.f32 %v1324, %v2127
  %v2129 = vand.u32 %v2128, 4294901760
  %v2130 = vsub.f32 %v2128, %v2129
  %v2131 = vand.u32 %v2130, 4294901760
  %2132 = vmatpush.msra.mxu0 %v2131
  %v2133 = vand.u32 %v1322, 4294901760
  %v2134 = vsub.f32 %v1322, %v2133
  %v2135 = vand.u32 %v2134, 4294901760
  %v2136 = vsub.f32 %v2134, %v2135
  %v2137 = vand.u32 %v2136, 4294901760
  %2138 = vmatpush.msra.mxu0 %v2137
  %v2139 = vand.u32 %v1320, 4294901760
  %v2140 = vsub.f32 %v1320, %v2139
  %v2141 = vand.u32 %v2140, 4294901760
  %v2142 = vsub.f32 %v2140, %v2141
  %v2143 = vand.u32 %v2142, 4294901760
  %2144 = vmatpush.msra.mxu0 %v2143
  %v2145 = vand.u32 %v1318, 4294901760
  %v2146 = vsub.f32 %v1318, %v2145
  %v2147 = vand.u32 %v2146, 4294901760
  %v2148 = vsub.f32 %v2146, %v2147
  %v2149 = vand.u32 %v2148, 4294901760
  %2150 = vmatpush.msra.mxu0 %v2149
  %v2151 = vand.u32 %v1316, 4294901760
  %v2152 = vsub.f32 %v1316, %v2151
  %v2153 = vand.u32 %v2152, 4294901760
  %v2154 = vsub.f32 %v2152, %v2153
  %v2155 = vand.u32 %v2154, 4294901760
  %2156 = vmatpush.msra.mxu0 %v2155
  %v2157 = vand.u32 %v1314, 4294901760
  %v2158 = vsub.f32 %v1314, %v2157
  %v2159 = vand.u32 %v2158, 4294901760
  %v2160 = vsub.f32 %v2158, %v2159
  %v2161 = vand.u32 %v2160, 4294901760
  %2162 = vmatpush.msra.mxu0 %v2161
  %v2163 = vand.u32 %v1312, 4294901760
  %v2164 = vsub.f32 %v1312, %v2163
  %v2165 = vand.u32 %v2164, 4294901760
  %v2166 = vsub.f32 %v2164, %v2165
  %v2167 = vand.u32 %v2166, 4294901760
  %2168 = vmatpush.msra.mxu0 %v2167
  %v2169 = vand.u32 %v1310, 4294901760
  %v2170 = vsub.f32 %v1310, %v2169
  %v2171 = vand.u32 %v2170, 4294901760
  %v2172 = vsub.f32 %v2170, %v2171
  %v2173 = vand.u32 %v2172, 4294901760
  %2174 = vmatpush.msra.mxu0 %v2173
  %v2175 = vand.u32 %v1308, 4294901760
  %v2176 = vsub.f32 %v1308, %v2175
  %v2177 = vand.u32 %v2176, 4294901760
  %v2178 = vsub.f32 %v2176, %v2177
  %v2179 = vand.u32 %v2178, 4294901760
  %2180 = vmatpush.msra.mxu0 %v2179
  %v2181 = vand.u32 %v1306, 4294901760
  %v2182 = vsub.f32 %v1306, %v2181
  %v2183 = vand.u32 %v2182, 4294901760
  %v2184 = vsub.f32 %v2182, %v2183
  %v2185 = vand.u32 %v2184, 4294901760
  %2186 = vmatpush.msra.mxu0 %v2185
  %v2187 = vand.u32 %v1304, 4294901760
  %v2188 = vsub.f32 %v1304, %v2187
  %v2189 = vand.u32 %v2188, 4294901760
  %v2190 = vsub.f32 %v2188, %v2189
  %v2191 = vand.u32 %v2190, 4294901760
  %2192 = vmatpush.msra.mxu0 %v2191
  %v2193 = vand.u32 %v1238, 4294901760
  %2194 = vmatmul.f32.gmra.mxu0 %v2193
  %v2195 = vpop.f32.mrf.mxu0
  %v2196 = vadd.f32 %v2095, %v2195
  %2197 = vdwg.mxu0
  %v2198 = vand.u32 %v1334, 4294901760
  %v2199 = vsub.f32 %v1334, %v2198
  %2200 = vmatpush.msra.mxu0 %v2199
  %v2201 = vand.u32 %v1332, 4294901760
  %v2202 = vsub.f32 %v1332, %v2201
  %2203 = vmatpush.msra.mxu0 %v2202
  %v2204 = vand.u32 %v1330, 4294901760
  %v2205 = vsub.f32 %v1330, %v2204
  %2206 = vmatpush.msra.mxu0 %v2205
  %v2207 = vand.u32 %v1328, 4294901760
  %v2208 = vsub.f32 %v1328, %v2207
  %2209 = vmatpush.msra.mxu0 %v2208
  %v2210 = vand.u32 %v1326, 4294901760
  %v2211 = vsub.f32 %v1326, %v2210
  %2212 = vmatpush.msra.mxu0 %v2211
  %v2213 = vand.u32 %v1324, 4294901760
  %v2214 = vsub.f32 %v1324, %v2213
  %2215 = vmatpush.msra.mxu0 %v2214
  %v2216 = vand.u32 %v1322, 4294901760
  %v2217 = vsub.f32 %v1322, %v2216
  %2218 = vmatpush.msra.mxu0 %v2217
  %v2219 = vand.u32 %v1320, 4294901760
  %v2220 = vsub.f32 %v1320, %v2219
  %2221 = vmatpush.msra.mxu0 %v2220
  %v2222 = vand.u32 %v1318, 4294901760
  %v2223 = vsub.f32 %v1318, %v2222
  %2224 = vmatpush.msra.mxu0 %v2223
  %v2225 = vand.u32 %v1316, 4294901760
  %v2226 = vsub.f32 %v1316, %v2225
  %2227 = vmatpush.msra.mxu0 %v2226
  %v2228 = vand.u32 %v1314, 4294901760
  %v2229 = vsub.f32 %v1314, %v2228
  %2230 = vmatpush.msra.mxu0 %v2229
  %v2231 = vand.u32 %v1312, 4294901760
  %v2232 = vsub.f32 %v1312, %v2231
  %2233 = vmatpush.msra.mxu0 %v2232
  %v2234 = vand.u32 %v1310, 4294901760
  %v2235 = vsub.f32 %v1310, %v2234
  %2236 = vmatpush.msra.mxu0 %v2235
  %v2237 = vand.u32 %v1308, 4294901760
  %v2238 = vsub.f32 %v1308, %v2237
  %2239 = vmatpush.msra.mxu0 %v2238
  %v2240 = vand.u32 %v1306, 4294901760
  %v2241 = vsub.f32 %v1306, %v2240
  %2242 = vmatpush.msra.mxu0 %v2241
  %v2243 = vand.u32 %v1304, 4294901760
  %v2244 = vsub.f32 %v1304, %v2243
  %2245 = vmatpush.msra.mxu0 %v2244
  %v2246 = vand.u32 %v1238, 4294901760
  %v2247 = vsub.f32 %v1238, %v2246
  %2248 = vmatmul.f32.gmra.mxu0 %v2247
  %v2249 = vpop.f32.mrf.mxu0
  %v2250 = vadd.f32 %v2196, %v2249
  %2251 = vdwg.mxu0
  %v2252 = vand.u32 %v1334, 4294901760
  %2253 = vmatpush.msra.mxu0 %v2252
  %v2254 = vand.u32 %v1332, 4294901760
  %2255 = vmatpush.msra.mxu0 %v2254
  %v2256 = vand.u32 %v1330, 4294901760
  %2257 = vmatpush.msra.mxu0 %v2256
  %v2258 = vand.u32 %v1328, 4294901760
  %2259 = vmatpush.msra.mxu0 %v2258
  %v2260 = vand.u32 %v1326, 4294901760
  %2261 = vmatpush.msra.mxu0 %v2260
  %v2262 = vand.u32 %v1324, 4294901760
  %2263 = vmatpush.msra.mxu0 %v2262
  %v2264 = vand.u32 %v1322, 4294901760
  %2265 = vmatpush.msra.mxu0 %v2264
  %v2266 = vand.u32 %v1320, 4294901760
  %2267 = vmatpush.msra.mxu0 %v2266
  %v2268 = vand.u32 %v1318, 4294901760
  %2269 = vmatpush.msra.mxu0 %v2268
  %v2270 = vand.u32 %v1316, 4294901760
  %2271 = vmatpush.msra.mxu0 %v2270
  %v2272 = vand.u32 %v1314, 4294901760
  %2273 = vmatpush.msra.mxu0 %v2272
  %v2274 = vand.u32 %v1312, 4294901760
  %2275 = vmatpush.msra.mxu0 %v2274
  %v2276 = vand.u32 %v1310, 4294901760
  %2277 = vmatpush.msra.mxu0 %v2276
  %v2278 = vand.u32 %v1308, 4294901760
  %2279 = vmatpush.msra.mxu0 %v2278
  %v2280 = vand.u32 %v1306, 4294901760
  %2281 = vmatpush.msra.mxu0 %v2280
  %v2282 = vand.u32 %v1304, 4294901760
  %2283 = vmatpush.msra.mxu0 %v2282
  %v2284 = vand.u32 %v1238, 4294901760
  %v2285 = vsub.f32 %v1238, %v2284
  %v2286 = vand.u32 %v2285, 4294901760
  %2287 = vmatmul.f32.gmra.mxu0 %v2286
  %v2288 = vpop.f32.mrf.mxu0
  %v2289 = vadd.f32 %v2250, %v2288
  %2290 = vdwg.mxu0
  %v2291 = vand.u32 %v1334, 4294901760
  %v2292 = vsub.f32 %v1334, %v2291
  %v2293 = vand.u32 %v2292, 4294901760
  %2294 = vmatpush.msra.mxu0 %v2293
  %v2295 = vand.u32 %v1332, 4294901760
  %v2296 = vsub.f32 %v1332, %v2295
  %v2297 = vand.u32 %v2296, 4294901760
  %2298 = vmatpush.msra.mxu0 %v2297
  %v2299 = vand.u32 %v1330, 4294901760
  %v2300 = vsub.f32 %v1330, %v2299
  %v2301 = vand.u32 %v2300, 4294901760
  %2302 = vmatpush.msra.mxu0 %v2301
  %v2303 = vand.u32 %v1328, 4294901760
  %v2304 = vsub.f32 %v1328, %v2303
  %v2305 = vand.u32 %v2304, 4294901760
  %2306 = vmatpush.msra.mxu0 %v2305
  %v2307 = vand.u32 %v1326, 4294901760
  %v2308 = vsub.f32 %v1326, %v2307
  %v2309 = vand.u32 %v2308, 4294901760
  %2310 = vmatpush.msra.mxu0 %v2309
  %v2311 = vand.u32 %v1324, 4294901760
  %v2312 = vsub.f32 %v1324, %v2311
  %v2313 = vand.u32 %v2312, 4294901760
  %2314 = vmatpush.msra.mxu0 %v2313
  %v2315 = vand.u32 %v1322, 4294901760
  %v2316 = vsub.f32 %v1322, %v2315
  %v2317 = vand.u32 %v2316, 4294901760
  %2318 = vmatpush.msra.mxu0 %v2317
  %v2319 = vand.u32 %v1320, 4294901760
  %v2320 = vsub.f32 %v1320, %v2319
  %v2321 = vand.u32 %v2320, 4294901760
  %2322 = vmatpush.msra.mxu0 %v2321
  %v2323 = vand.u32 %v1318, 4294901760
  %v2324 = vsub.f32 %v1318, %v2323
  %v2325 = vand.u32 %v2324, 4294901760
  %2326 = vmatpush.msra.mxu0 %v2325
  %v2327 = vand.u32 %v1316, 4294901760
  %v2328 = vsub.f32 %v1316, %v2327
  %v2329 = vand.u32 %v2328, 4294901760
  %2330 = vmatpush.msra.mxu0 %v2329
  %v2331 = vand.u32 %v1314, 4294901760
  %v2332 = vsub.f32 %v1314, %v2331
  %v2333 = vand.u32 %v2332, 4294901760
  %2334 = vmatpush.msra.mxu0 %v2333
  %v2335 = vand.u32 %v1312, 4294901760
  %v2336 = vsub.f32 %v1312, %v2335
  %v2337 = vand.u32 %v2336, 4294901760
  %2338 = vmatpush.msra.mxu0 %v2337
  %v2339 = vand.u32 %v1310, 4294901760
  %v2340 = vsub.f32 %v1310, %v2339
  %v2341 = vand.u32 %v2340, 4294901760
  %2342 = vmatpush.msra.mxu0 %v2341
  %v2343 = vand.u32 %v1308, 4294901760
  %v2344 = vsub.f32 %v1308, %v2343
  %v2345 = vand.u32 %v2344, 4294901760
  %2346 = vmatpush.msra.mxu0 %v2345
  %v2347 = vand.u32 %v1306, 4294901760
  %v2348 = vsub.f32 %v1306, %v2347
  %v2349 = vand.u32 %v2348, 4294901760
  %2350 = vmatpush.msra.mxu0 %v2349
  %v2351 = vand.u32 %v1304, 4294901760
  %v2352 = vsub.f32 %v1304, %v2351
  %v2353 = vand.u32 %v2352, 4294901760
  %2354 = vmatpush.msra.mxu0 %v2353
  %v2355 = vand.u32 %v1238, 4294901760
  %2356 = vmatmul.f32.gmra.mxu0 %v2355
  %v2357 = vpop.f32.mrf.mxu0
  %v2358 = vadd.f32 %v2289, %v2357
  %2359 = vdwg.mxu0
  %v2360 = vand.u32 %v1334, 4294901760
  %2361 = vmatpush.msra.mxu0 %v2360
  %v2362 = vand.u32 %v1332, 4294901760
  %2363 = vmatpush.msra.mxu0 %v2362
  %v2364 = vand.u32 %v1330, 4294901760
  %2365 = vmatpush.msra.mxu0 %v2364
  %v2366 = vand.u32 %v1328, 4294901760
  %2367 = vmatpush.msra.mxu0 %v2366
  %v2368 = vand.u32 %v1326, 4294901760
  %2369 = vmatpush.msra.mxu0 %v2368
  %v2370 = vand.u32 %v1324, 4294901760
  %2371 = vmatpush.msra.mxu0 %v2370
  %v2372 = vand.u32 %v1322, 4294901760
  %2373 = vmatpush.msra.mxu0 %v2372
  %v2374 = vand.u32 %v1320, 4294901760
  %2375 = vmatpush.msra.mxu0 %v2374
  %v2376 = vand.u32 %v1318, 4294901760
  %2377 = vmatpush.msra.mxu0 %v2376
  %v2378 = vand.u32 %v1316, 4294901760
  %2379 = vmatpush.msra.mxu0 %v2378
  %v2380 = vand.u32 %v1314, 4294901760
  %2381 = vmatpush.msra.mxu0 %v2380
  %v2382 = vand.u32 %v1312, 4294901760
  %2383 = vmatpush.msra.mxu0 %v2382
  %v2384 = vand.u32 %v1310, 4294901760
  %2385 = vmatpush.msra.mxu0 %v2384
  %v2386 = vand.u32 %v1308, 4294901760
  %2387 = vmatpush.msra.mxu0 %v2386
  %v2388 = vand.u32 %v1306, 4294901760
  %2389 = vmatpush.msra.mxu0 %v2388
  %v2390 = vand.u32 %v1304, 4294901760
  %2391 = vmatpush.msra.mxu0 %v2390
  %v2392 = vand.u32 %v1238, 4294901760
  %2393 = vmatmul.f32.gmra.mxu0 %v2392
  %v2394 = vpop.f32.mrf.mxu0
  %v2395 = vadd.f32 %v2358, %v2394
  %2396 = vdwg.mxu0
  %v2397 = vand.u32 %v1366, 4294901760
  %2398 = vmatpush.msra.mxu0 %v2397
  %v2399 = vand.u32 %v1364, 4294901760
  %2400 = vmatpush.msra.mxu0 %v2399
  %v2401 = vand.u32 %v1362, 4294901760
  %2402 = vmatpush.msra.mxu0 %v2401
  %v2403 = vand.u32 %v1360, 4294901760
  %2404 = vmatpush.msra.mxu0 %v2403
  %v2405 = vand.u32 %v1358, 4294901760
  %2406 = vmatpush.msra.mxu0 %v2405
  %v2407 = vand.u32 %v1356, 4294901760
  %2408 = vmatpush.msra.mxu0 %v2407
  %v2409 = vand.u32 %v1354, 4294901760
  %2410 = vmatpush.msra.mxu0 %v2409
  %v2411 = vand.u32 %v1352, 4294901760
  %2412 = vmatpush.msra.mxu0 %v2411
  %v2413 = vand.u32 %v1350, 4294901760
  %2414 = vmatpush.msra.mxu0 %v2413
  %v2415 = vand.u32 %v1348, 4294901760
  %2416 = vmatpush.msra.mxu0 %v2415
  %v2417 = vand.u32 %v1346, 4294901760
  %2418 = vmatpush.msra.mxu0 %v2417
  %v2419 = vand.u32 %v1344, 4294901760
  %2420 = vmatpush.msra.mxu0 %v2419
  %v2421 = vand.u32 %v1342, 4294901760
  %2422 = vmatpush.msra.mxu0 %v2421
  %v2423 = vand.u32 %v1340, 4294901760
  %2424 = vmatpush.msra.mxu0 %v2423
  %v2425 = vand.u32 %v1338, 4294901760
  %2426 = vmatpush.msra.mxu0 %v2425
  %v2427 = vand.u32 %v1336, 4294901760
  %2428 = vmatpush.msra.mxu0 %v2427
  %v2429 = vand.u32 %v1239, 4294901760
  %v2430 = vsub.f32 %v1239, %v2429
  %v2431 = vand.u32 %v2430, 4294901760
  %v2432 = vsub.f32 %v2430, %v2431
  %v2433 = vand.u32 %v2432, 4294901760
  %2434 = vmatmul.f32.gmra.mxu0 %v2433
  %v2435 = vpop.f32.mrf.mxu0
  %v2436 = vadd.f32 %v2395, %v2435
  %2437 = vdwg.mxu0
  %v2438 = vand.u32 %v1366, 4294901760
  %v2439 = vsub.f32 %v1366, %v2438
  %v2440 = vand.u32 %v2439, 4294901760
  %v2441 = vsub.f32 %v2439, %v2440
  %v2442 = vand.u32 %v2441, 4294901760
  %2443 = vmatpush.msra.mxu0 %v2442
  %v2444 = vand.u32 %v1364, 4294901760
  %v2445 = vsub.f32 %v1364, %v2444
  %v2446 = vand.u32 %v2445, 4294901760
  %v2447 = vsub.f32 %v2445, %v2446
  %v2448 = vand.u32 %v2447, 4294901760
  %2449 = vmatpush.msra.mxu0 %v2448
  %v2450 = vand.u32 %v1362, 4294901760
  %v2451 = vsub.f32 %v1362, %v2450
  %v2452 = vand.u32 %v2451, 4294901760
  %v2453 = vsub.f32 %v2451, %v2452
  %v2454 = vand.u32 %v2453, 4294901760
  %2455 = vmatpush.msra.mxu0 %v2454
  %v2456 = vand.u32 %v1360, 4294901760
  %v2457 = vsub.f32 %v1360, %v2456
  %v2458 = vand.u32 %v2457, 4294901760
  %v2459 = vsub.f32 %v2457, %v2458
  %v2460 = vand.u32 %v2459, 4294901760
  %2461 = vmatpush.msra.mxu0 %v2460
  %v2462 = vand.u32 %v1358, 4294901760
  %v2463 = vsub.f32 %v1358, %v2462
  %v2464 = vand.u32 %v2463, 4294901760
  %v2465 = vsub.f32 %v2463, %v2464
  %v2466 = vand.u32 %v2465, 4294901760
  %2467 = vmatpush.msra.mxu0 %v2466
  %v2468 = vand.u32 %v1356, 4294901760
  %v2469 = vsub.f32 %v1356, %v2468
  %v2470 = vand.u32 %v2469, 4294901760
  %v2471 = vsub.f32 %v2469, %v2470
  %v2472 = vand.u32 %v2471, 4294901760
  %2473 = vmatpush.msra.mxu0 %v2472
  %v2474 = vand.u32 %v1354, 4294901760
  %v2475 = vsub.f32 %v1354, %v2474
  %v2476 = vand.u32 %v2475, 4294901760
  %v2477 = vsub.f32 %v2475, %v2476
  %v2478 = vand.u32 %v2477, 4294901760
  %2479 = vmatpush.msra.mxu0 %v2478
  %v2480 = vand.u32 %v1352, 4294901760
  %v2481 = vsub.f32 %v1352, %v2480
  %v2482 = vand.u32 %v2481, 4294901760
  %v2483 = vsub.f32 %v2481, %v2482
  %v2484 = vand.u32 %v2483, 4294901760
  %2485 = vmatpush.msra.mxu0 %v2484
  %v2486 = vand.u32 %v1350, 4294901760
  %v2487 = vsub.f32 %v1350, %v2486
  %v2488 = vand.u32 %v2487, 4294901760
  %v2489 = vsub.f32 %v2487, %v2488
  %v2490 = vand.u32 %v2489, 4294901760
  %2491 = vmatpush.msra.mxu0 %v2490
  %v2492 = vand.u32 %v1348, 4294901760
  %v2493 = vsub.f32 %v1348, %v2492
  %v2494 = vand.u32 %v2493, 4294901760
  %v2495 = vsub.f32 %v2493, %v2494
  %v2496 = vand.u32 %v2495, 4294901760
  %2497 = vmatpush.msra.mxu0 %v2496
  %v2498 = vand.u32 %v1346, 4294901760
  %v2499 = vsub.f32 %v1346, %v2498
  %v2500 = vand.u32 %v2499, 4294901760
  %v2501 = vsub.f32 %v2499, %v2500
  %v2502 = vand.u32 %v2501, 4294901760
  %2503 = vmatpush.msra.mxu0 %v2502
  %v2504 = vand.u32 %v1344, 4294901760
  %v2505 = vsub.f32 %v1344, %v2504
  %v2506 = vand.u32 %v2505, 4294901760
  %v2507 = vsub.f32 %v2505, %v2506
  %v2508 = vand.u32 %v2507, 4294901760
  %2509 = vmatpush.msra.mxu0 %v2508
  %v2510 = vand.u32 %v1342, 4294901760
  %v2511 = vsub.f32 %v1342, %v2510
  %v2512 = vand.u32 %v2511, 4294901760
  %v2513 = vsub.f32 %v2511, %v2512
  %v2514 = vand.u32 %v2513, 4294901760
  %2515 = vmatpush.msra.mxu0 %v2514
  %v2516 = vand.u32 %v1340, 4294901760
  %v2517 = vsub.f32 %v1340, %v2516
  %v2518 = vand.u32 %v2517, 4294901760
  %v2519 = vsub.f32 %v2517, %v2518
  %v2520 = vand.u32 %v2519, 4294901760
  %2521 = vmatpush.msra.mxu0 %v2520
  %v2522 = vand.u32 %v1338, 4294901760
  %v2523 = vsub.f32 %v1338, %v2522
  %v2524 = vand.u32 %v2523, 4294901760
  %v2525 = vsub.f32 %v2523, %v2524
  %v2526 = vand.u32 %v2525, 4294901760
  %2527 = vmatpush.msra.mxu0 %v2526
  %v2528 = vand.u32 %v1336, 4294901760
  %v2529 = vsub.f32 %v1336, %v2528
  %v2530 = vand.u32 %v2529, 4294901760
  %v2531 = vsub.f32 %v2529, %v2530
  %v2532 = vand.u32 %v2531, 4294901760
  %2533 = vmatpush.msra.mxu0 %v2532
  %v2534 = vand.u32 %v1239, 4294901760
  %2535 = vmatmul.f32.gmra.mxu0 %v2534
  %v2536 = vpop.f32.mrf.mxu0
  %v2537 = vadd.f32 %v2436, %v2536
  %2538 = vdwg.mxu0
  %v2539 = vand.u32 %v1366, 4294901760
  %v2540 = vsub.f32 %v1366, %v2539
  %2541 = vmatpush.msra.mxu0 %v2540
  %v2542 = vand.u32 %v1364, 4294901760
  %v2543 = vsub.f32 %v1364, %v2542
  %2544 = vmatpush.msra.mxu0 %v2543
  %v2545 = vand.u32 %v1362, 4294901760
  %v2546 = vsub.f32 %v1362, %v2545
  %2547 = vmatpush.msra.mxu0 %v2546
  %v2548 = vand.u32 %v1360, 4294901760
  %v2549 = vsub.f32 %v1360, %v2548
  %2550 = vmatpush.msra.mxu0 %v2549
  %v2551 = vand.u32 %v1358, 4294901760
  %v2552 = vsub.f32 %v1358, %v2551
  %2553 = vmatpush.msra.mxu0 %v2552
  %v2554 = vand.u32 %v1356, 4294901760
  %v2555 = vsub.f32 %v1356, %v2554
  %2556 = vmatpush.msra.mxu0 %v2555
  %v2557 = vand.u32 %v1354, 4294901760
  %v2558 = vsub.f32 %v1354, %v2557
  %2559 = vmatpush.msra.mxu0 %v2558
  %v2560 = vand.u32 %v1352, 4294901760
  %v2561 = vsub.f32 %v1352, %v2560
  %2562 = vmatpush.msra.mxu0 %v2561
  %v2563 = vand.u32 %v1350, 4294901760
  %v2564 = vsub.f32 %v1350, %v2563
  %2565 = vmatpush.msra.mxu0 %v2564
  %v2566 = vand.u32 %v1348, 4294901760
  %v2567 = vsub.f32 %v1348, %v2566
  %2568 = vmatpush.msra.mxu0 %v2567
  %v2569 = vand.u32 %v1346, 4294901760
  %v2570 = vsub.f32 %v1346, %v2569
  %2571 = vmatpush.msra.mxu0 %v2570
  %v2572 = vand.u32 %v1344, 4294901760
  %v2573 = vsub.f32 %v1344, %v2572
  %2574 = vmatpush.msra.mxu0 %v2573
  %v2575 = vand.u32 %v1342, 4294901760
  %v2576 = vsub.f32 %v1342, %v2575
  %2577 = vmatpush.msra.mxu0 %v2576
  %v2578 = vand.u32 %v1340, 4294901760
  %v2579 = vsub.f32 %v1340, %v2578
  %2580 = vmatpush.msra.mxu0 %v2579
  %v2581 = vand.u32 %v1338, 4294901760
  %v2582 = vsub.f32 %v1338, %v2581
  %2583 = vmatpush.msra.mxu0 %v2582
  %v2584 = vand.u32 %v1336, 4294901760
  %v2585 = vsub.f32 %v1336, %v2584
  %2586 = vmatpush.msra.mxu0 %v2585
  %v2587 = vand.u32 %v1239, 4294901760
  %v2588 = vsub.f32 %v1239, %v2587
  %2589 = vmatmul.f32.gmra.mxu0 %v2588
  %v2590 = vpop.f32.mrf.mxu0
  %v2591 = vadd.f32 %v2537, %v2590
  %2592 = vdwg.mxu0
  %v2593 = vand.u32 %v1366, 4294901760
  %2594 = vmatpush.msra.mxu0 %v2593
  %v2595 = vand.u32 %v1364, 4294901760
  %2596 = vmatpush.msra.mxu0 %v2595
  %v2597 = vand.u32 %v1362, 4294901760
  %2598 = vmatpush.msra.mxu0 %v2597
  %v2599 = vand.u32 %v1360, 4294901760
  %2600 = vmatpush.msra.mxu0 %v2599
  %v2601 = vand.u32 %v1358, 4294901760
  %2602 = vmatpush.msra.mxu0 %v2601
  %v2603 = vand.u32 %v1356, 4294901760
  %2604 = vmatpush.msra.mxu0 %v2603
  %v2605 = vand.u32 %v1354, 4294901760
  %2606 = vmatpush.msra.mxu0 %v2605
  %v2607 = vand.u32 %v1352, 4294901760
  %2608 = vmatpush.msra.mxu0 %v2607
  %v2609 = vand.u32 %v1350, 4294901760
  %2610 = vmatpush.msra.mxu0 %v2609
  %v2611 = vand.u32 %v1348, 4294901760
  %2612 = vmatpush.msra.mxu0 %v2611
  %v2613 = vand.u32 %v1346, 4294901760
  %2614 = vmatpush.msra.mxu0 %v2613
  %v2615 = vand.u32 %v1344, 4294901760
  %2616 = vmatpush.msra.mxu0 %v2615
  %v2617 = vand.u32 %v1342, 4294901760
  %2618 = vmatpush.msra.mxu0 %v2617
  %v2619 = vand.u32 %v1340, 4294901760
  %2620 = vmatpush.msra.mxu0 %v2619
  %v2621 = vand.u32 %v1338, 4294901760
  %2622 = vmatpush.msra.mxu0 %v2621
  %v2623 = vand.u32 %v1336, 4294901760
  %2624 = vmatpush.msra.mxu0 %v2623
  %v2625 = vand.u32 %v1239, 4294901760
  %v2626 = vsub.f32 %v1239, %v2625
  %v2627 = vand.u32 %v2626, 4294901760
  %2628 = vmatmul.f32.gmra.mxu0 %v2627
  %v2629 = vpop.f32.mrf.mxu0
  %v2630 = vadd.f32 %v2591, %v2629
  %2631 = vdwg.mxu0
  %v2632 = vand.u32 %v1366, 4294901760
  %v2633 = vsub.f32 %v1366, %v2632
  %v2634 = vand.u32 %v2633, 4294901760
  %2635 = vmatpush.msra.mxu0 %v2634
  %v2636 = vand.u32 %v1364, 4294901760
  %v2637 = vsub.f32 %v1364, %v2636
  %v2638 = vand.u32 %v2637, 4294901760
  %2639 = vmatpush.msra.mxu0 %v2638
  %v2640 = vand.u32 %v1362, 4294901760
  %v2641 = vsub.f32 %v1362, %v2640
  %v2642 = vand.u32 %v2641, 4294901760
  %2643 = vmatpush.msra.mxu0 %v2642
  %v2644 = vand.u32 %v1360, 4294901760
  %v2645 = vsub.f32 %v1360, %v2644
  %v2646 = vand.u32 %v2645, 4294901760
  %2647 = vmatpush.msra.mxu0 %v2646
  %v2648 = vand.u32 %v1358, 4294901760
  %v2649 = vsub.f32 %v1358, %v2648
  %v2650 = vand.u32 %v2649, 4294901760
  %2651 = vmatpush.msra.mxu0 %v2650
  %v2652 = vand.u32 %v1356, 4294901760
  %v2653 = vsub.f32 %v1356, %v2652
  %v2654 = vand.u32 %v2653, 4294901760
  %2655 = vmatpush.msra.mxu0 %v2654
  %v2656 = vand.u32 %v1354, 4294901760
  %v2657 = vsub.f32 %v1354, %v2656
  %v2658 = vand.u32 %v2657, 4294901760
  %2659 = vmatpush.msra.mxu0 %v2658
  %v2660 = vand.u32 %v1352, 4294901760
  %v2661 = vsub.f32 %v1352, %v2660
  %v2662 = vand.u32 %v2661, 4294901760
  %2663 = vmatpush.msra.mxu0 %v2662
  %v2664 = vand.u32 %v1350, 4294901760
  %v2665 = vsub.f32 %v1350, %v2664
  %v2666 = vand.u32 %v2665, 4294901760
  %2667 = vmatpush.msra.mxu0 %v2666
  %v2668 = vand.u32 %v1348, 4294901760
  %v2669 = vsub.f32 %v1348, %v2668
  %v2670 = vand.u32 %v2669, 4294901760
  %2671 = vmatpush.msra.mxu0 %v2670
  %v2672 = vand.u32 %v1346, 4294901760
  %v2673 = vsub.f32 %v1346, %v2672
  %v2674 = vand.u32 %v2673, 4294901760
  %2675 = vmatpush.msra.mxu0 %v2674
  %v2676 = vand.u32 %v1344, 4294901760
  %v2677 = vsub.f32 %v1344, %v2676
  %v2678 = vand.u32 %v2677, 4294901760
  %2679 = vmatpush.msra.mxu0 %v2678
  %v2680 = vand.u32 %v1342, 4294901760
  %v2681 = vsub.f32 %v1342, %v2680
  %v2682 = vand.u32 %v2681, 4294901760
  %2683 = vmatpush.msra.mxu0 %v2682
  %v2684 = vand.u32 %v1340, 4294901760
  %v2685 = vsub.f32 %v1340, %v2684
  %v2686 = vand.u32 %v2685, 4294901760
  %2687 = vmatpush.msra.mxu0 %v2686
  %v2688 = vand.u32 %v1338, 4294901760
  %v2689 = vsub.f32 %v1338, %v2688
  %v2690 = vand.u32 %v2689, 4294901760
  %2691 = vmatpush.msra.mxu0 %v2690
  %v2692 = vand.u32 %v1336, 4294901760
  %v2693 = vsub.f32 %v1336, %v2692
  %v2694 = vand.u32 %v2693, 4294901760
  %2695 = vmatpush.msra.mxu0 %v2694
  %v2696 = vand.u32 %v1239, 4294901760
  %2697 = vmatmul.f32.gmra.mxu0 %v2696
  %v2698 = vpop.f32.mrf.mxu0
  %v2699 = vadd.f32 %v2630, %v2698
  %2700 = vdwg.mxu0
  %v2701 = vand.u32 %v1366, 4294901760
  %2702 = vmatpush.msra.mxu0 %v2701
  %v2703 = vand.u32 %v1364, 4294901760
  %2704 = vmatpush.msra.mxu0 %v2703
  %v2705 = vand.u32 %v1362, 4294901760
  %2706 = vmatpush.msra.mxu0 %v2705
  %v2707 = vand.u32 %v1360, 4294901760
  %2708 = vmatpush.msra.mxu0 %v2707
  %v2709 = vand.u32 %v1358, 4294901760
  %2710 = vmatpush.msra.mxu0 %v2709
  %v2711 = vand.u32 %v1356, 4294901760
  %2712 = vmatpush.msra.mxu0 %v2711
  %v2713 = vand.u32 %v1354, 4294901760
  %2714 = vmatpush.msra.mxu0 %v2713
  %v2715 = vand.u32 %v1352, 4294901760
  %2716 = vmatpush.msra.mxu0 %v2715
  %v2717 = vand.u32 %v1350, 4294901760
  %2718 = vmatpush.msra.mxu0 %v2717
  %v2719 = vand.u32 %v1348, 4294901760
  %2720 = vmatpush.msra.mxu0 %v2719
  %v2721 = vand.u32 %v1346, 4294901760
  %2722 = vmatpush.msra.mxu0 %v2721
  %v2723 = vand.u32 %v1344, 4294901760
  %2724 = vmatpush.msra.mxu0 %v2723
  %v2725 = vand.u32 %v1342, 4294901760
  %2726 = vmatpush.msra.mxu0 %v2725
  %v2727 = vand.u32 %v1340, 4294901760
  %2728 = vmatpush.msra.mxu0 %v2727
  %v2729 = vand.u32 %v1338, 4294901760
  %2730 = vmatpush.msra.mxu0 %v2729
  %v2731 = vand.u32 %v1336, 4294901760
  %2732 = vmatpush.msra.mxu0 %v2731
  %v2733 = vand.u32 %v1239, 4294901760
  %2734 = vmatmul.f32.gmra.mxu0 %v2733
  %v2735 = vpop.f32.mrf.mxu0
  %v2736 = vadd.f32 %v2699, %v2735
  %2737 = vdwg.mxu0
  %v2738 = vand.u32 %v1271, 4294901760
  %2739 = vmatpush.msra.mxu0 %v2738
  %v2740 = vand.u32 %v1269, 4294901760
  %2741 = vmatpush.msra.mxu0 %v2740
  %v2742 = vand.u32 %v1267, 4294901760
  %2743 = vmatpush.msra.mxu0 %v2742
  %v2744 = vand.u32 %v1265, 4294901760
  %2745 = vmatpush.msra.mxu0 %v2744
  %v2746 = vand.u32 %v1263, 4294901760
  %2747 = vmatpush.msra.mxu0 %v2746
  %v2748 = vand.u32 %v1261, 4294901760
  %2749 = vmatpush.msra.mxu0 %v2748
  %v2750 = vand.u32 %v1259, 4294901760
  %2751 = vmatpush.msra.mxu0 %v2750
  %v2752 = vand.u32 %v1257, 4294901760
  %2753 = vmatpush.msra.mxu0 %v2752
  %v2754 = vand.u32 %v1255, 4294901760
  %2755 = vmatpush.msra.mxu0 %v2754
  %v2756 = vand.u32 %v1253, 4294901760
  %2757 = vmatpush.msra.mxu0 %v2756
  %v2758 = vand.u32 %v1251, 4294901760
  %2759 = vmatpush.msra.mxu0 %v2758
  %v2760 = vand.u32 %v1249, 4294901760
  %2761 = vmatpush.msra.mxu0 %v2760
  %v2762 = vand.u32 %v1247, 4294901760
  %2763 = vmatpush.msra.mxu0 %v2762
  %v2764 = vand.u32 %v1245, 4294901760
  %2765 = vmatpush.msra.mxu0 %v2764
  %v2766 = vand.u32 %v1243, 4294901760
  %2767 = vmatpush.msra.mxu0 %v2766
  %v2768 = vand.u32 %v1241, 4294901760
  %2769 = vmatpush.msra.mxu0 %v2768
  %v2770 = vand.u32 %v1236, 4294901760
  %v2771 = vsub.f32 %v1236, %v2770
  %v2772 = vand.u32 %v2771, 4294901760
  %v2773 = vsub.f32 %v2771, %v2772
  %v2774 = vand.u32 %v2773, 4294901760
  %2775 = vmatmul.f32.gmra.mxu0 %v2774
  %v2776 = vpop.f32.mrf.mxu0
  %v2777 = vadd.f32 %v1371, %v2776
  %2778 = vdwg.mxu0
  %v2779 = vand.u32 %v1271, 4294901760
  %v2780 = vsub.f32 %v1271, %v2779
  %v2781 = vand.u32 %v2780, 4294901760
  %v2782 = vsub.f32 %v2780, %v2781
  %v2783 = vand.u32 %v2782, 4294901760
  %2784 = vmatpush.msra.mxu0 %v2783
  %v2785 = vand.u32 %v1269, 4294901760
  %v2786 = vsub.f32 %v1269, %v2785
  %v2787 = vand.u32 %v2786, 4294901760
  %v2788 = vsub.f32 %v2786, %v2787
  %v2789 = vand.u32 %v2788, 4294901760
  %2790 = vmatpush.msra.mxu0 %v2789
  %v2791 = vand.u32 %v1267, 4294901760
  %v2792 = vsub.f32 %v1267, %v2791
  %v2793 = vand.u32 %v2792, 4294901760
  %v2794 = vsub.f32 %v2792, %v2793
  %v2795 = vand.u32 %v2794, 4294901760
  %2796 = vmatpush.msra.mxu0 %v2795
  %v2797 = vand.u32 %v1265, 4294901760
  %v2798 = vsub.f32 %v1265, %v2797
  %v2799 = vand.u32 %v2798, 4294901760
  %v2800 = vsub.f32 %v2798, %v2799
  %v2801 = vand.u32 %v2800, 4294901760
  %2802 = vmatpush.msra.mxu0 %v2801
  %v2803 = vand.u32 %v1263, 4294901760
  %v2804 = vsub.f32 %v1263, %v2803
  %v2805 = vand.u32 %v2804, 4294901760
  %v2806 = vsub.f32 %v2804, %v2805
  %v2807 = vand.u32 %v2806, 4294901760
  %2808 = vmatpush.msra.mxu0 %v2807
  %v2809 = vand.u32 %v1261, 4294901760
  %v2810 = vsub.f32 %v1261, %v2809
  %v2811 = vand.u32 %v2810, 4294901760
  %v2812 = vsub.f32 %v2810, %v2811
  %v2813 = vand.u32 %v2812, 4294901760
  %2814 = vmatpush.msra.mxu0 %v2813
  %v2815 = vand.u32 %v1259, 4294901760
  %v2816 = vsub.f32 %v1259, %v2815
  %v2817 = vand.u32 %v2816, 4294901760
  %v2818 = vsub.f32 %v2816, %v2817
  %v2819 = vand.u32 %v2818, 4294901760
  %2820 = vmatpush.msra.mxu0 %v2819
  %v2821 = vand.u32 %v1257, 4294901760
  %v2822 = vsub.f32 %v1257, %v2821
  %v2823 = vand.u32 %v2822, 4294901760
  %v2824 = vsub.f32 %v2822, %v2823
  %v2825 = vand.u32 %v2824, 4294901760
  %2826 = vmatpush.msra.mxu0 %v2825
  %v2827 = vand.u32 %v1255, 4294901760
  %v2828 = vsub.f32 %v1255, %v2827
  %v2829 = vand.u32 %v2828, 4294901760
  %v2830 = vsub.f32 %v2828, %v2829
  %v2831 = vand.u32 %v2830, 4294901760
  %2832 = vmatpush.msra.mxu0 %v2831
  %v2833 = vand.u32 %v1253, 4294901760
  %v2834 = vsub.f32 %v1253, %v2833
  %v2835 = vand.u32 %v2834, 4294901760
  %v2836 = vsub.f32 %v2834, %v2835
  %v2837 = vand.u32 %v2836, 4294901760
  %2838 = vmatpush.msra.mxu0 %v2837
  %v2839 = vand.u32 %v1251, 4294901760
  %v2840 = vsub.f32 %v1251, %v2839
  %v2841 = vand.u32 %v2840, 4294901760
  %v2842 = vsub.f32 %v2840, %v2841
  %v2843 = vand.u32 %v2842, 4294901760
  %2844 = vmatpush.msra.mxu0 %v2843
  %v2845 = vand.u32 %v1249, 4294901760
  %v2846 = vsub.f32 %v1249, %v2845
  %v2847 = vand.u32 %v2846, 4294901760
  %v2848 = vsub.f32 %v2846, %v2847
  %v2849 = vand.u32 %v2848, 4294901760
  %2850 = vmatpush.msra.mxu0 %v2849
  %v2851 = vand.u32 %v1247, 4294901760
  %v2852 = vsub.f32 %v1247, %v2851
  %v2853 = vand.u32 %v2852, 4294901760
  %v2854 = vsub.f32 %v2852, %v2853
  %v2855 = vand.u32 %v2854, 4294901760
  %2856 = vmatpush.msra.mxu0 %v2855
  %v2857 = vand.u32 %v1245, 4294901760
  %v2858 = vsub.f32 %v1245, %v2857
  %v2859 = vand.u32 %v2858, 4294901760
  %v2860 = vsub.f32 %v2858, %v2859
  %v2861 = vand.u32 %v2860, 4294901760
  %2862 = vmatpush.msra.mxu0 %v2861
  %v2863 = vand.u32 %v1243, 4294901760
  %v2864 = vsub.f32 %v1243, %v2863
  %v2865 = vand.u32 %v2864, 4294901760
  %v2866 = vsub.f32 %v2864, %v2865
  %v2867 = vand.u32 %v2866, 4294901760
  %2868 = vmatpush.msra.mxu0 %v2867
  %v2869 = vand.u32 %v1241, 4294901760
  %v2870 = vsub.f32 %v1241, %v2869
  %v2871 = vand.u32 %v2870, 4294901760
  %v2872 = vsub.f32 %v2870, %v2871
  %v2873 = vand.u32 %v2872, 4294901760
  %2874 = vmatpush.msra.mxu0 %v2873
  %v2875 = vand.u32 %v1236, 4294901760
  %2876 = vmatmul.f32.gmra.mxu0 %v2875
  %v2877 = vpop.f32.mrf.mxu0
  %v2878 = vadd.f32 %v2777, %v2877
  %2879 = vdwg.mxu0
  %v2880 = vand.u32 %v1271, 4294901760
  %v2881 = vsub.f32 %v1271, %v2880
  %2882 = vmatpush.msra.mxu0 %v2881
  %v2883 = vand.u32 %v1269, 4294901760
  %v2884 = vsub.f32 %v1269, %v2883
  %2885 = vmatpush.msra.mxu0 %v2884
  %v2886 = vand.u32 %v1267, 4294901760
  %v2887 = vsub.f32 %v1267, %v2886
  %2888 = vmatpush.msra.mxu0 %v2887
  %v2889 = vand.u32 %v1265, 4294901760
  %v2890 = vsub.f32 %v1265, %v2889
  %2891 = vmatpush.msra.mxu0 %v2890
  %v2892 = vand.u32 %v1263, 4294901760
  %v2893 = vsub.f32 %v1263, %v2892
  %2894 = vmatpush.msra.mxu0 %v2893
  %v2895 = vand.u32 %v1261, 4294901760
  %v2896 = vsub.f32 %v1261, %v2895
  %2897 = vmatpush.msra.mxu0 %v2896
  %v2898 = vand.u32 %v1259, 4294901760
  %v2899 = vsub.f32 %v1259, %v2898
  %2900 = vmatpush.msra.mxu0 %v2899
  %v2901 = vand.u32 %v1257, 4294901760
  %v2902 = vsub.f32 %v1257, %v2901
  %2903 = vmatpush.msra.mxu0 %v2902
  %v2904 = vand.u32 %v1255, 4294901760
  %v2905 = vsub.f32 %v1255, %v2904
  %2906 = vmatpush.msra.mxu0 %v2905
  %v2907 = vand.u32 %v1253, 4294901760
  %v2908 = vsub.f32 %v1253, %v2907
  %2909 = vmatpush.msra.mxu0 %v2908
  %v2910 = vand.u32 %v1251, 4294901760
  %v2911 = vsub.f32 %v1251, %v2910
  %2912 = vmatpush.msra.mxu0 %v2911
  %v2913 = vand.u32 %v1249, 4294901760
  %v2914 = vsub.f32 %v1249, %v2913
  %2915 = vmatpush.msra.mxu0 %v2914
  %v2916 = vand.u32 %v1247, 4294901760
  %v2917 = vsub.f32 %v1247, %v2916
  %2918 = vmatpush.msra.mxu0 %v2917
  %v2919 = vand.u32 %v1245, 4294901760
  %v2920 = vsub.f32 %v1245, %v2919
  %2921 = vmatpush.msra.mxu0 %v2920
  %v2922 = vand.u32 %v1243, 4294901760
  %v2923 = vsub.f32 %v1243, %v2922
  %2924 = vmatpush.msra.mxu0 %v2923
  %v2925 = vand.u32 %v1241, 4294901760
  %v2926 = vsub.f32 %v1241, %v2925
  %2927 = vmatpush.msra.mxu0 %v2926
  %v2928 = vand.u32 %v1236, 4294901760
  %v2929 = vsub.f32 %v1236, %v2928
  %2930 = vmatmul.f32.gmra.mxu0 %v2929
  %v2931 = vpop.f32.mrf.mxu0
  %v2932 = vadd.f32 %v2878, %v2931
  %2933 = vdwg.mxu0
  %v2934 = vand.u32 %v1271, 4294901760
  %2935 = vmatpush.msra.mxu0 %v2934
  %v2936 = vand.u32 %v1269, 4294901760
  %2937 = vmatpush.msra.mxu0 %v2936
  %v2938 = vand.u32 %v1267, 4294901760
  %2939 = vmatpush.msra.mxu0 %v2938
  %v2940 = vand.u32 %v1265, 4294901760
  %2941 = vmatpush.msra.mxu0 %v2940
  %v2942 = vand.u32 %v1263, 4294901760
  %2943 = vmatpush.msra.mxu0 %v2942
  %v2944 = vand.u32 %v1261, 4294901760
  %2945 = vmatpush.msra.mxu0 %v2944
  %v2946 = vand.u32 %v1259, 4294901760
  %2947 = vmatpush.msra.mxu0 %v2946
  %v2948 = vand.u32 %v1257, 4294901760
  %2949 = vmatpush.msra.mxu0 %v2948
  %v2950 = vand.u32 %v1255, 4294901760
  %2951 = vmatpush.msra.mxu0 %v2950
  %v2952 = vand.u32 %v1253, 4294901760
  %2953 = vmatpush.msra.mxu0 %v2952
  %v2954 = vand.u32 %v1251, 4294901760
  %2955 = vmatpush.msra.mxu0 %v2954
  %v2956 = vand.u32 %v1249, 4294901760
  %2957 = vmatpush.msra.mxu0 %v2956
  %v2958 = vand.u32 %v1247, 4294901760
  %2959 = vmatpush.msra.mxu0 %v2958
  %v2960 = vand.u32 %v1245, 4294901760
  %2961 = vmatpush.msra.mxu0 %v2960
  %v2962 = vand.u32 %v1243, 4294901760
  %2963 = vmatpush.msra.mxu0 %v2962
  %v2964 = vand.u32 %v1241, 4294901760
  %2965 = vmatpush.msra.mxu0 %v2964
  %v2966 = vand.u32 %v1236, 4294901760
  %v2967 = vsub.f32 %v1236, %v2966
  %v2968 = vand.u32 %v2967, 4294901760
  %2969 = vmatmul.f32.gmra.mxu0 %v2968
  %v2970 = vpop.f32.mrf.mxu0
  %v2971 = vadd.f32 %v2932, %v2970
  %2972 = vdwg.mxu0
  %v2973 = vand.u32 %v1271, 4294901760
  %v2974 = vsub.f32 %v1271, %v2973
  %v2975 = vand.u32 %v2974, 4294901760
  %2976 = vmatpush.msra.mxu0 %v2975
  %v2977 = vand.u32 %v1269, 4294901760
  %v2978 = vsub.f32 %v1269, %v2977
  %v2979 = vand.u32 %v2978, 4294901760
  %2980 = vmatpush.msra.mxu0 %v2979
  %v2981 = vand.u32 %v1267, 4294901760
  %v2982 = vsub.f32 %v1267, %v2981
  %v2983 = vand.u32 %v2982, 4294901760
  %2984 = vmatpush.msra.mxu0 %v2983
  %v2985 = vand.u32 %v1265, 4294901760
  %v2986 = vsub.f32 %v1265, %v2985
  %v2987 = vand.u32 %v2986, 4294901760
  %2988 = vmatpush.msra.mxu0 %v2987
  %v2989 = vand.u32 %v1263, 4294901760
  %v2990 = vsub.f32 %v1263, %v2989
  %v2991 = vand.u32 %v2990, 4294901760
  %2992 = vmatpush.msra.mxu0 %v2991
  %v2993 = vand.u32 %v1261, 4294901760
  %v2994 = vsub.f32 %v1261, %v2993
  %v2995 = vand.u32 %v2994, 4294901760
  %2996 = vmatpush.msra.mxu0 %v2995
  %v2997 = vand.u32 %v1259, 4294901760
  %v2998 = vsub.f32 %v1259, %v2997
  %v2999 = vand.u32 %v2998, 4294901760
  %3000 = vmatpush.msra.mxu0 %v2999
  %v3001 = vand.u32 %v1257, 4294901760
  %v3002 = vsub.f32 %v1257, %v3001
  %v3003 = vand.u32 %v3002, 4294901760
  %3004 = vmatpush.msra.mxu0 %v3003
  %v3005 = vand.u32 %v1255, 4294901760
  %v3006 = vsub.f32 %v1255, %v3005
  %v3007 = vand.u32 %v3006, 4294901760
  %3008 = vmatpush.msra.mxu0 %v3007
  %v3009 = vand.u32 %v1253, 4294901760
  %v3010 = vsub.f32 %v1253, %v3009
  %v3011 = vand.u32 %v3010, 4294901760
  %3012 = vmatpush.msra.mxu0 %v3011
  %v3013 = vand.u32 %v1251, 4294901760
  %v3014 = vsub.f32 %v1251, %v3013
  %v3015 = vand.u32 %v3014, 4294901760
  %3016 = vmatpush.msra.mxu0 %v3015
  %v3017 = vand.u32 %v1249, 4294901760
  %v3018 = vsub.f32 %v1249, %v3017
  %v3019 = vand.u32 %v3018, 4294901760
  %3020 = vmatpush.msra.mxu0 %v3019
  %v3021 = vand.u32 %v1247, 4294901760
  %v3022 = vsub.f32 %v1247, %v3021
  %v3023 = vand.u32 %v3022, 4294901760
  %3024 = vmatpush.msra.mxu0 %v3023
  %v3025 = vand.u32 %v1245, 4294901760
  %v3026 = vsub.f32 %v1245, %v3025
  %v3027 = vand.u32 %v3026, 4294901760
  %3028 = vmatpush.msra.mxu0 %v3027
  %v3029 = vand.u32 %v1243, 4294901760
  %v3030 = vsub.f32 %v1243, %v3029
  %v3031 = vand.u32 %v3030, 4294901760
  %3032 = vmatpush.msra.mxu0 %v3031
  %v3033 = vand.u32 %v1241, 4294901760
  %v3034 = vsub.f32 %v1241, %v3033
  %v3035 = vand.u32 %v3034, 4294901760
  %3036 = vmatpush.msra.mxu0 %v3035
  %v3037 = vand.u32 %v1236, 4294901760
  %3038 = vmatmul.f32.gmra.mxu0 %v3037
  %v3039 = vpop.f32.mrf.mxu0
  %v3040 = vadd.f32 %v2971, %v3039
  %3041 = vdwg.mxu0
  %v3042 = vand.u32 %v1271, 4294901760
  %3043 = vmatpush.msra.mxu0 %v3042
  %v3044 = vand.u32 %v1269, 4294901760
  %3045 = vmatpush.msra.mxu0 %v3044
  %v3046 = vand.u32 %v1267, 4294901760
  %3047 = vmatpush.msra.mxu0 %v3046
  %v3048 = vand.u32 %v1265, 4294901760
  %3049 = vmatpush.msra.mxu0 %v3048
  %v3050 = vand.u32 %v1263, 4294901760
  %3051 = vmatpush.msra.mxu0 %v3050
  %v3052 = vand.u32 %v1261, 4294901760
  %3053 = vmatpush.msra.mxu0 %v3052
  %v3054 = vand.u32 %v1259, 4294901760
  %3055 = vmatpush.msra.mxu0 %v3054
  %v3056 = vand.u32 %v1257, 4294901760
  %3057 = vmatpush.msra.mxu0 %v3056
  %v3058 = vand.u32 %v1255, 4294901760
  %3059 = vmatpush.msra.mxu0 %v3058
  %v3060 = vand.u32 %v1253, 4294901760
  %3061 = vmatpush.msra.mxu0 %v3060
  %v3062 = vand.u32 %v1251, 4294901760
  %3063 = vmatpush.msra.mxu0 %v3062
  %v3064 = vand.u32 %v1249, 4294901760
  %3065 = vmatpush.msra.mxu0 %v3064
  %v3066 = vand.u32 %v1247, 4294901760
  %3067 = vmatpush.msra.mxu0 %v3066
  %v3068 = vand.u32 %v1245, 4294901760
  %3069 = vmatpush.msra.mxu0 %v3068
  %v3070 = vand.u32 %v1243, 4294901760
  %3071 = vmatpush.msra.mxu0 %v3070
  %v3072 = vand.u32 %v1241, 4294901760
  %3073 = vmatpush.msra.mxu0 %v3072
  %v3074 = vand.u32 %v1236, 4294901760
  %3075 = vmatmul.f32.gmra.mxu0 %v3074
  %v3076 = vpop.f32.mrf.mxu0
  %v3077 = vadd.f32 %v3040, %v3076
  %3078 = vdwg.mxu0
  %v3079 = vand.u32 %v1303, 4294901760
  %3080 = vmatpush.msra.mxu0 %v3079
  %v3081 = vand.u32 %v1301, 4294901760
  %3082 = vmatpush.msra.mxu0 %v3081
  %v3083 = vand.u32 %v1299, 4294901760
  %3084 = vmatpush.msra.mxu0 %v3083
  %v3085 = vand.u32 %v1297, 4294901760
  %3086 = vmatpush.msra.mxu0 %v3085
  %v3087 = vand.u32 %v1295, 4294901760
  %3088 = vmatpush.msra.mxu0 %v3087
  %v3089 = vand.u32 %v1293, 4294901760
  %3090 = vmatpush.msra.mxu0 %v3089
  %v3091 = vand.u32 %v1291, 4294901760
  %3092 = vmatpush.msra.mxu0 %v3091
  %v3093 = vand.u32 %v1289, 4294901760
  %3094 = vmatpush.msra.mxu0 %v3093
  %v3095 = vand.u32 %v1287, 4294901760
  %3096 = vmatpush.msra.mxu0 %v3095
  %v3097 = vand.u32 %v1285, 4294901760
  %3098 = vmatpush.msra.mxu0 %v3097
  %v3099 = vand.u32 %v1283, 4294901760
  %3100 = vmatpush.msra.mxu0 %v3099
  %v3101 = vand.u32 %v1281, 4294901760
  %3102 = vmatpush.msra.mxu0 %v3101
  %v3103 = vand.u32 %v1279, 4294901760
  %3104 = vmatpush.msra.mxu0 %v3103
  %v3105 = vand.u32 %v1277, 4294901760
  %3106 = vmatpush.msra.mxu0 %v3105
  %v3107 = vand.u32 %v1275, 4294901760
  %3108 = vmatpush.msra.mxu0 %v3107
  %v3109 = vand.u32 %v1273, 4294901760
  %3110 = vmatpush.msra.mxu0 %v3109
  %v3111 = vand.u32 %v1237, 4294901760
  %v3112 = vsub.f32 %v1237, %v3111
  %v3113 = vand.u32 %v3112, 4294901760
  %v3114 = vsub.f32 %v3112, %v3113
  %v3115 = vand.u32 %v3114, 4294901760
  %3116 = vmatmul.f32.gmra.mxu0 %v3115
  %v3117 = vpop.f32.mrf.mxu0
  %v3118 = vadd.f32 %v3077, %v3117
  %3119 = vdwg.mxu0
  %v3120 = vand.u32 %v1303, 4294901760
  %v3121 = vsub.f32 %v1303, %v3120
  %v3122 = vand.u32 %v3121, 4294901760
  %v3123 = vsub.f32 %v3121, %v3122
  %v3124 = vand.u32 %v3123, 4294901760
  %3125 = vmatpush.msra.mxu0 %v3124
  %v3126 = vand.u32 %v1301, 4294901760
  %v3127 = vsub.f32 %v1301, %v3126
  %v3128 = vand.u32 %v3127, 4294901760
  %v3129 = vsub.f32 %v3127, %v3128
  %v3130 = vand.u32 %v3129, 4294901760
  %3131 = vmatpush.msra.mxu0 %v3130
  %v3132 = vand.u32 %v1299, 4294901760
  %v3133 = vsub.f32 %v1299, %v3132
  %v3134 = vand.u32 %v3133, 4294901760
  %v3135 = vsub.f32 %v3133, %v3134
  %v3136 = vand.u32 %v3135, 4294901760
  %3137 = vmatpush.msra.mxu0 %v3136
  %v3138 = vand.u32 %v1297, 4294901760
  %v3139 = vsub.f32 %v1297, %v3138
  %v3140 = vand.u32 %v3139, 4294901760
  %v3141 = vsub.f32 %v3139, %v3140
  %v3142 = vand.u32 %v3141, 4294901760
  %3143 = vmatpush.msra.mxu0 %v3142
  %v3144 = vand.u32 %v1295, 4294901760
  %v3145 = vsub.f32 %v1295, %v3144
  %v3146 = vand.u32 %v3145, 4294901760
  %v3147 = vsub.f32 %v3145, %v3146
  %v3148 = vand.u32 %v3147, 4294901760
  %3149 = vmatpush.msra.mxu0 %v3148
  %v3150 = vand.u32 %v1293, 4294901760
  %v3151 = vsub.f32 %v1293, %v3150
  %v3152 = vand.u32 %v3151, 4294901760
  %v3153 = vsub.f32 %v3151, %v3152
  %v3154 = vand.u32 %v3153, 4294901760
  %3155 = vmatpush.msra.mxu0 %v3154
  %v3156 = vand.u32 %v1291, 4294901760
  %v3157 = vsub.f32 %v1291, %v3156
  %v3158 = vand.u32 %v3157, 4294901760
  %v3159 = vsub.f32 %v3157, %v3158
  %v3160 = vand.u32 %v3159, 4294901760
  %3161 = vmatpush.msra.mxu0 %v3160
  %v3162 = vand.u32 %v1289, 4294901760
  %v3163 = vsub.f32 %v1289, %v3162
  %v3164 = vand.u32 %v3163, 4294901760
  %v3165 = vsub.f32 %v3163, %v3164
  %v3166 = vand.u32 %v3165, 4294901760
  %3167 = vmatpush.msra.mxu0 %v3166
  %v3168 = vand.u32 %v1287, 4294901760
  %v3169 = vsub.f32 %v1287, %v3168
  %v3170 = vand.u32 %v3169, 4294901760
  %v3171 = vsub.f32 %v3169, %v3170
  %v3172 = vand.u32 %v3171, 4294901760
  %3173 = vmatpush.msra.mxu0 %v3172
  %v3174 = vand.u32 %v1285, 4294901760
  %v3175 = vsub.f32 %v1285, %v3174
  %v3176 = vand.u32 %v3175, 4294901760
  %v3177 = vsub.f32 %v3175, %v3176
  %v3178 = vand.u32 %v3177, 4294901760
  %3179 = vmatpush.msra.mxu0 %v3178
  %v3180 = vand.u32 %v1283, 4294901760
  %v3181 = vsub.f32 %v1283, %v3180
  %v3182 = vand.u32 %v3181, 4294901760
  %v3183 = vsub.f32 %v3181, %v3182
  %v3184 = vand.u32 %v3183, 4294901760
  %3185 = vmatpush.msra.mxu0 %v3184
  %v3186 = vand.u32 %v1281, 4294901760
  %v3187 = vsub.f32 %v1281, %v3186
  %v3188 = vand.u32 %v3187, 4294901760
  %v3189 = vsub.f32 %v3187, %v3188
  %v3190 = vand.u32 %v3189, 4294901760
  %3191 = vmatpush.msra.mxu0 %v3190
  %v3192 = vand.u32 %v1279, 4294901760
  %v3193 = vsub.f32 %v1279, %v3192
  %v3194 = vand.u32 %v3193, 4294901760
  %v3195 = vsub.f32 %v3193, %v3194
  %v3196 = vand.u32 %v3195, 4294901760
  %3197 = vmatpush.msra.mxu0 %v3196
  %v3198 = vand.u32 %v1277, 4294901760
  %v3199 = vsub.f32 %v1277, %v3198
  %v3200 = vand.u32 %v3199, 4294901760
  %v3201 = vsub.f32 %v3199, %v3200
  %v3202 = vand.u32 %v3201, 4294901760
  %3203 = vmatpush.msra.mxu0 %v3202
  %v3204 = vand.u32 %v1275, 4294901760
  %v3205 = vsub.f32 %v1275, %v3204
  %v3206 = vand.u32 %v3205, 4294901760
  %v3207 = vsub.f32 %v3205, %v3206
  %v3208 = vand.u32 %v3207, 4294901760
  %3209 = vmatpush.msra.mxu0 %v3208
  %v3210 = vand.u32 %v1273, 4294901760
  %v3211 = vsub.f32 %v1273, %v3210
  %v3212 = vand.u32 %v3211, 4294901760
  %v3213 = vsub.f32 %v3211, %v3212
  %v3214 = vand.u32 %v3213, 4294901760
  %3215 = vmatpush.msra.mxu0 %v3214
  %v3216 = vand.u32 %v1237, 4294901760
  %3217 = vmatmul.f32.gmra.mxu0 %v3216
  %v3218 = vpop.f32.mrf.mxu0
  %v3219 = vadd.f32 %v3118, %v3218
  %3220 = vdwg.mxu0
  %v3221 = vand.u32 %v1303, 4294901760
  %v3222 = vsub.f32 %v1303, %v3221
  %3223 = vmatpush.msra.mxu0 %v3222
  %v3224 = vand.u32 %v1301, 4294901760
  %v3225 = vsub.f32 %v1301, %v3224
  %3226 = vmatpush.msra.mxu0 %v3225
  %v3227 = vand.u32 %v1299, 4294901760
  %v3228 = vsub.f32 %v1299, %v3227
  %3229 = vmatpush.msra.mxu0 %v3228
  %v3230 = vand.u32 %v1297, 4294901760
  %v3231 = vsub.f32 %v1297, %v3230
  %3232 = vmatpush.msra.mxu0 %v3231
  %v3233 = vand.u32 %v1295, 4294901760
  %v3234 = vsub.f32 %v1295, %v3233
  %3235 = vmatpush.msra.mxu0 %v3234
  %v3236 = vand.u32 %v1293, 4294901760
  %v3237 = vsub.f32 %v1293, %v3236
  %3238 = vmatpush.msra.mxu0 %v3237
  %v3239 = vand.u32 %v1291, 4294901760
  %v3240 = vsub.f32 %v1291, %v3239
  %3241 = vmatpush.msra.mxu0 %v3240
  %v3242 = vand.u32 %v1289, 4294901760
  %v3243 = vsub.f32 %v1289, %v3242
  %3244 = vmatpush.msra.mxu0 %v3243
  %v3245 = vand.u32 %v1287, 4294901760
  %v3246 = vsub.f32 %v1287, %v3245
  %3247 = vmatpush.msra.mxu0 %v3246
  %v3248 = vand.u32 %v1285, 4294901760
  %v3249 = vsub.f32 %v1285, %v3248
  %3250 = vmatpush.msra.mxu0 %v3249
  %v3251 = vand.u32 %v1283, 4294901760
  %v3252 = vsub.f32 %v1283, %v3251
  %3253 = vmatpush.msra.mxu0 %v3252
  %v3254 = vand.u32 %v1281, 4294901760
  %v3255 = vsub.f32 %v1281, %v3254
  %3256 = vmatpush.msra.mxu0 %v3255
  %v3257 = vand.u32 %v1279, 4294901760
  %v3258 = vsub.f32 %v1279, %v3257
  %3259 = vmatpush.msra.mxu0 %v3258
  %v3260 = vand.u32 %v1277, 4294901760
  %v3261 = vsub.f32 %v1277, %v3260
  %3262 = vmatpush.msra.mxu0 %v3261
  %v3263 = vand.u32 %v1275, 4294901760
  %v3264 = vsub.f32 %v1275, %v3263
  %3265 = vmatpush.msra.mxu0 %v3264
  %v3266 = vand.u32 %v1273, 4294901760
  %v3267 = vsub.f32 %v1273, %v3266
  %3268 = vmatpush.msra.mxu0 %v3267
  %v3269 = vand.u32 %v1237, 4294901760
  %v3270 = vsub.f32 %v1237, %v3269
  %3271 = vmatmul.f32.gmra.mxu0 %v3270
  %v3272 = vpop.f32.mrf.mxu0
  %v3273 = vadd.f32 %v3219, %v3272
  %3274 = vdwg.mxu0
  %v3275 = vand.u32 %v1303, 4294901760
  %3276 = vmatpush.msra.mxu0 %v3275
  %v3277 = vand.u32 %v1301, 4294901760
  %3278 = vmatpush.msra.mxu0 %v3277
  %v3279 = vand.u32 %v1299, 4294901760
  %3280 = vmatpush.msra.mxu0 %v3279
  %v3281 = vand.u32 %v1297, 4294901760
  %3282 = vmatpush.msra.mxu0 %v3281
  %v3283 = vand.u32 %v1295, 4294901760
  %3284 = vmatpush.msra.mxu0 %v3283
  %v3285 = vand.u32 %v1293, 4294901760
  %3286 = vmatpush.msra.mxu0 %v3285
  %v3287 = vand.u32 %v1291, 4294901760
  %3288 = vmatpush.msra.mxu0 %v3287
  %v3289 = vand.u32 %v1289, 4294901760
  %3290 = vmatpush.msra.mxu0 %v3289
  %v3291 = vand.u32 %v1287, 4294901760
  %3292 = vmatpush.msra.mxu0 %v3291
  %v3293 = vand.u32 %v1285, 4294901760
  %3294 = vmatpush.msra.mxu0 %v3293
  %v3295 = vand.u32 %v1283, 4294901760
  %3296 = vmatpush.msra.mxu0 %v3295
  %v3297 = vand.u32 %v1281, 4294901760
  %3298 = vmatpush.msra.mxu0 %v3297
  %v3299 = vand.u32 %v1279, 4294901760
  %3300 = vmatpush.msra.mxu0 %v3299
  %v3301 = vand.u32 %v1277, 4294901760
  %3302 = vmatpush.msra.mxu0 %v3301
  %v3303 = vand.u32 %v1275, 4294901760
  %3304 = vmatpush.msra.mxu0 %v3303
  %v3305 = vand.u32 %v1273, 4294901760
  %3306 = vmatpush.msra.mxu0 %v3305
  %v3307 = vand.u32 %v1237, 4294901760
  %v3308 = vsub.f32 %v1237, %v3307
  %v3309 = vand.u32 %v3308, 4294901760
  %3310 = vmatmul.f32.gmra.mxu0 %v3309
  %v3311 = vpop.f32.mrf.mxu0
  %v3312 = vadd.f32 %v3273, %v3311
  %3313 = vdwg.mxu0
  %v3314 = vand.u32 %v1303, 4294901760
  %v3315 = vsub.f32 %v1303, %v3314
  %v3316 = vand.u32 %v3315, 4294901760
  %3317 = vmatpush.msra.mxu0 %v3316
  %v3318 = vand.u32 %v1301, 4294901760
  %v3319 = vsub.f32 %v1301, %v3318
  %v3320 = vand.u32 %v3319, 4294901760
  %3321 = vmatpush.msra.mxu0 %v3320
  %v3322 = vand.u32 %v1299, 4294901760
  %v3323 = vsub.f32 %v1299, %v3322
  %v3324 = vand.u32 %v3323, 4294901760
  %3325 = vmatpush.msra.mxu0 %v3324
  %v3326 = vand.u32 %v1297, 4294901760
  %v3327 = vsub.f32 %v1297, %v3326
  %v3328 = vand.u32 %v3327, 4294901760
  %3329 = vmatpush.msra.mxu0 %v3328
  %v3330 = vand.u32 %v1295, 4294901760
  %v3331 = vsub.f32 %v1295, %v3330
  %v3332 = vand.u32 %v3331, 4294901760
  %3333 = vmatpush.msra.mxu0 %v3332
  %v3334 = vand.u32 %v1293, 4294901760
  %v3335 = vsub.f32 %v1293, %v3334
  %v3336 = vand.u32 %v3335, 4294901760
  %3337 = vmatpush.msra.mxu0 %v3336
  %v3338 = vand.u32 %v1291, 4294901760
  %v3339 = vsub.f32 %v1291, %v3338
  %v3340 = vand.u32 %v3339, 4294901760
  %3341 = vmatpush.msra.mxu0 %v3340
  %v3342 = vand.u32 %v1289, 4294901760
  %v3343 = vsub.f32 %v1289, %v3342
  %v3344 = vand.u32 %v3343, 4294901760
  %3345 = vmatpush.msra.mxu0 %v3344
  %v3346 = vand.u32 %v1287, 4294901760
  %v3347 = vsub.f32 %v1287, %v3346
  %v3348 = vand.u32 %v3347, 4294901760
  %3349 = vmatpush.msra.mxu0 %v3348
  %v3350 = vand.u32 %v1285, 4294901760
  %v3351 = vsub.f32 %v1285, %v3350
  %v3352 = vand.u32 %v3351, 4294901760
  %3353 = vmatpush.msra.mxu0 %v3352
  %v3354 = vand.u32 %v1283, 4294901760
  %v3355 = vsub.f32 %v1283, %v3354
  %v3356 = vand.u32 %v3355, 4294901760
  %3357 = vmatpush.msra.mxu0 %v3356
  %v3358 = vand.u32 %v1281, 4294901760
  %v3359 = vsub.f32 %v1281, %v3358
  %v3360 = vand.u32 %v3359, 4294901760
  %3361 = vmatpush.msra.mxu0 %v3360
  %v3362 = vand.u32 %v1279, 4294901760
  %v3363 = vsub.f32 %v1279, %v3362
  %v3364 = vand.u32 %v3363, 4294901760
  %3365 = vmatpush.msra.mxu0 %v3364
  %v3366 = vand.u32 %v1277, 4294901760
  %v3367 = vsub.f32 %v1277, %v3366
  %v3368 = vand.u32 %v3367, 4294901760
  %3369 = vmatpush.msra.mxu0 %v3368
  %v3370 = vand.u32 %v1275, 4294901760
  %v3371 = vsub.f32 %v1275, %v3370
  %v3372 = vand.u32 %v3371, 4294901760
  %3373 = vmatpush.msra.mxu0 %v3372
  %v3374 = vand.u32 %v1273, 4294901760
  %v3375 = vsub.f32 %v1273, %v3374
  %v3376 = vand.u32 %v3375, 4294901760
  %3377 = vmatpush.msra.mxu0 %v3376
  %v3378 = vand.u32 %v1237, 4294901760
  %3379 = vmatmul.f32.gmra.mxu0 %v3378
  %v3380 = vpop.f32.mrf.mxu0
  %v3381 = vadd.f32 %v3312, %v3380
  %3382 = vdwg.mxu0
  %v3383 = vand.u32 %v1303, 4294901760
  %3384 = vmatpush.msra.mxu0 %v3383
  %v3385 = vand.u32 %v1301, 4294901760
  %3386 = vmatpush.msra.mxu0 %v3385
  %v3387 = vand.u32 %v1299, 4294901760
  %3388 = vmatpush.msra.mxu0 %v3387
  %v3389 = vand.u32 %v1297, 4294901760
  %3390 = vmatpush.msra.mxu0 %v3389
  %v3391 = vand.u32 %v1295, 4294901760
  %3392 = vmatpush.msra.mxu0 %v3391
  %v3393 = vand.u32 %v1293, 4294901760
  %3394 = vmatpush.msra.mxu0 %v3393
  %v3395 = vand.u32 %v1291, 4294901760
  %3396 = vmatpush.msra.mxu0 %v3395
  %v3397 = vand.u32 %v1289, 4294901760
  %3398 = vmatpush.msra.mxu0 %v3397
  %v3399 = vand.u32 %v1287, 4294901760
  %3400 = vmatpush.msra.mxu0 %v3399
  %v3401 = vand.u32 %v1285, 4294901760
  %3402 = vmatpush.msra.mxu0 %v3401
  %v3403 = vand.u32 %v1283, 4294901760
  %3404 = vmatpush.msra.mxu0 %v3403
  %v3405 = vand.u32 %v1281, 4294901760
  %3406 = vmatpush.msra.mxu0 %v3405
  %v3407 = vand.u32 %v1279, 4294901760
  %3408 = vmatpush.msra.mxu0 %v3407
  %v3409 = vand.u32 %v1277, 4294901760
  %3410 = vmatpush.msra.mxu0 %v3409
  %v3411 = vand.u32 %v1275, 4294901760
  %3412 = vmatpush.msra.mxu0 %v3411
  %v3413 = vand.u32 %v1273, 4294901760
  %3414 = vmatpush.msra.mxu0 %v3413
  %v3415 = vand.u32 %v1237, 4294901760
  %3416 = vmatmul.f32.gmra.mxu0 %v3415
  %v3417 = vpop.f32.mrf.mxu0
  %v3418 = vadd.f32 %v3381, %v3417
  %3419 = vdwg.mxu0
  %v3420 = vand.u32 %v1335, 4294901760
  %3421 = vmatpush.msra.mxu0 %v3420
  %v3422 = vand.u32 %v1333, 4294901760
  %3423 = vmatpush.msra.mxu0 %v3422
  %v3424 = vand.u32 %v1331, 4294901760
  %3425 = vmatpush.msra.mxu0 %v3424
  %v3426 = vand.u32 %v1329, 4294901760
  %3427 = vmatpush.msra.mxu0 %v3426
  %v3428 = vand.u32 %v1327, 4294901760
  %3429 = vmatpush.msra.mxu0 %v3428
  %v3430 = vand.u32 %v1325, 4294901760
  %3431 = vmatpush.msra.mxu0 %v3430
  %v3432 = vand.u32 %v1323, 4294901760
  %3433 = vmatpush.msra.mxu0 %v3432
  %v3434 = vand.u32 %v1321, 4294901760
  %3435 = vmatpush.msra.mxu0 %v3434
  %v3436 = vand.u32 %v1319, 4294901760
  %3437 = vmatpush.msra.mxu0 %v3436
  %v3438 = vand.u32 %v1317, 4294901760
  %3439 = vmatpush.msra.mxu0 %v3438
  %v3440 = vand.u32 %v1315, 4294901760
  %3441 = vmatpush.msra.mxu0 %v3440
  %v3442 = vand.u32 %v1313, 4294901760
  %3443 = vmatpush.msra.mxu0 %v3442
  %v3444 = vand.u32 %v1311, 4294901760
  %3445 = vmatpush.msra.mxu0 %v3444
  %v3446 = vand.u32 %v1309, 4294901760
  %3447 = vmatpush.msra.mxu0 %v3446
  %v3448 = vand.u32 %v1307, 4294901760
  %3449 = vmatpush.msra.mxu0 %v3448
  %v3450 = vand.u32 %v1305, 4294901760
  %3451 = vmatpush.msra.mxu0 %v3450
  %v3452 = vand.u32 %v1238, 4294901760
  %v3453 = vsub.f32 %v1238, %v3452
  %v3454 = vand.u32 %v3453, 4294901760
  %v3455 = vsub.f32 %v3453, %v3454
  %v3456 = vand.u32 %v3455, 4294901760
  %3457 = vmatmul.f32.gmra.mxu0 %v3456
  %v3458 = vpop.f32.mrf.mxu0
  %v3459 = vadd.f32 %v3418, %v3458
  %3460 = vdwg.mxu0
  %v3461 = vand.u32 %v1335, 4294901760
  %v3462 = vsub.f32 %v1335, %v3461
  %v3463 = vand.u32 %v3462, 4294901760
  %v3464 = vsub.f32 %v3462, %v3463
  %v3465 = vand.u32 %v3464, 4294901760
  %3466 = vmatpush.msra.mxu0 %v3465
  %v3467 = vand.u32 %v1333, 4294901760
  %v3468 = vsub.f32 %v1333, %v3467
  %v3469 = vand.u32 %v3468, 4294901760
  %v3470 = vsub.f32 %v3468, %v3469
  %v3471 = vand.u32 %v3470, 4294901760
  %3472 = vmatpush.msra.mxu0 %v3471
  %v3473 = vand.u32 %v1331, 4294901760
  %v3474 = vsub.f32 %v1331, %v3473
  %v3475 = vand.u32 %v3474, 4294901760
  %v3476 = vsub.f32 %v3474, %v3475
  %v3477 = vand.u32 %v3476, 4294901760
  %3478 = vmatpush.msra.mxu0 %v3477
  %v3479 = vand.u32 %v1329, 4294901760
  %v3480 = vsub.f32 %v1329, %v3479
  %v3481 = vand.u32 %v3480, 4294901760
  %v3482 = vsub.f32 %v3480, %v3481
  %v3483 = vand.u32 %v3482, 4294901760
  %3484 = vmatpush.msra.mxu0 %v3483
  %v3485 = vand.u32 %v1327, 4294901760
  %v3486 = vsub.f32 %v1327, %v3485
  %v3487 = vand.u32 %v3486, 4294901760
  %v3488 = vsub.f32 %v3486, %v3487
  %v3489 = vand.u32 %v3488, 4294901760
  %3490 = vmatpush.msra.mxu0 %v3489
  %v3491 = vand.u32 %v1325, 4294901760
  %v3492 = vsub.f32 %v1325, %v3491
  %v3493 = vand.u32 %v3492, 4294901760
  %v3494 = vsub.f32 %v3492, %v3493
  %v3495 = vand.u32 %v3494, 4294901760
  %3496 = vmatpush.msra.mxu0 %v3495
  %v3497 = vand.u32 %v1323, 4294901760
  %v3498 = vsub.f32 %v1323, %v3497
  %v3499 = vand.u32 %v3498, 4294901760
  %v3500 = vsub.f32 %v3498, %v3499
  %v3501 = vand.u32 %v3500, 4294901760
  %3502 = vmatpush.msra.mxu0 %v3501
  %v3503 = vand.u32 %v1321, 4294901760
  %v3504 = vsub.f32 %v1321, %v3503
  %v3505 = vand.u32 %v3504, 4294901760
  %v3506 = vsub.f32 %v3504, %v3505
  %v3507 = vand.u32 %v3506, 4294901760
  %3508 = vmatpush.msra.mxu0 %v3507
  %v3509 = vand.u32 %v1319, 4294901760
  %v3510 = vsub.f32 %v1319, %v3509
  %v3511 = vand.u32 %v3510, 4294901760
  %v3512 = vsub.f32 %v3510, %v3511
  %v3513 = vand.u32 %v3512, 4294901760
  %3514 = vmatpush.msra.mxu0 %v3513
  %v3515 = vand.u32 %v1317, 4294901760
  %v3516 = vsub.f32 %v1317, %v3515
  %v3517 = vand.u32 %v3516, 4294901760
  %v3518 = vsub.f32 %v3516, %v3517
  %v3519 = vand.u32 %v3518, 4294901760
  %3520 = vmatpush.msra.mxu0 %v3519
  %v3521 = vand.u32 %v1315, 4294901760
  %v3522 = vsub.f32 %v1315, %v3521
  %v3523 = vand.u32 %v3522, 4294901760
  %v3524 = vsub.f32 %v3522, %v3523
  %v3525 = vand.u32 %v3524, 4294901760
  %3526 = vmatpush.msra.mxu0 %v3525
  %v3527 = vand.u32 %v1313, 4294901760
  %v3528 = vsub.f32 %v1313, %v3527
  %v3529 = vand.u32 %v3528, 4294901760
  %v3530 = vsub.f32 %v3528, %v3529
  %v3531 = vand.u32 %v3530, 4294901760
  %3532 = vmatpush.msra.mxu0 %v3531
  %v3533 = vand.u32 %v1311, 4294901760
  %v3534 = vsub.f32 %v1311, %v3533
  %v3535 = vand.u32 %v3534, 4294901760
  %v3536 = vsub.f32 %v3534, %v3535
  %v3537 = vand.u32 %v3536, 4294901760
  %3538 = vmatpush.msra.mxu0 %v3537
  %v3539 = vand.u32 %v1309, 4294901760
  %v3540 = vsub.f32 %v1309, %v3539
  %v3541 = vand.u32 %v3540, 4294901760
  %v3542 = vsub.f32 %v3540, %v3541
  %v3543 = vand.u32 %v3542, 4294901760
  %3544 = vmatpush.msra.mxu0 %v3543
  %v3545 = vand.u32 %v1307, 4294901760
  %v3546 = vsub.f32 %v1307, %v3545
  %v3547 = vand.u32 %v3546, 4294901760
  %v3548 = vsub.f32 %v3546, %v3547
  %v3549 = vand.u32 %v3548, 4294901760
  %3550 = vmatpush.msra.mxu0 %v3549
  %v3551 = vand.u32 %v1305, 4294901760
  %v3552 = vsub.f32 %v1305, %v3551
  %v3553 = vand.u32 %v3552, 4294901760
  %v3554 = vsub.f32 %v3552, %v3553
  %v3555 = vand.u32 %v3554, 4294901760
  %3556 = vmatpush.msra.mxu0 %v3555
  %v3557 = vand.u32 %v1238, 4294901760
  %3558 = vmatmul.f32.gmra.mxu0 %v3557
  %v3559 = vpop.f32.mrf.mxu0
  %v3560 = vadd.f32 %v3459, %v3559
  %3561 = vdwg.mxu0
  %v3562 = vand.u32 %v1335, 4294901760
  %v3563 = vsub.f32 %v1335, %v3562
  %3564 = vmatpush.msra.mxu0 %v3563
  %v3565 = vand.u32 %v1333, 4294901760
  %v3566 = vsub.f32 %v1333, %v3565
  %3567 = vmatpush.msra.mxu0 %v3566
  %v3568 = vand.u32 %v1331, 4294901760
  %v3569 = vsub.f32 %v1331, %v3568
  %3570 = vmatpush.msra.mxu0 %v3569
  %v3571 = vand.u32 %v1329, 4294901760
  %v3572 = vsub.f32 %v1329, %v3571
  %3573 = vmatpush.msra.mxu0 %v3572
  %v3574 = vand.u32 %v1327, 4294901760
  %v3575 = vsub.f32 %v1327, %v3574
  %3576 = vmatpush.msra.mxu0 %v3575
  %v3577 = vand.u32 %v1325, 4294901760
  %v3578 = vsub.f32 %v1325, %v3577
  %3579 = vmatpush.msra.mxu0 %v3578
  %v3580 = vand.u32 %v1323, 4294901760
  %v3581 = vsub.f32 %v1323, %v3580
  %3582 = vmatpush.msra.mxu0 %v3581
  %v3583 = vand.u32 %v1321, 4294901760
  %v3584 = vsub.f32 %v1321, %v3583
  %3585 = vmatpush.msra.mxu0 %v3584
  %v3586 = vand.u32 %v1319, 4294901760
  %v3587 = vsub.f32 %v1319, %v3586
  %3588 = vmatpush.msra.mxu0 %v3587
  %v3589 = vand.u32 %v1317, 4294901760
  %v3590 = vsub.f32 %v1317, %v3589
  %3591 = vmatpush.msra.mxu0 %v3590
  %v3592 = vand.u32 %v1315, 4294901760
  %v3593 = vsub.f32 %v1315, %v3592
  %3594 = vmatpush.msra.mxu0 %v3593
  %v3595 = vand.u32 %v1313, 4294901760
  %v3596 = vsub.f32 %v1313, %v3595
  %3597 = vmatpush.msra.mxu0 %v3596
  %v3598 = vand.u32 %v1311, 4294901760
  %v3599 = vsub.f32 %v1311, %v3598
  %3600 = vmatpush.msra.mxu0 %v3599
  %v3601 = vand.u32 %v1309, 4294901760
  %v3602 = vsub.f32 %v1309, %v3601
  %3603 = vmatpush.msra.mxu0 %v3602
  %v3604 = vand.u32 %v1307, 4294901760
  %v3605 = vsub.f32 %v1307, %v3604
  %3606 = vmatpush.msra.mxu0 %v3605
  %v3607 = vand.u32 %v1305, 4294901760
  %v3608 = vsub.f32 %v1305, %v3607
  %3609 = vmatpush.msra.mxu0 %v3608
  %v3610 = vand.u32 %v1238, 4294901760
  %v3611 = vsub.f32 %v1238, %v3610
  %3612 = vmatmul.f32.gmra.mxu0 %v3611
  %v3613 = vpop.f32.mrf.mxu0
  %v3614 = vadd.f32 %v3560, %v3613
  %3615 = vdwg.mxu0
  %v3616 = vand.u32 %v1335, 4294901760
  %3617 = vmatpush.msra.mxu0 %v3616
  %v3618 = vand.u32 %v1333, 4294901760
  %3619 = vmatpush.msra.mxu0 %v3618
  %v3620 = vand.u32 %v1331, 4294901760
  %3621 = vmatpush.msra.mxu0 %v3620
  %v3622 = vand.u32 %v1329, 4294901760
  %3623 = vmatpush.msra.mxu0 %v3622
  %v3624 = vand.u32 %v1327, 4294901760
  %3625 = vmatpush.msra.mxu0 %v3624
  %v3626 = vand.u32 %v1325, 4294901760
  %3627 = vmatpush.msra.mxu0 %v3626
  %v3628 = vand.u32 %v1323, 4294901760
  %3629 = vmatpush.msra.mxu0 %v3628
  %v3630 = vand.u32 %v1321, 4294901760
  %3631 = vmatpush.msra.mxu0 %v3630
  %v3632 = vand.u32 %v1319, 4294901760
  %3633 = vmatpush.msra.mxu0 %v3632
  %v3634 = vand.u32 %v1317, 4294901760
  %3635 = vmatpush.msra.mxu0 %v3634
  %v3636 = vand.u32 %v1315, 4294901760
  %3637 = vmatpush.msra.mxu0 %v3636
  %v3638 = vand.u32 %v1313, 4294901760
  %3639 = vmatpush.msra.mxu0 %v3638
  %v3640 = vand.u32 %v1311, 4294901760
  %3641 = vmatpush.msra.mxu0 %v3640
  %v3642 = vand.u32 %v1309, 4294901760
  %3643 = vmatpush.msra.mxu0 %v3642
  %v3644 = vand.u32 %v1307, 4294901760
  %3645 = vmatpush.msra.mxu0 %v3644
  %v3646 = vand.u32 %v1305, 4294901760
  %3647 = vmatpush.msra.mxu0 %v3646
  %v3648 = vand.u32 %v1238, 4294901760
  %v3649 = vsub.f32 %v1238, %v3648
  %v3650 = vand.u32 %v3649, 4294901760
  %3651 = vmatmul.f32.gmra.mxu0 %v3650
  %v3652 = vpop.f32.mrf.mxu0
  %v3653 = vadd.f32 %v3614, %v3652
  %3654 = vdwg.mxu0
  %v3655 = vand.u32 %v1335, 4294901760
  %v3656 = vsub.f32 %v1335, %v3655
  %v3657 = vand.u32 %v3656, 4294901760
  %3658 = vmatpush.msra.mxu0 %v3657
  %v3659 = vand.u32 %v1333, 4294901760
  %v3660 = vsub.f32 %v1333, %v3659
  %v3661 = vand.u32 %v3660, 4294901760
  %3662 = vmatpush.msra.mxu0 %v3661
  %v3663 = vand.u32 %v1331, 4294901760
  %v3664 = vsub.f32 %v1331, %v3663
  %v3665 = vand.u32 %v3664, 4294901760
  %3666 = vmatpush.msra.mxu0 %v3665
  %v3667 = vand.u32 %v1329, 4294901760
  %v3668 = vsub.f32 %v1329, %v3667
  %v3669 = vand.u32 %v3668, 4294901760
  %3670 = vmatpush.msra.mxu0 %v3669
  %v3671 = vand.u32 %v1327, 4294901760
  %v3672 = vsub.f32 %v1327, %v3671
  %v3673 = vand.u32 %v3672, 4294901760
  %3674 = vmatpush.msra.mxu0 %v3673
  %v3675 = vand.u32 %v1325, 4294901760
  %v3676 = vsub.f32 %v1325, %v3675
  %v3677 = vand.u32 %v3676, 4294901760
  %3678 = vmatpush.msra.mxu0 %v3677
  %v3679 = vand.u32 %v1323, 4294901760
  %v3680 = vsub.f32 %v1323, %v3679
  %v3681 = vand.u32 %v3680, 4294901760
  %3682 = vmatpush.msra.mxu0 %v3681
  %v3683 = vand.u32 %v1321, 4294901760
  %v3684 = vsub.f32 %v1321, %v3683
  %v3685 = vand.u32 %v3684, 4294901760
  %3686 = vmatpush.msra.mxu0 %v3685
  %v3687 = vand.u32 %v1319, 4294901760
  %v3688 = vsub.f32 %v1319, %v3687
  %v3689 = vand.u32 %v3688, 4294901760
  %3690 = vmatpush.msra.mxu0 %v3689
  %v3691 = vand.u32 %v1317, 4294901760
  %v3692 = vsub.f32 %v1317, %v3691
  %v3693 = vand.u32 %v3692, 4294901760
  %3694 = vmatpush.msra.mxu0 %v3693
  %v3695 = vand.u32 %v1315, 4294901760
  %v3696 = vsub.f32 %v1315, %v3695
  %v3697 = vand.u32 %v3696, 4294901760
  %3698 = vmatpush.msra.mxu0 %v3697
  %v3699 = vand.u32 %v1313, 4294901760
  %v3700 = vsub.f32 %v1313, %v3699
  %v3701 = vand.u32 %v3700, 4294901760
  %3702 = vmatpush.msra.mxu0 %v3701
  %v3703 = vand.u32 %v1311, 4294901760
  %v3704 = vsub.f32 %v1311, %v3703
  %v3705 = vand.u32 %v3704, 4294901760
  %3706 = vmatpush.msra.mxu0 %v3705
  %v3707 = vand.u32 %v1309, 4294901760
  %v3708 = vsub.f32 %v1309, %v3707
  %v3709 = vand.u32 %v3708, 4294901760
  %3710 = vmatpush.msra.mxu0 %v3709
  %v3711 = vand.u32 %v1307, 4294901760
  %v3712 = vsub.f32 %v1307, %v3711
  %v3713 = vand.u32 %v3712, 4294901760
  %3714 = vmatpush.msra.mxu0 %v3713
  %v3715 = vand.u32 %v1305, 4294901760
  %v3716 = vsub.f32 %v1305, %v3715
  %v3717 = vand.u32 %v3716, 4294901760
  %3718 = vmatpush.msra.mxu0 %v3717
  %v3719 = vand.u32 %v1238, 4294901760
  %3720 = vmatmul.f32.gmra.mxu0 %v3719
  %v3721 = vpop.f32.mrf.mxu0
  %v3722 = vadd.f32 %v3653, %v3721
  %3723 = vdwg.mxu0
  %v3724 = vand.u32 %v1335, 4294901760
  %3725 = vmatpush.msra.mxu0 %v3724
  %v3726 = vand.u32 %v1333, 4294901760
  %3727 = vmatpush.msra.mxu0 %v3726
  %v3728 = vand.u32 %v1331, 4294901760
  %3729 = vmatpush.msra.mxu0 %v3728
  %v3730 = vand.u32 %v1329, 4294901760
  %3731 = vmatpush.msra.mxu0 %v3730
  %v3732 = vand.u32 %v1327, 4294901760
  %3733 = vmatpush.msra.mxu0 %v3732
  %v3734 = vand.u32 %v1325, 4294901760
  %3735 = vmatpush.msra.mxu0 %v3734
  %v3736 = vand.u32 %v1323, 4294901760
  %3737 = vmatpush.msra.mxu0 %v3736
  %v3738 = vand.u32 %v1321, 4294901760
  %3739 = vmatpush.msra.mxu0 %v3738
  %v3740 = vand.u32 %v1319, 4294901760
  %3741 = vmatpush.msra.mxu0 %v3740
  %v3742 = vand.u32 %v1317, 4294901760
  %3743 = vmatpush.msra.mxu0 %v3742
  %v3744 = vand.u32 %v1315, 4294901760
  %3745 = vmatpush.msra.mxu0 %v3744
  %v3746 = vand.u32 %v1313, 4294901760
  %3747 = vmatpush.msra.mxu0 %v3746
  %v3748 = vand.u32 %v1311, 4294901760
  %3749 = vmatpush.msra.mxu0 %v3748
  %v3750 = vand.u32 %v1309, 4294901760
  %3751 = vmatpush.msra.mxu0 %v3750
  %v3752 = vand.u32 %v1307, 4294901760
  %3753 = vmatpush.msra.mxu0 %v3752
  %v3754 = vand.u32 %v1305, 4294901760
  %3755 = vmatpush.msra.mxu0 %v3754
  %v3756 = vand.u32 %v1238, 4294901760
  %3757 = vmatmul.f32.gmra.mxu0 %v3756
  %v3758 = vpop.f32.mrf.mxu0
  %v3759 = vadd.f32 %v3722, %v3758
  %3760 = vdwg.mxu0
  %v3761 = vand.u32 %v1367, 4294901760
  %3762 = vmatpush.msra.mxu0 %v3761
  %v3763 = vand.u32 %v1365, 4294901760
  %3764 = vmatpush.msra.mxu0 %v3763
  %v3765 = vand.u32 %v1363, 4294901760
  %3766 = vmatpush.msra.mxu0 %v3765
  %v3767 = vand.u32 %v1361, 4294901760
  %3768 = vmatpush.msra.mxu0 %v3767
  %v3769 = vand.u32 %v1359, 4294901760
  %3770 = vmatpush.msra.mxu0 %v3769
  %v3771 = vand.u32 %v1357, 4294901760
  %3772 = vmatpush.msra.mxu0 %v3771
  %v3773 = vand.u32 %v1355, 4294901760
  %3774 = vmatpush.msra.mxu0 %v3773
  %v3775 = vand.u32 %v1353, 4294901760
  %3776 = vmatpush.msra.mxu0 %v3775
  %v3777 = vand.u32 %v1351, 4294901760
  %3778 = vmatpush.msra.mxu0 %v3777
  %v3779 = vand.u32 %v1349, 4294901760
  %3780 = vmatpush.msra.mxu0 %v3779
  %v3781 = vand.u32 %v1347, 4294901760
  %3782 = vmatpush.msra.mxu0 %v3781
  %v3783 = vand.u32 %v1345, 4294901760
  %3784 = vmatpush.msra.mxu0 %v3783
  %v3785 = vand.u32 %v1343, 4294901760
  %3786 = vmatpush.msra.mxu0 %v3785
  %v3787 = vand.u32 %v1341, 4294901760
  %3788 = vmatpush.msra.mxu0 %v3787
  %v3789 = vand.u32 %v1339, 4294901760
  %3790 = vmatpush.msra.mxu0 %v3789
  %v3791 = vand.u32 %v1337, 4294901760
  %3792 = vmatpush.msra.mxu0 %v3791
  %v3793 = vand.u32 %v1239, 4294901760
  %v3794 = vsub.f32 %v1239, %v3793
  %v3795 = vand.u32 %v3794, 4294901760
  %v3796 = vsub.f32 %v3794, %v3795
  %v3797 = vand.u32 %v3796, 4294901760
  %3798 = vmatmul.f32.gmra.mxu0 %v3797
  %v3799 = vpop.f32.mrf.mxu0
  %v3800 = vadd.f32 %v3759, %v3799
  %3801 = vdwg.mxu0
  %v3802 = vand.u32 %v1367, 4294901760
  %v3803 = vsub.f32 %v1367, %v3802
  %v3804 = vand.u32 %v3803, 4294901760
  %v3805 = vsub.f32 %v3803, %v3804
  %v3806 = vand.u32 %v3805, 4294901760
  %3807 = vmatpush.msra.mxu0 %v3806
  %v3808 = vand.u32 %v1365, 4294901760
  %v3809 = vsub.f32 %v1365, %v3808
  %v3810 = vand.u32 %v3809, 4294901760
  %v3811 = vsub.f32 %v3809, %v3810
  %v3812 = vand.u32 %v3811, 4294901760
  %3813 = vmatpush.msra.mxu0 %v3812
  %v3814 = vand.u32 %v1363, 4294901760
  %v3815 = vsub.f32 %v1363, %v3814
  %v3816 = vand.u32 %v3815, 4294901760
  %v3817 = vsub.f32 %v3815, %v3816
  %v3818 = vand.u32 %v3817, 4294901760
  %3819 = vmatpush.msra.mxu0 %v3818
  %v3820 = vand.u32 %v1361, 4294901760
  %v3821 = vsub.f32 %v1361, %v3820
  %v3822 = vand.u32 %v3821, 4294901760
  %v3823 = vsub.f32 %v3821, %v3822
  %v3824 = vand.u32 %v3823, 4294901760
  %3825 = vmatpush.msra.mxu0 %v3824
  %v3826 = vand.u32 %v1359, 4294901760
  %v3827 = vsub.f32 %v1359, %v3826
  %v3828 = vand.u32 %v3827, 4294901760
  %v3829 = vsub.f32 %v3827, %v3828
  %v3830 = vand.u32 %v3829, 4294901760
  %3831 = vmatpush.msra.mxu0 %v3830
  %v3832 = vand.u32 %v1357, 4294901760
  %v3833 = vsub.f32 %v1357, %v3832
  %v3834 = vand.u32 %v3833, 4294901760
  %v3835 = vsub.f32 %v3833, %v3834
  %v3836 = vand.u32 %v3835, 4294901760
  %3837 = vmatpush.msra.mxu0 %v3836
  %v3838 = vand.u32 %v1355, 4294901760
  %v3839 = vsub.f32 %v1355, %v3838
  %v3840 = vand.u32 %v3839, 4294901760
  %v3841 = vsub.f32 %v3839, %v3840
  %v3842 = vand.u32 %v3841, 4294901760
  %3843 = vmatpush.msra.mxu0 %v3842
  %v3844 = vand.u32 %v1353, 4294901760
  %v3845 = vsub.f32 %v1353, %v3844
  %v3846 = vand.u32 %v3845, 4294901760
  %v3847 = vsub.f32 %v3845, %v3846
  %v3848 = vand.u32 %v3847, 4294901760
  %3849 = vmatpush.msra.mxu0 %v3848
  %v3850 = vand.u32 %v1351, 4294901760
  %v3851 = vsub.f32 %v1351, %v3850
  %v3852 = vand.u32 %v3851, 4294901760
  %v3853 = vsub.f32 %v3851, %v3852
  %v3854 = vand.u32 %v3853, 4294901760
  %3855 = vmatpush.msra.mxu0 %v3854
  %v3856 = vand.u32 %v1349, 4294901760
  %v3857 = vsub.f32 %v1349, %v3856
  %v3858 = vand.u32 %v3857, 4294901760
  %v3859 = vsub.f32 %v3857, %v3858
  %v3860 = vand.u32 %v3859, 4294901760
  %3861 = vmatpush.msra.mxu0 %v3860
  %v3862 = vand.u32 %v1347, 4294901760
  %v3863 = vsub.f32 %v1347, %v3862
  %v3864 = vand.u32 %v3863, 4294901760
  %v3865 = vsub.f32 %v3863, %v3864
  %v3866 = vand.u32 %v3865, 4294901760
  %3867 = vmatpush.msra.mxu0 %v3866
  %v3868 = vand.u32 %v1345, 4294901760
  %v3869 = vsub.f32 %v1345, %v3868
  %v3870 = vand.u32 %v3869, 4294901760
  %v3871 = vsub.f32 %v3869, %v3870
  %v3872 = vand.u32 %v3871, 4294901760
  %3873 = vmatpush.msra.mxu0 %v3872
  %v3874 = vand.u32 %v1343, 4294901760
  %v3875 = vsub.f32 %v1343, %v3874
  %v3876 = vand.u32 %v3875, 4294901760
  %v3877 = vsub.f32 %v3875, %v3876
  %v3878 = vand.u32 %v3877, 4294901760
  %3879 = vmatpush.msra.mxu0 %v3878
  %v3880 = vand.u32 %v1341, 4294901760
  %v3881 = vsub.f32 %v1341, %v3880
  %v3882 = vand.u32 %v3881, 4294901760
  %v3883 = vsub.f32 %v3881, %v3882
  %v3884 = vand.u32 %v3883, 4294901760
  %3885 = vmatpush.msra.mxu0 %v3884
  %v3886 = vand.u32 %v1339, 4294901760
  %v3887 = vsub.f32 %v1339, %v3886
  %v3888 = vand.u32 %v3887, 4294901760
  %v3889 = vsub.f32 %v3887, %v3888
  %v3890 = vand.u32 %v3889, 4294901760
  %3891 = vmatpush.msra.mxu0 %v3890
  %v3892 = vand.u32 %v1337, 4294901760
  %v3893 = vsub.f32 %v1337, %v3892
  %v3894 = vand.u32 %v3893, 4294901760
  %v3895 = vsub.f32 %v3893, %v3894
  %v3896 = vand.u32 %v3895, 4294901760
  %3897 = vmatpush.msra.mxu0 %v3896
  %v3898 = vand.u32 %v1239, 4294901760
  %3899 = vmatmul.f32.gmra.mxu0 %v3898
  %v3900 = vpop.f32.mrf.mxu0
  %v3901 = vadd.f32 %v3800, %v3900
  %3902 = vdwg.mxu0
  %v3903 = vand.u32 %v1367, 4294901760
  %v3904 = vsub.f32 %v1367, %v3903
  %3905 = vmatpush.msra.mxu0 %v3904
  %v3906 = vand.u32 %v1365, 4294901760
  %v3907 = vsub.f32 %v1365, %v3906
  %3908 = vmatpush.msra.mxu0 %v3907
  %v3909 = vand.u32 %v1363, 4294901760
  %v3910 = vsub.f32 %v1363, %v3909
  %3911 = vmatpush.msra.mxu0 %v3910
  %v3912 = vand.u32 %v1361, 4294901760
  %v3913 = vsub.f32 %v1361, %v3912
  %3914 = vmatpush.msra.mxu0 %v3913
  %v3915 = vand.u32 %v1359, 4294901760
  %v3916 = vsub.f32 %v1359, %v3915
  %3917 = vmatpush.msra.mxu0 %v3916
  %v3918 = vand.u32 %v1357, 4294901760
  %v3919 = vsub.f32 %v1357, %v3918
  %3920 = vmatpush.msra.mxu0 %v3919
  %v3921 = vand.u32 %v1355, 4294901760
  %v3922 = vsub.f32 %v1355, %v3921
  %3923 = vmatpush.msra.mxu0 %v3922
  %v3924 = vand.u32 %v1353, 4294901760
  %v3925 = vsub.f32 %v1353, %v3924
  %3926 = vmatpush.msra.mxu0 %v3925
  %v3927 = vand.u32 %v1351, 4294901760
  %v3928 = vsub.f32 %v1351, %v3927
  %3929 = vmatpush.msra.mxu0 %v3928
  %v3930 = vand.u32 %v1349, 4294901760
  %v3931 = vsub.f32 %v1349, %v3930
  %3932 = vmatpush.msra.mxu0 %v3931
  %v3933 = vand.u32 %v1347, 4294901760
  %v3934 = vsub.f32 %v1347, %v3933
  %3935 = vmatpush.msra.mxu0 %v3934
  %v3936 = vand.u32 %v1345, 4294901760
  %v3937 = vsub.f32 %v1345, %v3936
  %3938 = vmatpush.msra.mxu0 %v3937
  %v3939 = vand.u32 %v1343, 4294901760
  %v3940 = vsub.f32 %v1343, %v3939
  %3941 = vmatpush.msra.mxu0 %v3940
  %v3942 = vand.u32 %v1341, 4294901760
  %v3943 = vsub.f32 %v1341, %v3942
  %3944 = vmatpush.msra.mxu0 %v3943
  %v3945 = vand.u32 %v1339, 4294901760
  %v3946 = vsub.f32 %v1339, %v3945
  %3947 = vmatpush.msra.mxu0 %v3946
  %v3948 = vand.u32 %v1337, 4294901760
  %v3949 = vsub.f32 %v1337, %v3948
  %3950 = vmatpush.msra.mxu0 %v3949
  %v3951 = vand.u32 %v1239, 4294901760
  %v3952 = vsub.f32 %v1239, %v3951
  %3953 = vmatmul.f32.gmra.mxu0 %v3952
  %v3954 = vpop.f32.mrf.mxu0
  %v3955 = vadd.f32 %v3901, %v3954
  %3956 = vdwg.mxu0
  %v3957 = vand.u32 %v1367, 4294901760
  %3958 = vmatpush.msra.mxu0 %v3957
  %v3959 = vand.u32 %v1365, 4294901760
  %3960 = vmatpush.msra.mxu0 %v3959
  %v3961 = vand.u32 %v1363, 4294901760
  %3962 = vmatpush.msra.mxu0 %v3961
  %v3963 = vand.u32 %v1361, 4294901760
  %3964 = vmatpush.msra.mxu0 %v3963
  %v3965 = vand.u32 %v1359, 4294901760
  %3966 = vmatpush.msra.mxu0 %v3965
  %v3967 = vand.u32 %v1357, 4294901760
  %3968 = vmatpush.msra.mxu0 %v3967
  %v3969 = vand.u32 %v1355, 4294901760
  %3970 = vmatpush.msra.mxu0 %v3969
  %v3971 = vand.u32 %v1353, 4294901760
  %3972 = vmatpush.msra.mxu0 %v3971
  %v3973 = vand.u32 %v1351, 4294901760
  %3974 = vmatpush.msra.mxu0 %v3973
  %v3975 = vand.u32 %v1349, 4294901760
  %3976 = vmatpush.msra.mxu0 %v3975
  %v3977 = vand.u32 %v1347, 4294901760
  %3978 = vmatpush.msra.mxu0 %v3977
  %v3979 = vand.u32 %v1345, 4294901760
  %3980 = vmatpush.msra.mxu0 %v3979
  %v3981 = vand.u32 %v1343, 4294901760
  %3982 = vmatpush.msra.mxu0 %v3981
  %v3983 = vand.u32 %v1341, 4294901760
  %3984 = vmatpush.msra.mxu0 %v3983
  %v3985 = vand.u32 %v1339, 4294901760
  %3986 = vmatpush.msra.mxu0 %v3985
  %v3987 = vand.u32 %v1337, 4294901760
  %3988 = vmatpush.msra.mxu0 %v3987
  %v3989 = vand.u32 %v1239, 4294901760
  %v3990 = vsub.f32 %v1239, %v3989
  %v3991 = vand.u32 %v3990, 4294901760
  %3992 = vmatmul.f32.gmra.mxu0 %v3991
  %v3993 = vpop.f32.mrf.mxu0
  %v3994 = vadd.f32 %v3955, %v3993
  %3995 = vdwg.mxu0
  %v3996 = vand.u32 %v1367, 4294901760
  %v3997 = vsub.f32 %v1367, %v3996
  %v3998 = vand.u32 %v3997, 4294901760
  %3999 = vmatpush.msra.mxu0 %v3998
  %v4000 = vand.u32 %v1365, 4294901760
  %v4001 = vsub.f32 %v1365, %v4000
  %v4002 = vand.u32 %v4001, 4294901760
  %4003 = vmatpush.msra.mxu0 %v4002
  %v4004 = vand.u32 %v1363, 4294901760
  %v4005 = vsub.f32 %v1363, %v4004
  %v4006 = vand.u32 %v4005, 4294901760
  %4007 = vmatpush.msra.mxu0 %v4006
  %v4008 = vand.u32 %v1361, 4294901760
  %v4009 = vsub.f32 %v1361, %v4008
  %v4010 = vand.u32 %v4009, 4294901760
  %4011 = vmatpush.msra.mxu0 %v4010
  %v4012 = vand.u32 %v1359, 4294901760
  %v4013 = vsub.f32 %v1359, %v4012
  %v4014 = vand.u32 %v4013, 4294901760
  %4015 = vmatpush.msra.mxu0 %v4014
  %v4016 = vand.u32 %v1357, 4294901760
  %v4017 = vsub.f32 %v1357, %v4016
  %v4018 = vand.u32 %v4017, 4294901760
  %4019 = vmatpush.msra.mxu0 %v4018
  %v4020 = vand.u32 %v1355, 4294901760
  %v4021 = vsub.f32 %v1355, %v4020
  %v4022 = vand.u32 %v4021, 4294901760
  %4023 = vmatpush.msra.mxu0 %v4022
  %v4024 = vand.u32 %v1353, 4294901760
  %v4025 = vsub.f32 %v1353, %v4024
  %v4026 = vand.u32 %v4025, 4294901760
  %4027 = vmatpush.msra.mxu0 %v4026
  %v4028 = vand.u32 %v1351, 4294901760
  %v4029 = vsub.f32 %v1351, %v4028
  %v4030 = vand.u32 %v4029, 4294901760
  %4031 = vmatpush.msra.mxu0 %v4030
  %v4032 = vand.u32 %v1349, 4294901760
  %v4033 = vsub.f32 %v1349, %v4032
  %v4034 = vand.u32 %v4033, 4294901760
  %4035 = vmatpush.msra.mxu0 %v4034
  %v4036 = vand.u32 %v1347, 4294901760
  %v4037 = vsub.f32 %v1347, %v4036
  %v4038 = vand.u32 %v4037, 4294901760
  %4039 = vmatpush.msra.mxu0 %v4038
  %v4040 = vand.u32 %v1345, 4294901760
  %v4041 = vsub.f32 %v1345, %v4040
  %v4042 = vand.u32 %v4041, 4294901760
  %4043 = vmatpush.msra.mxu0 %v4042
  %v4044 = vand.u32 %v1343, 4294901760
  %v4045 = vsub.f32 %v1343, %v4044
  %v4046 = vand.u32 %v4045, 4294901760
  %4047 = vmatpush.msra.mxu0 %v4046
  %v4048 = vand.u32 %v1341, 4294901760
  %v4049 = vsub.f32 %v1341, %v4048
  %v4050 = vand.u32 %v4049, 4294901760
  %4051 = vmatpush.msra.mxu0 %v4050
  %v4052 = vand.u32 %v1339, 4294901760
  %v4053 = vsub.f32 %v1339, %v4052
  %v4054 = vand.u32 %v4053, 4294901760
  %4055 = vmatpush.msra.mxu0 %v4054
  %v4056 = vand.u32 %v1337, 4294901760
  %v4057 = vsub.f32 %v1337, %v4056
  %v4058 = vand.u32 %v4057, 4294901760
  %4059 = vmatpush.msra.mxu0 %v4058
  %v4060 = vand.u32 %v1239, 4294901760
  %4061 = vmatmul.f32.gmra.mxu0 %v4060
  %v4062 = vpop.f32.mrf.mxu0
  %v4063 = vadd.f32 %v3994, %v4062
  %4064 = vdwg.mxu0
  %v4065 = vand.u32 %v1367, 4294901760
  %4066 = vmatpush.msra.mxu0 %v4065
  %v4067 = vand.u32 %v1365, 4294901760
  %4068 = vmatpush.msra.mxu0 %v4067
  %v4069 = vand.u32 %v1363, 4294901760
  %4070 = vmatpush.msra.mxu0 %v4069
  %v4071 = vand.u32 %v1361, 4294901760
  %4072 = vmatpush.msra.mxu0 %v4071
  %v4073 = vand.u32 %v1359, 4294901760
  %4074 = vmatpush.msra.mxu0 %v4073
  %v4075 = vand.u32 %v1357, 4294901760
  %4076 = vmatpush.msra.mxu0 %v4075
  %v4077 = vand.u32 %v1355, 4294901760
  %4078 = vmatpush.msra.mxu0 %v4077
  %v4079 = vand.u32 %v1353, 4294901760
  %4080 = vmatpush.msra.mxu0 %v4079
  %v4081 = vand.u32 %v1351, 4294901760
  %4082 = vmatpush.msra.mxu0 %v4081
  %v4083 = vand.u32 %v1349, 4294901760
  %4084 = vmatpush.msra.mxu0 %v4083
  %v4085 = vand.u32 %v1347, 4294901760
  %4086 = vmatpush.msra.mxu0 %v4085
  %v4087 = vand.u32 %v1345, 4294901760
  %4088 = vmatpush.msra.mxu0 %v4087
  %v4089 = vand.u32 %v1343, 4294901760
  %4090 = vmatpush.msra.mxu0 %v4089
  %v4091 = vand.u32 %v1341, 4294901760
  %4092 = vmatpush.msra.mxu0 %v4091
  %v4093 = vand.u32 %v1339, 4294901760
  %4094 = vmatpush.msra.mxu0 %v4093
  %v4095 = vand.u32 %v1337, 4294901760
  %4096 = vmatpush.msra.mxu0 %v4095
  %v4097 = vand.u32 %v1239, 4294901760
  %4098 = vmatmul.f32.gmra.mxu0 %v4097
  %v4099 = vpop.f32.mrf.mxu0
  %v4100 = vadd.f32 %v4063, %v4099
  %4101 = vdwg.mxu0
  %v4102 = vmul.f32 %v2736, 0.5
  %v4103 = vmul.f32 %v4100, 0.5
  %v4104 = vtanh.pop %v4102
  %v4105 = vtanh.pop %v4103
  %v4106 = vmul.f32 %v4104, 0.5
  %v4107 = vmul.f32 %v4105, 0.5
  %v4108 = vadd.f32 %v4106, 0.5
  %v4109 = vadd.f32 %v4107, 0.5
  %s4110 = scalar_lea.vmem %s7, 1
  %v4111 = vld [vmem:[%s4110] ss:$2 sm:$0x3]
  %v4113 = vperm.slane %v4111, 0
  %v4114 = vperm.slane %v4111, 1
  %v4117 = vmul.f32 %v4108, %v4113
  %v4118 = vmul.f32 %v4109, %v4114
  %v4119 = vadd.f32 %v4117, %v4118
  %4120 = vadd.xlane.f32.xlu0 %v4119
  %v4121 = vpop.xlane.xlu0 %4120
  %v4122 = vld [vmem:[%s3 + $0x3] sm:$0x1]
  %v4123 = vperm.slane %v4122, 0
  %v4124 = vadd.f32 %v4121, %v4123
  %v4125 = vmul.f32 %v4124, 0.5
  %v4126 = vtanh.pop %v4125
  %v4127 = vmul.f32 %v4126, 0.5
  %v4128 = vadd.f32 %v4127, 0.5
  %v4129 = vld [vmem:[%s3 + $0x1] sm:$0x1]
  %v4130 = vperm.slane %v4129, 0
  %v4131 = vmul.f32 %v446, %v4130
  %vm4132 = vcmask 31744
  %v4133 = vsel %vm4132, %v4131, 0.0
  %4134 = vadd.xlane.f32.xlu0 %v4133
  %v4135 = vpop.xlane.xlu0 %4134
  %v4136 = vadd.f32 %v4135, %v4123
  %v4137 = vmul.f32 %v4136, 0.5
  %v4138 = vtanh.pop %v4137
  %v4139 = vmul.f32 %v4138, 0.5
  %v4140 = vadd.f32 %v4139, 0.5
  %v4141 = vld [vmem:[%s3 + $0x2] sm:$0x1]
  %v4142 = vperm.slane %v4141, 0
  %v4143 = vmul.f32 %v446, %v4142
  %v4144 = vsel %vm4132, %v4143, 0.0
  %4145 = vadd.xlane.f32.xlu0 %v4144
  %v4146 = vpop.xlane.xlu0 %4145
  %v4147 = vadd.f32 %v4146, %v4123
  %v4148 = vmul.f32 %v4147, 0.5
  %v4149 = vtanh.pop %v4148
  %v4150 = vmul.f32 %v4149, 0.5
  %v4151 = vadd.f32 %v4150, 0.5
  %v4152 = vsub.f32 1.0, %v4151
  %4154 = vrot.lane.b32.xlu0 %v4128, 127
  %v4155 = vpop.permute.xlu0 %4154
  %v4157 = vmul.f32 %v4152, %v4155
  %v4158 = vsub.f32 1.0, %v4128
  %4160 = vrot.lane.b32.xlu0 %v4158, 126
  %v4161 = vpop.permute.xlu0 %4160
  %v4163 = vmul.f32 %v4140, %v4161
  %4165 = vrot.lane.b32.xlu0 %v4163, 1
  %v4166 = vpop.permute.xlu0 %4165
  %v4168 = vadd.f32 %v4157, %v4166
  %4170 = vrot.lane.b32.xlu0 %v4168, 127
  %v4171 = vpop.permute.xlu0 %4170
  %vm4173 = vcmask 7168
  %4174 = vst.msk [vmem:[%s8] sm:$0xff] %vm4173, %v4171
  %4176 = vrot.lane.b32.xlu0 %v446, 1
  %v4177 = vpop.permute.xlu0 %4176
  %vm4179 = vcmask 39944
  %4180 = vst.msk [vmem:[%s8] sm:$0xff] %vm4179, %v4177
  // Predicated region
  $region34: #{net_forward.1} parent=0 // pred_check
    _
  $region35: #{net_forward.1} parent=0 // pred_check_branch
    %4182 = sbr.rel (0) target = $region37
  $region36: #{net_forward.1} parent=0 // pred_region
    _
  $region37: #{net_forward.1} parent=0 // pred_fallthru
    _
  // Predicated region
  $region38: #{net_forward.1} parent=0 // pred_check
    _
  $region39: #{net_forward.1} parent=0 // pred_check_branch
    %4184 = sbr.rel (0) target = $region41
  $region40: #{net_forward.1} parent=0 // pred_region
    _
  $region41: #{net_forward.1} parent=0 // pred_fallthru
    _

</llo_original>
